<compile_context>
chip_gen: v6e
topology: v6e:2x2x1
jax: 0.10.0
libtpu: 0.0.40
codegen_flags: <defaults>
</compile_context>

<pallas_src>
import numpy as np
import jax
import jax.numpy as jnp
from jax.experimental import pallas as pl
from jax.experimental.pallas import tpu as pltpu

D = 512    # GCNConv(512, 512); CLIP ViT-B/32 text-feature dim
TM = 256   # node-row tile: fills the 256-wide MXU on v6e/v7x (use 128 on v5e)
TK = 512   # neighbour (contraction) tile: sweep per generation / VMEM budget


def _round_up(x, m):
    return ((x + m - 1) // m) * m


# ------------------------------------------------------------------- kernel --

def clip_gnn_kernel(a_ref, x_ref, w_ref, b_ref, qn_ref, sims_ref, acc_ref):
    """One (row-tile, K-tile) grid step of the fused GCN conv + cosine sims.

    Per (i, k):   acc += A[i, k] @ X[k]         (MXU, bf16 ops / f32 acc)
    Last k only:  H  = acc @ W + b              (MXU)   -- (A@X)@W reorder
                  Hn = H * rsqrt(sum H^2 + eps) (VPU/XLU, rsqrt on EUP)
                  sims[:, i] = Qn @ Hn^T        (MXU)   -- lane-dense (B, TM)
    """
    k = pl.program_id(1)

    @pl.when(k == 0)
    def _init():
        acc_ref[...] = jnp.zeros_like(acc_ref)

    # Partial neighbour aggregation for this K chunk (f32 accumulator).
    acc_ref[...] += jnp.dot(a_ref[...], x_ref[...],
                            preferred_element_type=jnp.float32)

    @pl.when(k == pl.num_programs(1) - 1)
    def _epilogue():
        # (A @ X) @ W + bias: only the f32 accumulator is down-cast to feed the
        # MXU; the accumulation itself stayed in f32.
        h = jnp.dot(acc_ref[...].astype(jnp.bfloat16), w_ref[...],
                    preferred_element_type=jnp.float32) + b_ref[...]
        # Row L2 normalization, f32 epilogue; eps guards all-zero/bias-only
        # (padded) rows against divide-by-zero.
        hn = h * jax.lax.rsqrt(jnp.sum(h * h, axis=1, keepdims=True) + 1e-12)
        # Cosine sims with questions as LHS -> lane-dense (B, TM) tile, stored
        # as unmasked 128-wide vst rows instead of a (TM, B=2) masked store.
        sims_ref[...] = jnp.einsum(
            "bd,nd->bn",
            qn_ref[...].astype(jnp.bfloat16), hn.astype(jnp.bfloat16),
            preferred_element_type=jnp.float32)


def clip_gnn_sims(a_norm, x, w, bias, q, *, tm=TM, tk=TK):
    """Cosine similarity of every GCN-conv'd, L2-normalized node against every
    question feature.  Returns (B, Npad): questions on sublanes, nodes on lanes."""
    n = x.shape[0]
    b = q.shape[0]
    tile = int(np.lcm(tm, tk))
    npad = _round_up(max(n, 1), tile)

    # Tile-align the node count; padded rows/cols of A and X are zero, so they
    # contribute nothing to real rows, and their sims columns are never read.
    a_pad = jnp.zeros((npad, npad), jnp.bfloat16).at[:n, :n].set(
        a_norm.astype(jnp.bfloat16))
    x_pad = jnp.zeros((npad, D), jnp.bfloat16).at[:n, :].set(
        x.astype(jnp.bfloat16))
    w_bf16 = w.astype(jnp.bfloat16)
    # Question L2 norm hoisted out of the kernel (was recomputed per row tile);
    # (B, D) is negligible and this stays correct under megacore sharding of
    # the parallel row axis.
    qn = q * jax.lax.rsqrt(jnp.sum(q * q, axis=1, keepdims=True) + 1e-12)

    grid = (npad // tm, npad // tk)

    cost = pl.CostEstimate(
        flops=(2 * npad * npad * D          # A @ X
               + 2 * npad * D * D           # (.) @ W
               + 2 * b * npad * D),         # Qn @ Hn^T
        transcendentals=npad,               # one rsqrt per node row
        bytes_accessed=(2 * npad * npad                     # A (bf16)
                        + 2 * npad * D * (npad // tm)       # X, re-streamed per row tile
                        + 2 * D * D + 4 * D + 4 * b * D     # W, bias, qn
                        + 4 * b * npad),                    # sims out
    )

    return pl.pallas_call(
        clip_gnn_kernel,
        out_shape=jax.ShapeDtypeStruct((b, npad), jnp.float32),
        grid=grid,
        in_specs=[
            pl.BlockSpec((tm, tk), lambda i, k: (i, k)),   # A (row, K) tile, bf16
            pl.BlockSpec((tk, D), lambda i, k: (k, 0)),    # X K-chunk, bf16
            # Constant-index residents below; at scale single-buffer them
            # (pipeline_mode=pl.Buffered(1)) to reclaim ~0.5 MiB of VMEM.
            pl.BlockSpec((D, D), lambda i, k: (0, 0)),     # W, bf16
            pl.BlockSpec((1, D), lambda i, k: (0, 0)),     # bias, f32
            pl.BlockSpec((b, D), lambda i, k: (0, 0)),     # normalized questions, f32
        ],
        out_specs=pl.BlockSpec((b, tm), lambda i, k: (0, i)),   # lane-dense sims
        scratch_shapes=[pltpu.VMEM((tm, D), jnp.float32)],      # f32 A@X accumulator
        compiler_params=pltpu.CompilerParams(
            dimension_semantics=("parallel", "arbitrary"),
            # Budgeted for v7x's 64 MiB/TC VMEM (48 MiB leaves headroom); the
            # current blocks use ~3 MiB.  On 128 MiB v5e/v6e parts, grow TK
            # rather than raising this past the smallest target's budget.
            vmem_limit_bytes=48 * 1024 * 1024,
        ),
        cost_estimate=cost,
    )(a_pad, x_pad, w_bf16, bias, qn)


# --------------------------------------------------------------------- glue --

def gcn_normalized_adjacency(edge_index, num_nodes):
    """A_hat = A + I;  A_norm = D^-1/2 A_hat D^-1/2  (GCNConv propagation)."""
    src, dst = edge_index
    a = jnp.zeros((num_nodes, num_nodes), jnp.float32).at[dst, src].add(1.0)
    a = a + jnp.eye(num_nodes, dtype=jnp.float32)
    dinv = jax.lax.rsqrt(jnp.sum(a, axis=1))
    return a * dinv[:, None] * dinv[None, :]


def to_dense_batch_scalars(vals, batch, counts, max_num_nodes, batch_size):
    """to_dense_batch on per-node scalars (padding slots stay exactly 0)."""
    starts = jnp.concatenate(
        [jnp.zeros((1,), jnp.int32), jnp.cumsum(counts)[:-1].astype(jnp.int32)])
    pos = jnp.arange(vals.shape[0], dtype=jnp.int32) - starts[batch]
    return jnp.zeros((batch_size, max_num_nodes),
                     vals.dtype).at[batch, pos].set(vals)


def clip_gnn_forward(x, edge_index, batch, counts, q_feat, w, bias,
                     max_num_nodes, batch_size):
    n = x.shape[0]
    a_norm = gcn_normalized_adjacency(edge_index, n)
    sims_all = clip_gnn_sims(a_norm, x, w, bias, q_feat)       # (B, Npad)
    # Each node scores only against its own graph's question.
    sims_node = sims_all[batch, jnp.arange(n)]                 # (N,)
    logits2d = to_dense_batch_scalars(sims_node, batch, counts,
                                      max_num_nodes, batch_size)  # (B, M)
    return logits2d[..., None]                                 # (B, M, 1)


# --------------------------------------------------------------------- main --

if __name__ == "__main__":
    key = jax.random.PRNGKey(0)
    k_x, k_w, k_b, k_q = jax.random.split(key, 4)

    # Two graphs in a batch (300 and 340 nodes): still tiny for a TPU, but big
    # enough that both grid axes (TM=256 row tiles, TK=512 K chunks) take more
    # than one step, exercising the accumulator / pl.when paths.
    counts_np = np.array([300, 340], dtype=np.int32)
    N = int(counts_np.sum())
    B = len(counts_np)
    M = int(counts_np.max())                       # max_num_nodes
    batch = jnp.asarray(np.repeat(np.arange(B), counts_np), dtype=jnp.int32)

    # Undirected chain edges within each graph.
    edges, off = [], 0
    for c in counts_np:
        for i in range(int(c) - 1):
            edges.append((off + i, off + i + 1))
            edges.append((off + i + 1, off + i))
        off += int(c)
    edge_index = jnp.asarray(np.array(edges, dtype=np.int32).T)

    # Deterministic synthetic parameters / inputs.
    x = jax.random.normal(k_x, (N, D), jnp.float32)
    W = jax.random.normal(k_w, (D, D), jnp.float32) * (1.0 / np.sqrt(D))
    bias = jax.random.normal(k_b, (1, D), jnp.float32) * 0.01
    # TODO(synk): CLIPTokenizer + CLIPModel.get_text_features (pretrained text
    # transformer) have no in-script Pallas equivalent; synthetic pre-encoded
    # question features of the same shape [B, 512] stand in for them.
    q_feat = jax.random.normal(k_q, (B, D), jnp.float32)

    # ------- fused NODE ENCODING + COSINE SIMILARITY (Pallas) -------
    logits = clip_gnn_forward(x, edge_index, batch, jnp.asarray(counts_np),
                              q_feat, W, bias, M, B)            # (B, M, 1)
    jax.block_until_ready(logits)

    # ------- pure-JAX f32 reference check -------
    a_norm = gcn_normalized_adjacency(edge_index, N)
    h_ref = a_norm @ (x @ W) + bias
    h_ref = h_ref / jnp.linalg.norm(h_ref, axis=1, keepdims=True)
    q_ref = q_feat / jnp.linalg.norm(q_feat, axis=1, keepdims=True)
    sims_ref = jnp.einsum("nd,bd->nb", h_ref, q_ref)[jnp.arange(N), batch]
    logits_ref = to_dense_batch_scalars(sims_ref, batch, jnp.asarray(counts_np),
                                        M, B)[..., None]

    assert logits.shape == (B, M, 1)
    # bf16 MXU operands (f32 accumulation) -> loosened tolerance vs f32 reference.
    assert np.allclose(np.asarray(logits), np.asarray(logits_ref), atol=2e-2), (
        "Pallas result mismatch vs reference")

    print("KERNEL_OK")
</pallas_src>

<mosaic_0001>
module attributes {stable_mosaic.version = 11 : i64} {
  func.func @clip_gnn_kernel(%arg0: i32, %arg1: i32, %arg2: memref<256x512xbf16, #tpu.memory_space<vmem>>, %arg3: memref<512x512xbf16, #tpu.memory_space<vmem>>, %arg4: memref<512x512xbf16, #tpu.memory_space<vmem>>, %arg5: memref<1x512xf32, #tpu.memory_space<vmem>>, %arg6: memref<2x512xf32, #tpu.memory_space<vmem>>, %arg7: memref<2x256xf32, #tpu.memory_space<vmem>>, %arg8: memref<256x512xf32, #tpu.memory_space<vmem>>) attributes {dimension_semantics = [#tpu.dimension_semantics<parallel>, #tpu.dimension_semantics<arbitrary>], iteration_bounds = array<i64: 4, 2>, scalar_prefetch = 0 : i64, scratch_operands = 1 : i64, tpu.core_type = #tpu.core_type<tc>, window_params = [{transform_indices = @transform_0, window_bounds = array<i64: 256, 512>}, {transform_indices = @transform_1, window_bounds = array<i64: 512, 512>}, {pipeline_mode = #tpu.pipeline_mode<synchronous>, transform_indices = @transform_2, window_bounds = array<i64: 512, 512>}, {pipeline_mode = #tpu.pipeline_mode<synchronous>, transform_indices = @transform_3, window_bounds = array<i64: 1, 512>}, {pipeline_mode = #tpu.pipeline_mode<synchronous>, transform_indices = @transform_4, window_bounds = array<i64: 2, 512>}, {transform_indices = @transform_5, window_bounds = array<i64: 2, 256>}]} {
    %c0_i32 = arith.constant 0 : i32
    %0 = arith.cmpi eq, %arg1, %c0_i32 : i32
    %1 = arith.extui %0 : i1 to i32
    %c0_i32_0 = arith.constant 0 : i32
    %2 = arith.cmpi ne, %1, %c0_i32_0 : i32
    scf.if %2 {
      %cst_9 = arith.constant 0.000000e+00 : f32
      %12 = vector.broadcast %cst_9 : f32 to vector<256x512xf32>
      %c0_10 = arith.constant 0 : index
      %c0_11 = arith.constant 0 : index
      %13 = vector.load %arg8[%c0_10, %c0_11] : memref<256x512xf32, #tpu.memory_space<vmem>>, vector<256x512xf32>
      tpu.vector_store %arg8[%c0_10, %c0_11], %12 {strides = array<i32>} : memref<256x512xf32, #tpu.memory_space<vmem>>, vector<256x512xf32>,
    } else {
    }
    %c0 = arith.constant 0 : index
    %c0_1 = arith.constant 0 : index
    %3 = vector.load %arg8[%c0, %c0_1] : memref<256x512xf32, #tpu.memory_space<vmem>>, vector<256x512xf32>
    %c0_2 = arith.constant 0 : index
    %c0_3 = arith.constant 0 : index
    %4 = vector.load %arg2[%c0_2, %c0_3] : memref<256x512xbf16, #tpu.memory_space<vmem>>, vector<256x512xbf16>
    %c0_4 = arith.constant 0 : index
    %c0_5 = arith.constant 0 : index
    %5 = vector.load %arg3[%c0_4, %c0_5] : memref<512x512xbf16, #tpu.memory_space<vmem>>, vector<512x512xbf16>
    %cst = arith.constant dense<0.000000e+00> : vector<256x512xf32>
    %6 = tpu.matmul %4, %5, %cst {dimension_numbers = #tpu.dot_dimension_numbers<[1], [0], [0], [1], [0, 0, 1, 1], [], []>} : vector<256x512xbf16>, vector<512x512xbf16>, vector<256x512xf32> -> vector<256x512xf32>
    %7 = arith.addf %3, %6 : vector<256x512xf32>
    %c0_6 = arith.constant 0 : index
    %c0_7 = arith.constant 0 : index
    %8 = vector.load %arg8[%c0_6, %c0_7] : memref<256x512xf32, #tpu.memory_space<vmem>>, vector<256x512xf32>
    tpu.vector_store %arg8[%c0_6, %c0_7], %7 {strides = array<i32>} : memref<256x512xf32, #tpu.memory_space<vmem>>, vector<256x512xf32>,
    %c1_i32 = arith.constant 1 : i32
    %9 = arith.cmpi eq, %arg1, %c1_i32 : i32
    %10 = arith.extui %9 : i1 to i32
    %c0_i32_8 = arith.constant 0 : i32
    %11 = arith.cmpi ne, %10, %c0_i32_8 : i32
    scf.if %11 {
      %c0_9 = arith.constant 0 : index
      %c0_10 = arith.constant 0 : index
      %12 = vector.load %arg8[%c0_9, %c0_10] : memref<256x512xf32, #tpu.memory_space<vmem>>, vector<256x512xf32>
      %13 = arith.truncf %12 : vector<256x512xf32> to vector<256x512xbf16>
      %c0_11 = arith.constant 0 : index
      %c0_12 = arith.constant 0 : index
      %14 = vector.load %arg4[%c0_11, %c0_12] : memref<512x512xbf16, #tpu.memory_space<vmem>>, vector<512x512xbf16>
      %cst_13 = arith.constant dense<0.000000e+00> : vector<256x512xf32>
      %15 = tpu.matmul %13, %14, %cst_13 {dimension_numbers = #tpu.dot_dimension_numbers<[1], [0], [0], [1], [0, 0, 1, 1], [], []>} : vector<256x512xbf16>, vector<512x512xbf16>, vector<256x512xf32> -> vector<256x512xf32>
      %c0_14 = arith.constant 0 : index
      %c0_15 = arith.constant 0 : index
      %16 = vector.load %arg5[%c0_14, %c0_15] : memref<1x512xf32, #tpu.memory_space<vmem>>, vector<1x512xf32>
      %17 = vector.broadcast %16 : vector<1x512xf32> to vector<256x512xf32>
      %18 = arith.addf %15, %17 : vector<256x512xf32>
      %19 = arith.mulf %18, %18 : vector<256x512xf32>
      %cst_16 = arith.constant dense<0.000000e+00> : vector<256xf32>
      %20 = vector.multi_reduction <add>, %19, %cst_16 [1] : vector<256x512xf32> to vector<256xf32>
      %21 = vector.shape_cast %20 : vector<256xf32> to vector<256x1xf32>
      %cst_17 = arith.constant 9.99999996E-13 : f32
      %22 = vector.broadcast %cst_17 : f32 to vector<256x1xf32>
      %23 = arith.addf %21, %22 : vector<256x1xf32>
      %24 = math.rsqrt %23 : vector<256x1xf32>
      %25 = vector.broadcast %24 : vector<256x1xf32> to vector<256x512xf32>
      %26 = arith.mulf %18, %25 : vector<256x512xf32>
      %c0_18 = arith.constant 0 : index
      %c0_19 = arith.constant 0 : index
      %27 = vector.load %arg6[%c0_18, %c0_19] : memref<2x512xf32, #tpu.memory_space<vmem>>, vector<2x512xf32>
      %28 = arith.truncf %27 : vector<2x512xf32> to vector<2x512xbf16>
      %29 = arith.truncf %26 : vector<256x512xf32> to vector<256x512xbf16>
      "tpu.trace_start"() <{level = 10 : i32, message = "bd,nd->bn"}> : () -> ()
      %cst_20 = arith.constant dense<0.000000e+00> : vector<2x256xf32>
      %30 = tpu.matmul %28, %29, %cst_20 {dimension_numbers = #tpu.dot_dimension_numbers<[1], [1], [0], [0], [0, 0, 1, 0], [], []>} : vector<2x512xbf16>, vector<256x512xbf16>, vector<2x256xf32> -> vector<2x256xf32>
      "tpu.trace_stop"() : () -> ()
      %c0_21 = arith.constant 0 : index
      %c0_22 = arith.constant 0 : index
      %31 = vector.load %arg7[%c0_21, %c0_22] : memref<2x256xf32, #tpu.memory_space<vmem>>, vector<2x256xf32>
      tpu.vector_store %arg7[%c0_21, %c0_22], %30 {strides = array<i32>} : memref<2x256xf32, #tpu.memory_space<vmem>>, vector<2x256xf32>,
    } else {
    }
    return
  }
  func.func @transform_0(%arg0: i32, %arg1: i32) -> (i32, i32) {
    %c0_i32 = arith.constant 0 : i32
    return %arg0, %arg1 : i32, i32
  }
  func.func @transform_1(%arg0: i32, %arg1: i32) -> (i32, i32) {
    %c0_i32 = arith.constant 0 : i32
    %c0_i32_0 = arith.constant 0 : i32
    return %arg1, %c0_i32 : i32, i32
  }
  func.func @transform_2(%arg0: i32, %arg1: i32) -> (i32, i32) {
    %c0_i32 = arith.constant 0 : i32
    %c0_i32_0 = arith.constant 0 : i32
    %c0_i32_1 = arith.constant 0 : i32
    return %c0_i32, %c0_i32_0 : i32, i32
  }
  func.func @transform_3(%arg0: i32, %arg1: i32) -> (i32, i32) {
    %c0_i32 = arith.constant 0 : i32
    %c0_i32_0 = arith.constant 0 : i32
    %c0_i32_1 = arith.constant 0 : i32
    return %c0_i32, %c0_i32_0 : i32, i32
  }
  func.func @transform_4(%arg0: i32, %arg1: i32) -> (i32, i32) {
    %c0_i32 = arith.constant 0 : i32
    %c0_i32_0 = arith.constant 0 : i32
    %c0_i32_1 = arith.constant 0 : i32
    return %c0_i32, %c0_i32_0 : i32, i32
  }
  func.func @transform_5(%arg0: i32, %arg1: i32) -> (i32, i32) {
    %c0_i32 = arith.constant 0 : i32
    %c0_i32_0 = arith.constant 0 : i32
    return %c0_i32, %arg0 : i32, i32
  }
}

</mosaic_0001>

<llo_original>
// kernel: tpu_custom_call.1
$region0: #{tpu_custom_call.1}
  #allocation0 [shape = 'u32[]', space=smem, size = 0x4, offset = 0x4, fixed_abs, tag = 'smem constant byte address 0x4 - core index']
  #allocation1 [shape = 'u32[144,128]{1,0:T(1,128)}', space=vmem, size = 0x12000, scoped, tag = 'internal scratch']
  #allocation2 [shape = 'f32[256,512]{1,0:T(8,128)}', space=vmem, size = 0x80000, scoped, tag = 'scratch operand']
  %s0 = inlined_call_operand.hbm [shape: bf16[1024,1024], index: 0, kind: input, shape index: {}]
  %s1 = inlined_call_operand.hbm [shape: bf16[1024,512], index: 1, kind: input, shape index: {}]
  %s2 = inlined_call_operand.hbm [shape: bf16[512,512], index: 2, kind: input, shape index: {}]
  %s3 = inlined_call_operand.hbm [shape: f32[1,512], index: 3, kind: input, shape index: {}]
  %s4 = inlined_call_operand.hbm [shape: f32[2,512], index: 4, kind: input, shape index: {}]
  %s5 = inlined_call_operand.hbm [shape: f32[2,1024], index: 5, kind: output, shape index: {}]
  %s6 = sld [smem:[#allocation0]]
  $region81: #{tpu_custom_call.1} parent=0
    _
  %s8 = ssub.s32 1, %s6
  %s9 = scalar_select 0, %s8, %s6
  $region1: #{tpu_custom_call.1} parent=0
    #allocation3 [shape = 'u8[524288]{0}', space=vmem, size = 0x80000, scoped, tag = 'input window, operand 0']
    #allocation4 [shape = 's32[2]{0}', space=sflag, size = 0x8, scoped, tag = 'scoped memory for tpu_custom_call.1']
    #allocation5 [shape = 's32[2]{0}', space=sflag, size = 0x8, scoped, tag = 'scoped memory for tpu_custom_call.1']
    #allocation6 [shape = 'u8[1048576]{0}', space=vmem, size = 0x100000, scoped, tag = 'input window, operand 1']
    #allocation7 [shape = 's32[2]{0}', space=sflag, size = 0x8, scoped, tag = 'scoped memory for tpu_custom_call.1']
    #allocation8 [shape = 'u8[524288]{0}', space=vmem, size = 0x80000, scoped, tag = 'input window, operand 2, single buffered']
    #allocation9 [shape = 'u8[2048]{0}', space=vmem, size = 0x800, scoped, tag = 'input window, operand 3, single buffered']
    #allocation10 [shape = 's32[1]{0}', space=sflag, size = 0x4, scoped, tag = 'scoped memory for tpu_custom_call.1']
    #allocation11 [shape = 'u8[4096]{0}', space=vmem, size = 0x1000, scoped, tag = 'input window, operand 4, single buffered']
    #allocation12 [shape = 'u8[4096]{0}', space=vmem, size = 0x1000, scoped, tag = 'output window, operand 0']
    %10 = vsyncpa [#allocation4], 0
    %s11 = scalar_lea.sflag [#allocation4], 1
    %12 = vsyncpa %s11, 0
    %13 = vsyncpa [#allocation7], 0
    %s14 = scalar_lea.sflag [#allocation7], 1
    %15 = vsyncpa %s14, 0
    %16 = vsyncpa [#allocation10], 0
    %17 = vsyncpa [#allocation5], 0
    %s18 = scalar_lea.sflag [#allocation5], 1
    %19 = vsyncpa %s18, 0
    loop: start=0, step=1, limit=10
    $region2: #{tpu_custom_call.1} parent=1 // loop_pre_header
      _
    $region3: #{tpu_custom_call.1} parent=1 // loop_header
      %s21 = sphi 0, %s25
      %p22 = scmp.ge.s32.totalorder %s21, 10
      %s28 = sphi 0, %s40
      %s29 = sphi 0, %s36
      %s30 = sphi 0, %s28
      %s31 = sphi 0, %s29
      %s32 = sphi 0, %s30
      %s33 = sphi 0, %s31
      %s45 = sphi 0, %s47
      %s48 = sphi 0, %s45
      %s49 = sphi 0, %s48
      %s65 = sphi 0, %s49
      %s71 = sphi 0, %s73
      %s74 = sphi 0, %s71
      %s75 = sphi 0, %s74
      %s91 = sphi 0, %s75
      %s95 = sphi 0, %s95
      %s97 = sphi 0, %s95
      %s98 = sphi 0, %s97
      %s112 = sphi 0, %s98
      %s116 = sphi 0, %s116
      %s118 = sphi 0, %s116
      %s119 = sphi 0, %s118
      %s133 = sphi 0, %s119
      %s137 = sphi 0, %s137
      %s139 = sphi 0, %s137
      %s140 = sphi 0, %s139
      %s154 = sphi 0, %s140
      %s160 = sphi 0, %s162
      %s163 = sphi 0, %s160
      %s164 = sphi 0, %s163
      %s180 = sphi 0, %s164
    $region4: #{tpu_custom_call.1} parent=1 // loop_header_branch
      %24 = sbr.rel (%p22) target = $region8
    $region5: #{tpu_custom_call.1} parent=1 // loop_body
      %s26 = ssub.s32 %s21, 1
      %s27 = ssub.s32 %s21, 2
      %s34 = sadd.s32 1, %s29
      %p35 = scmp.ge.s32.totalorder %s34, 2
      %s36 = scalar_select %p35, 0, %s34
      %s37 = sadd.s32 1, %s28
      %s38 = scalar_select %p35, %s37, %s28
      %p39 = scmp.ge.s32.totalorder %s38, 4
      %s40 = scalar_select %p39, 0, %s38
      %s41 = ssub.s32 %s28, %s40
      %s42 = ssub.s32 %s29, %s36
      %s43 = sor.u32 %s41, %s42
      %p44 = scmp.eq.s32.totalorder %s43, 0
      %s46 = sadd.s32 %s45, 1
      %s47 = scalar_select %p44, %s45, %s46
      %p50 = pneg %p44
      %p51 = scmp.eq.s32.totalorder %s21, 7
      %p52 = por %p50, %p51
      %p53 = scmp.ne.s32.totalorder %s45, %s48
      %p54 = scmp.eq.s32.totalorder %s21, 0
      %p55 = por %p53, %p54
      %p56 = scmp.ne.s32.totalorder %s45, %s48
      %p57 = scmp.eq.s32.totalorder %s26, 7
      %p58 = por %p56, %p57
      %p59 = scmp.ne.s32.totalorder %s48, %s49
      %p60 = scmp.eq.s32.totalorder %s26, 0
      %p61 = por %p59, %p60
      %p62 = scmp.ne.s32.totalorder %s48, %s49
      %p63 = scmp.eq.s32.totalorder %s27, 7
      %p64 = por %p62, %p63
      %p66 = scmp.ne.s32.totalorder %s49, %s65
      %p67 = scmp.eq.s32.totalorder %s27, 0
      %p68 = por %p66, %p67
      %s69 = ssub.s32 %s29, %s36
      %p70 = scmp.eq.s32.totalorder %s69, 0
      %s72 = sadd.s32 %s71, 1
      %s73 = scalar_select %p70, %s71, %s72
      %p76 = pneg %p70
      %p77 = scmp.eq.s32.totalorder %s21, 7
      %p78 = por %p76, %p77
      %p79 = scmp.ne.s32.totalorder %s71, %s74
      %p80 = scmp.eq.s32.totalorder %s21, 0
      %p81 = por %p79, %p80
      %p82 = scmp.ne.s32.totalorder %s71, %s74
      %p83 = scmp.eq.s32.totalorder %s26, 7
      %p84 = por %p82, %p83
      %p85 = scmp.ne.s32.totalorder %s74, %s75
      %p86 = scmp.eq.s32.totalorder %s26, 0
      %p87 = por %p85, %p86
      %p88 = scmp.ne.s32.totalorder %s74, %s75
      %p89 = scmp.eq.s32.totalorder %s27, 7
      %p90 = por %p88, %p89
      %p92 = scmp.ne.s32.totalorder %s75, %s91
      %p93 = scmp.eq.s32.totalorder %s27, 0
      %p94 = por %p92, %p93
      %s96 = sadd.s32 %s95, 1
      %p99 = scmp.eq.s32.totalorder %s21, 7
      %p100 = scmp.ne.s32.totalorder %s95, %s97
      %p101 = scmp.eq.s32.totalorder %s21, 0
      %p102 = por %p100, %p101
      %p103 = scmp.ne.s32.totalorder %s95, %s97
      %p104 = scmp.eq.s32.totalorder %s26, 7
      %p105 = por %p103, %p104
      %p106 = scmp.ne.s32.totalorder %s97, %s98
      %p107 = scmp.eq.s32.totalorder %s26, 0
      %p108 = por %p106, %p107
      %p109 = scmp.ne.s32.totalorder %s97, %s98
      %p110 = scmp.eq.s32.totalorder %s27, 7
      %p111 = por %p109, %p110
      %p113 = scmp.ne.s32.totalorder %s98, %s112
      %p114 = scmp.eq.s32.totalorder %s27, 0
      %p115 = por %p113, %p114
      %s117 = sadd.s32 %s116, 1
      %p120 = scmp.eq.s32.totalorder %s21, 7
      %p121 = scmp.ne.s32.totalorder %s116, %s118
      %p122 = scmp.eq.s32.totalorder %s21, 0
      %p123 = por %p121, %p122
      %p124 = scmp.ne.s32.totalorder %s116, %s118
      %p125 = scmp.eq.s32.totalorder %s26, 7
      %p126 = por %p124, %p125
      %p127 = scmp.ne.s32.totalorder %s118, %s119
      %p128 = scmp.eq.s32.totalorder %s26, 0
      %p129 = por %p127, %p128
      %p130 = scmp.ne.s32.totalorder %s118, %s119
      %p131 = scmp.eq.s32.totalorder %s27, 7
      %p132 = por %p130, %p131
      %p134 = scmp.ne.s32.totalorder %s119, %s133
      %p135 = scmp.eq.s32.totalorder %s27, 0
      %p136 = por %p134, %p135
      %s138 = sadd.s32 %s137, 1
      %p141 = scmp.eq.s32.totalorder %s21, 7
      %p142 = scmp.ne.s32.totalorder %s137, %s139
      %p143 = scmp.eq.s32.totalorder %s21, 0
      %p144 = por %p142, %p143
      %p145 = scmp.ne.s32.totalorder %s137, %s139
      %p146 = scmp.eq.s32.totalorder %s26, 7
      %p147 = por %p145, %p146
      %p148 = scmp.ne.s32.totalorder %s139, %s140
      %p149 = scmp.eq.s32.totalorder %s26, 0
      %p150 = por %p148, %p149
      %p151 = scmp.ne.s32.totalorder %s139, %s140
      %p152 = scmp.eq.s32.totalorder %s27, 7
      %p153 = por %p151, %p152
      %p155 = scmp.ne.s32.totalorder %s140, %s154
      %p156 = scmp.eq.s32.totalorder %s27, 0
      %p157 = por %p155, %p156
      %s158 = ssub.s32 %s28, %s40
      %p159 = scmp.eq.s32.totalorder %s158, 0
      %s161 = sadd.s32 %s160, 1
      %s162 = scalar_select %p159, %s160, %s161
      %p165 = pneg %p159
      %p166 = scmp.eq.s32.totalorder %s21, 7
      %p167 = por %p165, %p166
      %p168 = scmp.ne.s32.totalorder %s160, %s163
      %p169 = scmp.eq.s32.totalorder %s21, 0
      %p170 = por %p168, %p169
      %p171 = scmp.ne.s32.totalorder %s160, %s163
      %p172 = scmp.eq.s32.totalorder %s26, 7
      %p173 = por %p171, %p172
      %p174 = scmp.ne.s32.totalorder %s163, %s164
      %p175 = scmp.eq.s32.totalorder %s26, 0
      %p176 = por %p174, %p175
      %p177 = scmp.ne.s32.totalorder %s163, %s164
      %p178 = scmp.eq.s32.totalorder %s27, 7
      %p179 = por %p177, %p178
      %p181 = scmp.ne.s32.totalorder %s164, %s180
      %p182 = scmp.eq.s32.totalorder %s27, 0
      %p183 = por %p181, %p182
      %p184 = scmp.le.s32.totalorder 1, %s21
      %p185 = scmp.lt.s32.totalorder %s21, 9
      %p186 = pnand %p184, %p185
      %p187 = pneg %p186
      // Predicated region
      $region9: #{tpu_custom_call.1} parent=5 // pred_check
        _
      $region10: #{tpu_custom_call.1} parent=5 // pred_check_branch
        %189 = sbr.rel (%p186) target = $region12
      $region11: #{tpu_custom_call.1} parent=5 // pred_region
        %s190 = ssub.s32 %s21, 1
        // Predicated region
        $region13: #{tpu_custom_call.1} parent=11 // pred_check
          %p191 = pneg %p108
        $region14: #{tpu_custom_call.1} parent=11 // pred_check_branch
          %193 = sbr.rel (%p191) target = $region16
        $region15: #{tpu_custom_call.1} parent=11 // pred_region
          %s195 = ssub.s32 16384, 16384
          %196 = vsyncadd [#allocation7], %s195
          %s197 = sshll.u32 [#allocation8], 4
          %s198 = int_to_ptr.vmem [resolvable:$true] %s197
          %203 = dma.hbm_to_vmem [thread:$0]  %s2, 16384, %s198, [#allocation7], 256, 256, 16
        $region16: #{tpu_custom_call.1} parent=11 // pred_fallthru
          _
        // Predicated region
        $region17: #{tpu_custom_call.1} parent=11 // pred_check
          %p204 = pneg %p129
        $region18: #{tpu_custom_call.1} parent=11 // pred_check_branch
          %206 = sbr.rel (%p204) target = $region20
        $region19: #{tpu_custom_call.1} parent=11 // pred_region
          %s208 = ssub.s32 64, 64
          %209 = vsyncadd [#allocation10], %s208
          %s211 = sshll.u32 [#allocation9], 4
          %s212 = int_to_ptr.vmem [resolvable:$true] %s211
          %214 = dma.hbm_to_vmem [thread:$0]  %s3, 64, %s212, [#allocation10]
        $region20: #{tpu_custom_call.1} parent=11 // pred_fallthru
          _
        // Predicated region
        $region21: #{tpu_custom_call.1} parent=11 // pred_check
          %p215 = pneg %p150
        $region22: #{tpu_custom_call.1} parent=11 // pred_check_branch
          %217 = sbr.rel (%p215) target = $region24
        $region23: #{tpu_custom_call.1} parent=11 // pred_region
          %s219 = ssub.s32 128, 128
          %220 = vsyncadd [#allocation10], %s219
          %s222 = sshll.u32 [#allocation11], 4
          %s223 = int_to_ptr.vmem [resolvable:$true] %s222
          %225 = dma.hbm_to_vmem [thread:$0]  %s4, 128, %s223, [#allocation10]
        $region24: #{tpu_custom_call.1} parent=11 // pred_fallthru
          _
      $region12: #{tpu_custom_call.1} parent=5 // pred_fallthru
        _
      %p226 = scmp.lt.s32.totalorder %s21, 8
      // Predicated region
      $region25: #{tpu_custom_call.1} parent=5 // pred_check
        %p227 = pneg %p226
      $region26: #{tpu_custom_call.1} parent=5 // pred_check_branch
        %229 = sbr.rel (%p227) target = $region28
      $region27: #{tpu_custom_call.1} parent=5 // pred_region
        // Predicated region
        $region29: #{tpu_custom_call.1} parent=27 // pred_check
          %p230 = pneg %p55
        $region30: #{tpu_custom_call.1} parent=27 // pred_check_branch
          %232 = sbr.rel (%p230) target = $region32
        $region31: #{tpu_custom_call.1} parent=27 // pred_region
          %s233 = sand.u32 %s45, 1
          %s234 = scalar_lea.sflag [#allocation4], %s233
          %s235 = sand.u32 %s45, 1
          %s236 = smul.addr %s235, 512
          %s237 = scalar_lea.vmem [#allocation3], %s236
          %s238 = smul.u32 32, %s28
          %s239 = smul.u32 4, %s29
          %s241 = ssub.s32 8192, 8192
          %242 = vsyncadd %s234, %s241
          %s243 = smul.addr %s238, 8
          %s244 = sadd.s32 %s239, %s243
          %s245 = smul.addr %s244, 64
          %s246 = scalar_lea.hbm %s0, %s245
          %s247 = sshll.u32 %s237, 4
          %s248 = int_to_ptr.vmem [resolvable:$true] %s247
          %253 = dma.hbm_to_vmem [thread:$0]  %s246, 8192, %s248, %s234, 512, 256, 16
        $region32: #{tpu_custom_call.1} parent=27 // pred_fallthru
          _
        // Predicated region
        $region33: #{tpu_custom_call.1} parent=27 // pred_check
          %p254 = pneg %p81
        $region34: #{tpu_custom_call.1} parent=27 // pred_check_branch
          %256 = sbr.rel (%p254) target = $region36
        $region35: #{tpu_custom_call.1} parent=27 // pred_region
          %s257 = sand.u32 %s21, 1
          %s258 = scalar_lea.sflag [#allocation7], %s257
          %s259 = sand.u32 %s71, 1
          %s260 = smul.addr %s259, 1024
          %s261 = scalar_lea.vmem [#allocation6], %s260
          %s262 = smul.u32 64, %s29
          %s264 = ssub.s32 16384, 16384
          %265 = vsyncadd %s258, %s264
          %s266 = smul.addr %s262, 4
          %s267 = smul.addr %s266, 64
          %s268 = scalar_lea.hbm %s1, %s267
          %s269 = sshll.u32 %s261, 4
          %s270 = int_to_ptr.vmem [resolvable:$true] %s269
          %275 = dma.hbm_to_vmem [thread:$0]  %s268, 16384, %s270, %s258, 256, 256, 16
        $region36: #{tpu_custom_call.1} parent=27 // pred_fallthru
          _
      $region28: #{tpu_custom_call.1} parent=5 // pred_fallthru
        _
      %p276 = scmp.le.s32.totalorder 1, %s21
      %p277 = scmp.lt.s32.totalorder %s21, 9
      %p278 = pnand %p276, %p277
      %p279 = pneg %p278
      // Predicated region
      $region37: #{tpu_custom_call.1} parent=5 // pred_check
        _
      $region38: #{tpu_custom_call.1} parent=5 // pred_check_branch
        %281 = sbr.rel (%p278) target = $region40
      $region39: #{tpu_custom_call.1} parent=5 // pred_region
        %s282 = ssub.s32 %s21, 1
        %s283 = sand.u32 %s48, 1
        %s284 = scalar_lea.sflag [#allocation4], %s283
        %s285 = sand.u32 %s48, 1
        %s286 = smul.addr %s285, 512
        %s287 = scalar_lea.vmem [#allocation3], %s286
        // Predicated region
        $region41: #{tpu_custom_call.1} parent=39 // pred_check
          %p288 = pneg %p61
        $region42: #{tpu_custom_call.1} parent=39 // pred_check_branch
          %290 = sbr.rel (%p288) target = $region44
        $region43: #{tpu_custom_call.1} parent=39 // pred_region
          %291 = dma.done %s284, 8192
        $region44: #{tpu_custom_call.1} parent=39 // pred_fallthru
          _
        %s292 = sand.u32 %s26, 1
        %s293 = scalar_lea.sflag [#allocation7], %s292
        %s294 = sand.u32 %s74, 1
        %s295 = smul.addr %s294, 1024
        %s296 = scalar_lea.vmem [#allocation6], %s295
        // Predicated region
        $region45: #{tpu_custom_call.1} parent=39 // pred_check
          %p297 = pneg %p87
        $region46: #{tpu_custom_call.1} parent=39 // pred_check_branch
          %299 = sbr.rel (%p297) target = $region48
        $region47: #{tpu_custom_call.1} parent=39 // pred_region
          %300 = dma.done %s293, 16384
        $region48: #{tpu_custom_call.1} parent=39 // pred_fallthru
          _
        // Predicated region
        $region49: #{tpu_custom_call.1} parent=39 // pred_check
          %p301 = pneg %p108
        $region50: #{tpu_custom_call.1} parent=39 // pred_check_branch
          %303 = sbr.rel (%p301) target = $region52
        $region51: #{tpu_custom_call.1} parent=39 // pred_region
          %304 = dma.done [#allocation7], 16384
        $region52: #{tpu_custom_call.1} parent=39 // pred_fallthru
          _
        // Predicated region
        $region53: #{tpu_custom_call.1} parent=39 // pred_check
          %p305 = pneg %p129
        $region54: #{tpu_custom_call.1} parent=39 // pred_check_branch
          %307 = sbr.rel (%p305) target = $region56
        $region55: #{tpu_custom_call.1} parent=39 // pred_region
          %308 = dma.done [#allocation10], 64
        $region56: #{tpu_custom_call.1} parent=39 // pred_fallthru
          _
        // Predicated region
        $region57: #{tpu_custom_call.1} parent=39 // pred_check
          %p309 = pneg %p150
        $region58: #{tpu_custom_call.1} parent=39 // pred_check_branch
          %311 = sbr.rel (%p309) target = $region60
        $region59: #{tpu_custom_call.1} parent=39 // pred_region
          %312 = dma.done [#allocation10], 128
        $region60: #{tpu_custom_call.1} parent=39 // pred_fallthru
          _
        %s313 = sand.u32 %s48, 1
        %s314 = scalar_lea.sflag [#allocation4], %s313
        %s315 = sand.u32 %s48, 1
        %s316 = smul.addr %s315, 512
        %s317 = scalar_lea.vmem [#allocation3], %s316
        %p318 = pneg %p61
        %p319 = pneg %p58
        %s320 = sand.u32 %s26, 1
        %s321 = scalar_lea.sflag [#allocation7], %s320
        %s322 = sand.u32 %s74, 1
        %s323 = smul.addr %s322, 1024
        %s324 = scalar_lea.vmem [#allocation6], %s323
        %p325 = pneg %p87
        %p326 = pneg %p84
        %p327 = pneg %p108
        %p328 = pneg %p105
        %p329 = pneg %p129
        %p330 = pneg %p126
        %p331 = pneg %p150
        %p332 = pneg %p147
        %p333 = pneg %p176
        %p334 = pneg %p173
        %s335 = sand.u32 %s163, 1
        %s336 = scalar_lea.sflag [#allocation5], %s335
        %s337 = sand.u32 %s163, 1
        %s338 = smul.addr %s337, 4
        %s339 = scalar_lea.vmem [#allocation12], %s338
        %s340 = smul.u32 32, %s30
        %s341 = smul.u32 4, %s31
        %s342 = smul.u32 64, %s31
        %s343 = smul.u32 2, %s30
        %p344 = scmp.eq.s32.totalorder %s31, 0
        // Predicated region
        $region61: #{tpu_custom_call.1} parent=39 // pred_check
          %p345 = pneg %p344
        $region62: #{tpu_custom_call.1} parent=39 // pred_check_branch
          %347 = sbr.rel (%p345) target = $region64
        $region63: #{tpu_custom_call.1} parent=39 // pred_region
          %348 = vst [vmem:[#allocation2] sm:$0xff] 0.0
          %349 = vst [vmem:[#allocation2 + $0x8] sm:$0xff] 0.0
          %350 = vst [vmem:[#allocation2 + $0x10] sm:$0xff] 0.0
          %351 = vst [vmem:[#allocation2 + $0x18] sm:$0xff] 0.0
          %352 = vst [vmem:[#allocation2 + $0x20] sm:$0xff] 0.0
          %353 = vst [vmem:[#allocation2 + $0x28] sm:$0xff] 0.0
          %354 = vst [vmem:[#allocation2 + $0x30] sm:$0xff] 0.0
          %355 = vst [vmem:[#allocation2 + $0x38] sm:$0xff] 0.0
          %356 = vst [vmem:[#allocation2 + $0x40] sm:$0xff] 0.0
          %357 = vst [vmem:[#allocation2 + $0x48] sm:$0xff] 0.0
          %358 = vst [vmem:[#allocation2 + $0x50] sm:$0xff] 0.0
          %359 = vst [vmem:[#allocation2 + $0x58] sm:$0xff] 0.0
          %360 = vst [vmem:[#allocation2 + $0x60] sm:$0xff] 0.0
          %361 = vst [vmem:[#allocation2 + $0x68] sm:$0xff] 0.0
          %362 = vst [vmem:[#allocation2 + $0x70] sm:$0xff] 0.0
          %363 = vst [vmem:[#allocation2 + $0x78] sm:$0xff] 0.0
          %364 = vst [vmem:[#allocation2 + $0x80] sm:$0xff] 0.0
          %365 = vst [vmem:[#allocation2 + $0x88] sm:$0xff] 0.0
          %366 = vst [vmem:[#allocation2 + $0x90] sm:$0xff] 0.0
          %367 = vst [vmem:[#allocation2 + $0x98] sm:$0xff] 0.0
          %368 = vst [vmem:[#allocation2 + $0xa0] sm:$0xff] 0.0
          %369 = vst [vmem:[#allocation2 + $0xa8] sm:$0xff] 0.0
          %370 = vst [vmem:[#allocation2 + $0xb0] sm:$0xff] 0.0
          %371 = vst [vmem:[#allocation2 + $0xb8] sm:$0xff] 0.0
          %372 = vst [vmem:[#allocation2 + $0xc0] sm:$0xff] 0.0
          %373 = vst [vmem:[#allocation2 + $0xc8] sm:$0xff] 0.0
          %374 = vst [vmem:[#allocation2 + $0xd0] sm:$0xff] 0.0
          %375 = vst [vmem:[#allocation2 + $0xd8] sm:$0xff] 0.0
          %376 = vst [vmem:[#allocation2 + $0xe0] sm:$0xff] 0.0
          %377 = vst [vmem:[#allocation2 + $0xe8] sm:$0xff] 0.0
          %378 = vst [vmem:[#allocation2 + $0xf0] sm:$0xff] 0.0
          %379 = vst [vmem:[#allocation2 + $0xf8] sm:$0xff] 0.0
          %380 = vst [vmem:[#allocation2 + $0x100] sm:$0xff] 0.0
          %381 = vst [vmem:[#allocation2 + $0x108] sm:$0xff] 0.0
          %382 = vst [vmem:[#allocation2 + $0x110] sm:$0xff] 0.0
          %383 = vst [vmem:[#allocation2 + $0x118] sm:$0xff] 0.0
          %384 = vst [vmem:[#allocation2 + $0x120] sm:$0xff] 0.0
          %385 = vst [vmem:[#allocation2 + $0x128] sm:$0xff] 0.0
          %386 = vst [vmem:[#allocation2 + $0x130] sm:$0xff] 0.0
          %387 = vst [vmem:[#allocation2 + $0x138] sm:$0xff] 0.0
          %388 = vst [vmem:[#allocation2 + $0x140] sm:$0xff] 0.0
          %389 = vst [vmem:[#allocation2 + $0x148] sm:$0xff] 0.0
          %390 = vst [vmem:[#allocation2 + $0x150] sm:$0xff] 0.0
          %391 = vst [vmem:[#allocation2 + $0x158] sm:$0xff] 0.0
          %392 = vst [vmem:[#allocation2 + $0x160] sm:$0xff] 0.0
          %393 = vst [vmem:[#allocation2 + $0x168] sm:$0xff] 0.0
          %394 = vst [vmem:[#allocation2 + $0x170] sm:$0xff] 0.0
          %395 = vst [vmem:[#allocation2 + $0x178] sm:$0xff] 0.0
          %396 = vst [vmem:[#allocation2 + $0x180] sm:$0xff] 0.0
          %397 = vst [vmem:[#allocation2 + $0x188] sm:$0xff] 0.0
          %398 = vst [vmem:[#allocation2 + $0x190] sm:$0xff] 0.0
          %399 = vst [vmem:[#allocation2 + $0x198] sm:$0xff] 0.0
          %400 = vst [vmem:[#allocation2 + $0x1a0] sm:$0xff] 0.0
          %401 = vst [vmem:[#allocation2 + $0x1a8] sm:$0xff] 0.0
          %402 = vst [vmem:[#allocation2 + $0x1b0] sm:$0xff] 0.0
          %403 = vst [vmem:[#allocation2 + $0x1b8] sm:$0xff] 0.0
          %404 = vst [vmem:[#allocation2 + $0x1c0] sm:$0xff] 0.0
          %405 = vst [vmem:[#allocation2 + $0x1c8] sm:$0xff] 0.0
          %406 = vst [vmem:[#allocation2 + $0x1d0] sm:$0xff] 0.0
          %407 = vst [vmem:[#allocation2 + $0x1d8] sm:$0xff] 0.0
          %408 = vst [vmem:[#allocation2 + $0x1e0] sm:$0xff] 0.0
          %409 = vst [vmem:[#allocation2 + $0x1e8] sm:$0xff] 0.0
          %410 = vst [vmem:[#allocation2 + $0x1f0] sm:$0xff] 0.0
          %411 = vst [vmem:[#allocation2 + $0x1f8] sm:$0xff] 0.0
          %412 = vst [vmem:[#allocation2 + $0x200] sm:$0xff] 0.0
          %413 = vst [vmem:[#allocation2 + $0x208] sm:$0xff] 0.0
          %414 = vst [vmem:[#allocation2 + $0x210] sm:$0xff] 0.0
          %415 = vst [vmem:[#allocation2 + $0x218] sm:$0xff] 0.0
          %416 = vst [vmem:[#allocation2 + $0x220] sm:$0xff] 0.0
          %417 = vst [vmem:[#allocation2 + $0x228] sm:$0xff] 0.0
          %418 = vst [vmem:[#allocation2 + $0x230] sm:$0xff] 0.0
          %419 = vst [vmem:[#allocation2 + $0x238] sm:$0xff] 0.0
          %420 = vst [vmem:[#allocation2 + $0x240] sm:$0xff] 0.0
          %421 = vst [vmem:[#allocation2 + $0x248] sm:$0xff] 0.0
          %422 = vst [vmem:[#allocation2 + $0x250] sm:$0xff] 0.0
          %423 = vst [vmem:[#allocation2 + $0x258] sm:$0xff] 0.0
          %424 = vst [vmem:[#allocation2 + $0x260] sm:$0xff] 0.0
          %425 = vst [vmem:[#allocation2 + $0x268] sm:$0xff] 0.0
          %426 = vst [vmem:[#allocation2 + $0x270] sm:$0xff] 0.0
          %427 = vst [vmem:[#allocation2 + $0x278] sm:$0xff] 0.0
          %428 = vst [vmem:[#allocation2 + $0x280] sm:$0xff] 0.0
          %429 = vst [vmem:[#allocation2 + $0x288] sm:$0xff] 0.0
          %430 = vst [vmem:[#allocation2 + $0x290] sm:$0xff] 0.0
          %431 = vst [vmem:[#allocation2 + $0x298] sm:$0xff] 0.0
          %432 = vst [vmem:[#allocation2 + $0x2a0] sm:$0xff] 0.0
          %433 = vst [vmem:[#allocation2 + $0x2a8] sm:$0xff] 0.0
          %434 = vst [vmem:[#allocation2 + $0x2b0] sm:$0xff] 0.0
          %435 = vst [vmem:[#allocation2 + $0x2b8] sm:$0xff] 0.0
          %436 = vst [vmem:[#allocation2 + $0x2c0] sm:$0xff] 0.0
          %437 = vst [vmem:[#allocation2 + $0x2c8] sm:$0xff] 0.0
          %438 = vst [vmem:[#allocation2 + $0x2d0] sm:$0xff] 0.0
          %439 = vst [vmem:[#allocation2 + $0x2d8] sm:$0xff] 0.0
          %440 = vst [vmem:[#allocation2 + $0x2e0] sm:$0xff] 0.0
          %441 = vst [vmem:[#allocation2 + $0x2e8] sm:$0xff] 0.0
          %442 = vst [vmem:[#allocation2 + $0x2f0] sm:$0xff] 0.0
          %443 = vst [vmem:[#allocation2 + $0x2f8] sm:$0xff] 0.0
          %444 = vst [vmem:[#allocation2 + $0x300] sm:$0xff] 0.0
          %445 = vst [vmem:[#allocation2 + $0x308] sm:$0xff] 0.0
          %446 = vst [vmem:[#allocation2 + $0x310] sm:$0xff] 0.0
          %447 = vst [vmem:[#allocation2 + $0x318] sm:$0xff] 0.0
          %448 = vst [vmem:[#allocation2 + $0x320] sm:$0xff] 0.0
          %449 = vst [vmem:[#allocation2 + $0x328] sm:$0xff] 0.0
          %450 = vst [vmem:[#allocation2 + $0x330] sm:$0xff] 0.0
          %451 = vst [vmem:[#allocation2 + $0x338] sm:$0xff] 0.0
          %452 = vst [vmem:[#allocation2 + $0x340] sm:$0xff] 0.0
          %453 = vst [vmem:[#allocation2 + $0x348] sm:$0xff] 0.0
          %454 = vst [vmem:[#allocation2 + $0x350] sm:$0xff] 0.0
          %455 = vst [vmem:[#allocation2 + $0x358] sm:$0xff] 0.0
          %456 = vst [vmem:[#allocation2 + $0x360] sm:$0xff] 0.0
          %457 = vst [vmem:[#allocation2 + $0x368] sm:$0xff] 0.0
          %458 = vst [vmem:[#allocation2 + $0x370] sm:$0xff] 0.0
          %459 = vst [vmem:[#allocation2 + $0x378] sm:$0xff] 0.0
          %460 = vst [vmem:[#allocation2 + $0x380] sm:$0xff] 0.0
          %461 = vst [vmem:[#allocation2 + $0x388] sm:$0xff] 0.0
          %462 = vst [vmem:[#allocation2 + $0x390] sm:$0xff] 0.0
          %463 = vst [vmem:[#allocation2 + $0x398] sm:$0xff] 0.0
          %464 = vst [vmem:[#allocation2 + $0x3a0] sm:$0xff] 0.0
          %465 = vst [vmem:[#allocation2 + $0x3a8] sm:$0xff] 0.0
          %466 = vst [vmem:[#allocation2 + $0x3b0] sm:$0xff] 0.0
          %467 = vst [vmem:[#allocation2 + $0x3b8] sm:$0xff] 0.0
          %468 = vst [vmem:[#allocation2 + $0x3c0] sm:$0xff] 0.0
          %469 = vst [vmem:[#allocation2 + $0x3c8] sm:$0xff] 0.0
          %470 = vst [vmem:[#allocation2 + $0x3d0] sm:$0xff] 0.0
          %471 = vst [vmem:[#allocation2 + $0x3d8] sm:$0xff] 0.0
          %472 = vst [vmem:[#allocation2 + $0x3e0] sm:$0xff] 0.0
          %473 = vst [vmem:[#allocation2 + $0x3e8] sm:$0xff] 0.0
          %474 = vst [vmem:[#allocation2 + $0x3f0] sm:$0xff] 0.0
          %475 = vst [vmem:[#allocation2 + $0x3f8] sm:$0xff] 0.0
        $region64: #{tpu_custom_call.1} parent=39 // pred_fallthru
          _
        %v476 = vld [vmem:[#allocation2] sm:$0xff]
        %v477 = vld [vmem:[#allocation2 + $0x8] sm:$0xff]
        %v478 = vld [vmem:[#allocation2 + $0x10] sm:$0xff]
        %v479 = vld [vmem:[#allocation2 + $0x18] sm:$0xff]
        %v480 = vld [vmem:[#allocation2 + $0x20] sm:$0xff]
        %v481 = vld [vmem:[#allocation2 + $0x28] sm:$0xff]
        %v482 = vld [vmem:[#allocation2 + $0x30] sm:$0xff]
        %v483 = vld [vmem:[#allocation2 + $0x38] sm:$0xff]
        %v484 = vld [vmem:[#allocation2 + $0x40] sm:$0xff]
        %v485 = vld [vmem:[#allocation2 + $0x48] sm:$0xff]
        %v486 = vld [vmem:[#allocation2 + $0x50] sm:$0xff]
        %v487 = vld [vmem:[#allocation2 + $0x58] sm:$0xff]
        %v488 = vld [vmem:[#allocation2 + $0x60] sm:$0xff]
        %v489 = vld [vmem:[#allocation2 + $0x68] sm:$0xff]
        %v490 = vld [vmem:[#allocation2 + $0x70] sm:$0xff]
        %v491 = vld [vmem:[#allocation2 + $0x78] sm:$0xff]
        %v492 = vld [vmem:[#allocation2 + $0x80] sm:$0xff]
        %v493 = vld [vmem:[#allocation2 + $0x88] sm:$0xff]
        %v494 = vld [vmem:[#allocation2 + $0x90] sm:$0xff]
        %v495 = vld [vmem:[#allocation2 + $0x98] sm:$0xff]
        %v496 = vld [vmem:[#allocation2 + $0xa0] sm:$0xff]
        %v497 = vld [vmem:[#allocation2 + $0xa8] sm:$0xff]
        %v498 = vld [vmem:[#allocation2 + $0xb0] sm:$0xff]
        %v499 = vld [vmem:[#allocation2 + $0xb8] sm:$0xff]
        %v500 = vld [vmem:[#allocation2 + $0xc0] sm:$0xff]
        %v501 = vld [vmem:[#allocation2 + $0xc8] sm:$0xff]
        %v502 = vld [vmem:[#allocation2 + $0xd0] sm:$0xff]
        %v503 = vld [vmem:[#allocation2 + $0xd8] sm:$0xff]
        %v504 = vld [vmem:[#allocation2 + $0xe0] sm:$0xff]
        %v505 = vld [vmem:[#allocation2 + $0xe8] sm:$0xff]
        %v506 = vld [vmem:[#allocation2 + $0xf0] sm:$0xff]
        %v507 = vld [vmem:[#allocation2 + $0xf8] sm:$0xff]
        %v508 = vld [vmem:[#allocation2 + $0x100] sm:$0xff]
        %v509 = vld [vmem:[#allocation2 + $0x108] sm:$0xff]
        %v510 = vld [vmem:[#allocation2 + $0x110] sm:$0xff]
        %v511 = vld [vmem:[#allocation2 + $0x118] sm:$0xff]
        %v512 = vld [vmem:[#allocation2 + $0x120] sm:$0xff]
        %v513 = vld [vmem:[#allocation2 + $0x128] sm:$0xff]
        %v514 = vld [vmem:[#allocation2 + $0x130] sm:$0xff]
        %v515 = vld [vmem:[#allocation2 + $0x138] sm:$0xff]
        %v516 = vld [vmem:[#allocation2 + $0x140] sm:$0xff]
        %v517 = vld [vmem:[#allocation2 + $0x148] sm:$0xff]
        %v518 = vld [vmem:[#allocation2 + $0x150] sm:$0xff]
        %v519 = vld [vmem:[#allocation2 + $0x158] sm:$0xff]
        %v520 = vld [vmem:[#allocation2 + $0x160] sm:$0xff]
        %v521 = vld [vmem:[#allocation2 + $0x168] sm:$0xff]
        %v522 = vld [vmem:[#allocation2 + $0x170] sm:$0xff]
        %v523 = vld [vmem:[#allocation2 + $0x178] sm:$0xff]
        %v524 = vld [vmem:[#allocation2 + $0x180] sm:$0xff]
        %v525 = vld [vmem:[#allocation2 + $0x188] sm:$0xff]
        %v526 = vld [vmem:[#allocation2 + $0x190] sm:$0xff]
        %v527 = vld [vmem:[#allocation2 + $0x198] sm:$0xff]
        %v528 = vld [vmem:[#allocation2 + $0x1a0] sm:$0xff]
        %v529 = vld [vmem:[#allocation2 + $0x1a8] sm:$0xff]
        %v530 = vld [vmem:[#allocation2 + $0x1b0] sm:$0xff]
        %v531 = vld [vmem:[#allocation2 + $0x1b8] sm:$0xff]
        %v532 = vld [vmem:[#allocation2 + $0x1c0] sm:$0xff]
        %v533 = vld [vmem:[#allocation2 + $0x1c8] sm:$0xff]
        %v534 = vld [vmem:[#allocation2 + $0x1d0] sm:$0xff]
        %v535 = vld [vmem:[#allocation2 + $0x1d8] sm:$0xff]
        %v536 = vld [vmem:[#allocation2 + $0x1e0] sm:$0xff]
        %v537 = vld [vmem:[#allocation2 + $0x1e8] sm:$0xff]
        %v538 = vld [vmem:[#allocation2 + $0x1f0] sm:$0xff]
        %v539 = vld [vmem:[#allocation2 + $0x1f8] sm:$0xff]
        %v540 = vld [vmem:[#allocation2 + $0x200] sm:$0xff]
        %v541 = vld [vmem:[#allocation2 + $0x208] sm:$0xff]
        %v542 = vld [vmem:[#allocation2 + $0x210] sm:$0xff]
        %v543 = vld [vmem:[#allocation2 + $0x218] sm:$0xff]
        %v544 = vld [vmem:[#allocation2 + $0x220] sm:$0xff]
        %v545 = vld [vmem:[#allocation2 + $0x228] sm:$0xff]
        %v546 = vld [vmem:[#allocation2 + $0x230] sm:$0xff]
        %v547 = vld [vmem:[#allocation2 + $0x238] sm:$0xff]
        %v548 = vld [vmem:[#allocation2 + $0x240] sm:$0xff]
        %v549 = vld [vmem:[#allocation2 + $0x248] sm:$0xff]
        %v550 = vld [vmem:[#allocation2 + $0x250] sm:$0xff]
        %v551 = vld [vmem:[#allocation2 + $0x258] sm:$0xff]
        %v552 = vld [vmem:[#allocation2 + $0x260] sm:$0xff]
        %v553 = vld [vmem:[#allocation2 + $0x268] sm:$0xff]
        %v554 = vld [vmem:[#allocation2 + $0x270] sm:$0xff]
        %v555 = vld [vmem:[#allocation2 + $0x278] sm:$0xff]
        %v556 = vld [vmem:[#allocation2 + $0x280] sm:$0xff]
        %v557 = vld [vmem:[#allocation2 + $0x288] sm:$0xff]
        %v558 = vld [vmem:[#allocation2 + $0x290] sm:$0xff]
        %v559 = vld [vmem:[#allocation2 + $0x298] sm:$0xff]
        %v560 = vld [vmem:[#allocation2 + $0x2a0] sm:$0xff]
        %v561 = vld [vmem:[#allocation2 + $0x2a8] sm:$0xff]
        %v562 = vld [vmem:[#allocation2 + $0x2b0] sm:$0xff]
        %v563 = vld [vmem:[#allocation2 + $0x2b8] sm:$0xff]
        %v564 = vld [vmem:[#allocation2 + $0x2c0] sm:$0xff]
        %v565 = vld [vmem:[#allocation2 + $0x2c8] sm:$0xff]
        %v566 = vld [vmem:[#allocation2 + $0x2d0] sm:$0xff]
        %v567 = vld [vmem:[#allocation2 + $0x2d8] sm:$0xff]
        %v568 = vld [vmem:[#allocation2 + $0x2e0] sm:$0xff]
        %v569 = vld [vmem:[#allocation2 + $0x2e8] sm:$0xff]
        %v570 = vld [vmem:[#allocation2 + $0x2f0] sm:$0xff]
        %v571 = vld [vmem:[#allocation2 + $0x2f8] sm:$0xff]
        %v572 = vld [vmem:[#allocation2 + $0x300] sm:$0xff]
        %v573 = vld [vmem:[#allocation2 + $0x308] sm:$0xff]
        %v574 = vld [vmem:[#allocation2 + $0x310] sm:$0xff]
        %v575 = vld [vmem:[#allocation2 + $0x318] sm:$0xff]
        %v576 = vld [vmem:[#allocation2 + $0x320] sm:$0xff]
        %v577 = vld [vmem:[#allocation2 + $0x328] sm:$0xff]
        %v578 = vld [vmem:[#allocation2 + $0x330] sm:$0xff]
        %v579 = vld [vmem:[#allocation2 + $0x338] sm:$0xff]
        %v580 = vld [vmem:[#allocation2 + $0x340] sm:$0xff]
        %v581 = vld [vmem:[#allocation2 + $0x348] sm:$0xff]
        %v582 = vld [vmem:[#allocation2 + $0x350] sm:$0xff]
        %v583 = vld [vmem:[#allocation2 + $0x358] sm:$0xff]
        %v584 = vld [vmem:[#allocation2 + $0x360] sm:$0xff]
        %v585 = vld [vmem:[#allocation2 + $0x368] sm:$0xff]
        %v586 = vld [vmem:[#allocation2 + $0x370] sm:$0xff]
        %v587 = vld [vmem:[#allocation2 + $0x378] sm:$0xff]
        %v588 = vld [vmem:[#allocation2 + $0x380] sm:$0xff]
        %v589 = vld [vmem:[#allocation2 + $0x388] sm:$0xff]
        %v590 = vld [vmem:[#allocation2 + $0x390] sm:$0xff]
        %v591 = vld [vmem:[#allocation2 + $0x398] sm:$0xff]
        %v592 = vld [vmem:[#allocation2 + $0x3a0] sm:$0xff]
        %v593 = vld [vmem:[#allocation2 + $0x3a8] sm:$0xff]
        %v594 = vld [vmem:[#allocation2 + $0x3b0] sm:$0xff]
        %v595 = vld [vmem:[#allocation2 + $0x3b8] sm:$0xff]
        %v596 = vld [vmem:[#allocation2 + $0x3c0] sm:$0xff]
        %v597 = vld [vmem:[#allocation2 + $0x3c8] sm:$0xff]
        %v598 = vld [vmem:[#allocation2 + $0x3d0] sm:$0xff]
        %v599 = vld [vmem:[#allocation2 + $0x3d8] sm:$0xff]
        %v600 = vld [vmem:[#allocation2 + $0x3e0] sm:$0xff]
        %v601 = vld [vmem:[#allocation2 + $0x3e8] sm:$0xff]
        %v602 = vld [vmem:[#allocation2 + $0x3f0] sm:$0xff]
        %v603 = vld [vmem:[#allocation2 + $0x3f8] sm:$0xff]
        %v604 = vld [vmem:[%s287] sm:$0xff]
        %v605 = vld [vmem:[%s287 + $0x8] sm:$0xff]
        %v606 = vld [vmem:[%s287 + $0x10] sm:$0xff]
        %v607 = vld [vmem:[%s287 + $0x18] sm:$0xff]
        %v608 = vld [vmem:[%s287 + $0x20] sm:$0xff]
        %v609 = vld [vmem:[%s287 + $0x28] sm:$0xff]
        %v610 = vld [vmem:[%s287 + $0x30] sm:$0xff]
        %v611 = vld [vmem:[%s287 + $0x38] sm:$0xff]
        %v612 = vld [vmem:[%s287 + $0x40] sm:$0xff]
        %v613 = vld [vmem:[%s287 + $0x48] sm:$0xff]
        %v614 = vld [vmem:[%s287 + $0x50] sm:$0xff]
        %v615 = vld [vmem:[%s287 + $0x58] sm:$0xff]
        %v616 = vld [vmem:[%s287 + $0x60] sm:$0xff]
        %v617 = vld [vmem:[%s287 + $0x68] sm:$0xff]
        %v618 = vld [vmem:[%s287 + $0x70] sm:$0xff]
        %v619 = vld [vmem:[%s287 + $0x78] sm:$0xff]
        %v620 = vld [vmem:[%s287 + $0x80] sm:$0xff]
        %v621 = vld [vmem:[%s287 + $0x88] sm:$0xff]
        %v622 = vld [vmem:[%s287 + $0x90] sm:$0xff]
        %v623 = vld [vmem:[%s287 + $0x98] sm:$0xff]
        %v624 = vld [vmem:[%s287 + $0xa0] sm:$0xff]
        %v625 = vld [vmem:[%s287 + $0xa8] sm:$0xff]
        %v626 = vld [vmem:[%s287 + $0xb0] sm:$0xff]
        %v627 = vld [vmem:[%s287 + $0xb8] sm:$0xff]
        %v628 = vld [vmem:[%s287 + $0xc0] sm:$0xff]
        %v629 = vld [vmem:[%s287 + $0xc8] sm:$0xff]
        %v630 = vld [vmem:[%s287 + $0xd0] sm:$0xff]
        %v631 = vld [vmem:[%s287 + $0xd8] sm:$0xff]
        %v632 = vld [vmem:[%s287 + $0xe0] sm:$0xff]
        %v633 = vld [vmem:[%s287 + $0xe8] sm:$0xff]
        %v634 = vld [vmem:[%s287 + $0xf0] sm:$0xff]
        %v635 = vld [vmem:[%s287 + $0xf8] sm:$0xff]
        %v636 = vld [vmem:[%s287 + $0x100] sm:$0xff]
        %v637 = vld [vmem:[%s287 + $0x108] sm:$0xff]
        %v638 = vld [vmem:[%s287 + $0x110] sm:$0xff]
        %v639 = vld [vmem:[%s287 + $0x118] sm:$0xff]
        %v640 = vld [vmem:[%s287 + $0x120] sm:$0xff]
        %v641 = vld [vmem:[%s287 + $0x128] sm:$0xff]
        %v642 = vld [vmem:[%s287 + $0x130] sm:$0xff]
        %v643 = vld [vmem:[%s287 + $0x138] sm:$0xff]
        %v644 = vld [vmem:[%s287 + $0x140] sm:$0xff]
        %v645 = vld [vmem:[%s287 + $0x148] sm:$0xff]
        %v646 = vld [vmem:[%s287 + $0x150] sm:$0xff]
        %v647 = vld [vmem:[%s287 + $0x158] sm:$0xff]
        %v648 = vld [vmem:[%s287 + $0x160] sm:$0xff]
        %v649 = vld [vmem:[%s287 + $0x168] sm:$0xff]
        %v650 = vld [vmem:[%s287 + $0x170] sm:$0xff]
        %v651 = vld [vmem:[%s287 + $0x178] sm:$0xff]
        %v652 = vld [vmem:[%s287 + $0x180] sm:$0xff]
        %v653 = vld [vmem:[%s287 + $0x188] sm:$0xff]
        %v654 = vld [vmem:[%s287 + $0x190] sm:$0xff]
        %v655 = vld [vmem:[%s287 + $0x198] sm:$0xff]
        %v656 = vld [vmem:[%s287 + $0x1a0] sm:$0xff]
        %v657 = vld [vmem:[%s287 + $0x1a8] sm:$0xff]
        %v658 = vld [vmem:[%s287 + $0x1b0] sm:$0xff]
        %v659 = vld [vmem:[%s287 + $0x1b8] sm:$0xff]
        %v660 = vld [vmem:[%s287 + $0x1c0] sm:$0xff]
        %v661 = vld [vmem:[%s287 + $0x1c8] sm:$0xff]
        %v662 = vld [vmem:[%s287 + $0x1d0] sm:$0xff]
        %v663 = vld [vmem:[%s287 + $0x1d8] sm:$0xff]
        %v664 = vld [vmem:[%s287 + $0x1e0] sm:$0xff]
        %v665 = vld [vmem:[%s287 + $0x1e8] sm:$0xff]
        %v666 = vld [vmem:[%s287 + $0x1f0] sm:$0xff]
        %v667 = vld [vmem:[%s287 + $0x1f8] sm:$0xff]
        %v668 = vld [vmem:[%s296] sm:$0xff]
        %v669 = vld [vmem:[%s296 + $0x8] sm:$0xff]
        %v670 = vld [vmem:[%s296 + $0x10] sm:$0xff]
        %v671 = vld [vmem:[%s296 + $0x18] sm:$0xff]
        %v672 = vld [vmem:[%s296 + $0x20] sm:$0xff]
        %v673 = vld [vmem:[%s296 + $0x28] sm:$0xff]
        %v674 = vld [vmem:[%s296 + $0x30] sm:$0xff]
        %v675 = vld [vmem:[%s296 + $0x38] sm:$0xff]
        %v676 = vld [vmem:[%s296 + $0x40] sm:$0xff]
        %v677 = vld [vmem:[%s296 + $0x48] sm:$0xff]
        %v678 = vld [vmem:[%s296 + $0x50] sm:$0xff]
        %v679 = vld [vmem:[%s296 + $0x58] sm:$0xff]
        %v680 = vld [vmem:[%s296 + $0x60] sm:$0xff]
        %v681 = vld [vmem:[%s296 + $0x68] sm:$0xff]
        %v682 = vld [vmem:[%s296 + $0x70] sm:$0xff]
        %v683 = vld [vmem:[%s296 + $0x78] sm:$0xff]
        %v684 = vld [vmem:[%s296 + $0x80] sm:$0xff]
        %v685 = vld [vmem:[%s296 + $0x88] sm:$0xff]
        %v686 = vld [vmem:[%s296 + $0x90] sm:$0xff]
        %v687 = vld [vmem:[%s296 + $0x98] sm:$0xff]
        %v688 = vld [vmem:[%s296 + $0xa0] sm:$0xff]
        %v689 = vld [vmem:[%s296 + $0xa8] sm:$0xff]
        %v690 = vld [vmem:[%s296 + $0xb0] sm:$0xff]
        %v691 = vld [vmem:[%s296 + $0xb8] sm:$0xff]
        %v692 = vld [vmem:[%s296 + $0xc0] sm:$0xff]
        %v693 = vld [vmem:[%s296 + $0xc8] sm:$0xff]
        %v694 = vld [vmem:[%s296 + $0xd0] sm:$0xff]
        %v695 = vld [vmem:[%s296 + $0xd8] sm:$0xff]
        %v696 = vld [vmem:[%s296 + $0xe0] sm:$0xff]
        %v697 = vld [vmem:[%s296 + $0xe8] sm:$0xff]
        %v698 = vld [vmem:[%s296 + $0xf0] sm:$0xff]
        %v699 = vld [vmem:[%s296 + $0xf8] sm:$0xff]
        %v700 = vld [vmem:[%s296 + $0x100] sm:$0xff]
        %v701 = vld [vmem:[%s296 + $0x108] sm:$0xff]
        %v702 = vld [vmem:[%s296 + $0x110] sm:$0xff]
        %v703 = vld [vmem:[%s296 + $0x118] sm:$0xff]
        %v704 = vld [vmem:[%s296 + $0x120] sm:$0xff]
        %v705 = vld [vmem:[%s296 + $0x128] sm:$0xff]
        %v706 = vld [vmem:[%s296 + $0x130] sm:$0xff]
        %v707 = vld [vmem:[%s296 + $0x138] sm:$0xff]
        %v708 = vld [vmem:[%s296 + $0x140] sm:$0xff]
        %v709 = vld [vmem:[%s296 + $0x148] sm:$0xff]
        %v710 = vld [vmem:[%s296 + $0x150] sm:$0xff]
        %v711 = vld [vmem:[%s296 + $0x158] sm:$0xff]
        %v712 = vld [vmem:[%s296 + $0x160] sm:$0xff]
        %v713 = vld [vmem:[%s296 + $0x168] sm:$0xff]
        %v714 = vld [vmem:[%s296 + $0x170] sm:$0xff]
        %v715 = vld [vmem:[%s296 + $0x178] sm:$0xff]
        %v716 = vld [vmem:[%s296 + $0x180] sm:$0xff]
        %v717 = vld [vmem:[%s296 + $0x188] sm:$0xff]
        %v718 = vld [vmem:[%s296 + $0x190] sm:$0xff]
        %v719 = vld [vmem:[%s296 + $0x198] sm:$0xff]
        %v720 = vld [vmem:[%s296 + $0x1a0] sm:$0xff]
        %v721 = vld [vmem:[%s296 + $0x1a8] sm:$0xff]
        %v722 = vld [vmem:[%s296 + $0x1b0] sm:$0xff]
        %v723 = vld [vmem:[%s296 + $0x1b8] sm:$0xff]
        %v724 = vld [vmem:[%s296 + $0x1c0] sm:$0xff]
        %v725 = vld [vmem:[%s296 + $0x1c8] sm:$0xff]
        %v726 = vld [vmem:[%s296 + $0x1d0] sm:$0xff]
        %v727 = vld [vmem:[%s296 + $0x1d8] sm:$0xff]
        %v728 = vld [vmem:[%s296 + $0x1e0] sm:$0xff]
        %v729 = vld [vmem:[%s296 + $0x1e8] sm:$0xff]
        %v730 = vld [vmem:[%s296 + $0x1f0] sm:$0xff]
        %v731 = vld [vmem:[%s296 + $0x1f8] sm:$0xff]
        %v732 = vld [vmem:[%s296 + $0x200] sm:$0xff]
        %v733 = vld [vmem:[%s296 + $0x208] sm:$0xff]
        %v734 = vld [vmem:[%s296 + $0x210] sm:$0xff]
        %v735 = vld [vmem:[%s296 + $0x218] sm:$0xff]
        %v736 = vld [vmem:[%s296 + $0x220] sm:$0xff]
        %v737 = vld [vmem:[%s296 + $0x228] sm:$0xff]
        %v738 = vld [vmem:[%s296 + $0x230] sm:$0xff]
        %v739 = vld [vmem:[%s296 + $0x238] sm:$0xff]
        %v740 = vld [vmem:[%s296 + $0x240] sm:$0xff]
        %v741 = vld [vmem:[%s296 + $0x248] sm:$0xff]
        %v742 = vld [vmem:[%s296 + $0x250] sm:$0xff]
        %v743 = vld [vmem:[%s296 + $0x258] sm:$0xff]
        %v744 = vld [vmem:[%s296 + $0x260] sm:$0xff]
        %v745 = vld [vmem:[%s296 + $0x268] sm:$0xff]
        %v746 = vld [vmem:[%s296 + $0x270] sm:$0xff]
        %v747 = vld [vmem:[%s296 + $0x278] sm:$0xff]
        %v748 = vld [vmem:[%s296 + $0x280] sm:$0xff]
        %v749 = vld [vmem:[%s296 + $0x288] sm:$0xff]
        %v750 = vld [vmem:[%s296 + $0x290] sm:$0xff]
        %v751 = vld [vmem:[%s296 + $0x298] sm:$0xff]
        %v752 = vld [vmem:[%s296 + $0x2a0] sm:$0xff]
        %v753 = vld [vmem:[%s296 + $0x2a8] sm:$0xff]
        %v754 = vld [vmem:[%s296 + $0x2b0] sm:$0xff]
        %v755 = vld [vmem:[%s296 + $0x2b8] sm:$0xff]
        %v756 = vld [vmem:[%s296 + $0x2c0] sm:$0xff]
        %v757 = vld [vmem:[%s296 + $0x2c8] sm:$0xff]
        %v758 = vld [vmem:[%s296 + $0x2d0] sm:$0xff]
        %v759 = vld [vmem:[%s296 + $0x2d8] sm:$0xff]
        %v760 = vld [vmem:[%s296 + $0x2e0] sm:$0xff]
        %v761 = vld [vmem:[%s296 + $0x2e8] sm:$0xff]
        %v762 = vld [vmem:[%s296 + $0x2f0] sm:$0xff]
        %v763 = vld [vmem:[%s296 + $0x2f8] sm:$0xff]
        %v764 = vld [vmem:[%s296 + $0x300] sm:$0xff]
        %v765 = vld [vmem:[%s296 + $0x308] sm:$0xff]
        %v766 = vld [vmem:[%s296 + $0x310] sm:$0xff]
        %v767 = vld [vmem:[%s296 + $0x318] sm:$0xff]
        %v768 = vld [vmem:[%s296 + $0x320] sm:$0xff]
        %v769 = vld [vmem:[%s296 + $0x328] sm:$0xff]
        %v770 = vld [vmem:[%s296 + $0x330] sm:$0xff]
        %v771 = vld [vmem:[%s296 + $0x338] sm:$0xff]
        %v772 = vld [vmem:[%s296 + $0x340] sm:$0xff]
        %v773 = vld [vmem:[%s296 + $0x348] sm:$0xff]
        %v774 = vld [vmem:[%s296 + $0x350] sm:$0xff]
        %v775 = vld [vmem:[%s296 + $0x358] sm:$0xff]
        %v776 = vld [vmem:[%s296 + $0x360] sm:$0xff]
        %v777 = vld [vmem:[%s296 + $0x368] sm:$0xff]
        %v778 = vld [vmem:[%s296 + $0x370] sm:$0xff]
        %v779 = vld [vmem:[%s296 + $0x378] sm:$0xff]
        %v780 = vld [vmem:[%s296 + $0x380] sm:$0xff]
        %v781 = vld [vmem:[%s296 + $0x388] sm:$0xff]
        %v782 = vld [vmem:[%s296 + $0x390] sm:$0xff]
        %v783 = vld [vmem:[%s296 + $0x398] sm:$0xff]
        %v784 = vld [vmem:[%s296 + $0x3a0] sm:$0xff]
        %v785 = vld [vmem:[%s296 + $0x3a8] sm:$0xff]
        %v786 = vld [vmem:[%s296 + $0x3b0] sm:$0xff]
        %v787 = vld [vmem:[%s296 + $0x3b8] sm:$0xff]
        %v788 = vld [vmem:[%s296 + $0x3c0] sm:$0xff]
        %v789 = vld [vmem:[%s296 + $0x3c8] sm:$0xff]
        %v790 = vld [vmem:[%s296 + $0x3d0] sm:$0xff]
        %v791 = vld [vmem:[%s296 + $0x3d8] sm:$0xff]
        %v792 = vld [vmem:[%s296 + $0x3e0] sm:$0xff]
        %v793 = vld [vmem:[%s296 + $0x3e8] sm:$0xff]
        %v794 = vld [vmem:[%s296 + $0x3f0] sm:$0xff]
        %v795 = vld [vmem:[%s296 + $0x3f8] sm:$0xff]
        %v860 = vunpack.c.l.b16 %v604
        %v861 = vunpack.c.h.b16 %v604
        %v862 = vunpack.c.l.b16 %v605
        %v863 = vunpack.c.h.b16 %v605
        %v864 = vunpack.c.l.b16 %v606
        %v865 = vunpack.c.h.b16 %v606
        %v866 = vunpack.c.l.b16 %v607
        %v867 = vunpack.c.h.b16 %v607
        %v868 = vunpack.c.l.b16 %v608
        %v869 = vunpack.c.h.b16 %v608
        %v870 = vunpack.c.l.b16 %v609
        %v871 = vunpack.c.h.b16 %v609
        %v872 = vunpack.c.l.b16 %v610
        %v873 = vunpack.c.h.b16 %v610
        %v874 = vunpack.c.l.b16 %v611
        %v875 = vunpack.c.h.b16 %v611
        %v876 = vunpack.c.l.b16 %v612
        %v877 = vunpack.c.h.b16 %v612
        %v878 = vunpack.c.l.b16 %v613
        %v879 = vunpack.c.h.b16 %v613
        %v880 = vunpack.c.l.b16 %v614
        %v881 = vunpack.c.h.b16 %v614
        %v882 = vunpack.c.l.b16 %v615
        %v883 = vunpack.c.h.b16 %v615
        %v884 = vunpack.c.l.b16 %v616
        %v885 = vunpack.c.h.b16 %v616
        %v886 = vunpack.c.l.b16 %v617
        %v887 = vunpack.c.h.b16 %v617
        %v888 = vunpack.c.l.b16 %v618
        %v889 = vunpack.c.h.b16 %v618
        %v890 = vunpack.c.l.b16 %v619
        %v891 = vunpack.c.h.b16 %v619
        %v892 = vunpack.c.l.b16 %v620
        %v893 = vunpack.c.h.b16 %v620
        %v894 = vunpack.c.l.b16 %v621
        %v895 = vunpack.c.h.b16 %v621
        %v896 = vunpack.c.l.b16 %v622
        %v897 = vunpack.c.h.b16 %v622
        %v898 = vunpack.c.l.b16 %v623
        %v899 = vunpack.c.h.b16 %v623
        %v900 = vunpack.c.l.b16 %v624
        %v901 = vunpack.c.h.b16 %v624
        %v902 = vunpack.c.l.b16 %v625
        %v903 = vunpack.c.h.b16 %v625
        %v904 = vunpack.c.l.b16 %v626
        %v905 = vunpack.c.h.b16 %v626
        %v906 = vunpack.c.l.b16 %v627
        %v907 = vunpack.c.h.b16 %v627
        %v908 = vunpack.c.l.b16 %v628
        %v909 = vunpack.c.h.b16 %v628
        %v910 = vunpack.c.l.b16 %v629
        %v911 = vunpack.c.h.b16 %v629
        %v912 = vunpack.c.l.b16 %v630
        %v913 = vunpack.c.h.b16 %v630
        %v914 = vunpack.c.l.b16 %v631
        %v915 = vunpack.c.h.b16 %v631
        %v916 = vunpack.c.l.b16 %v632
        %v917 = vunpack.c.h.b16 %v632
        %v918 = vunpack.c.l.b16 %v633
        %v919 = vunpack.c.h.b16 %v633
        %v920 = vunpack.c.l.b16 %v634
        %v921 = vunpack.c.h.b16 %v634
        %v922 = vunpack.c.l.b16 %v635
        %v923 = vunpack.c.h.b16 %v635
        %v924 = vunpack.c.l.b16 %v636
        %v925 = vunpack.c.h.b16 %v636
        %v926 = vunpack.c.l.b16 %v637
        %v927 = vunpack.c.h.b16 %v637
        %v928 = vunpack.c.l.b16 %v638
        %v929 = vunpack.c.h.b16 %v638
        %v930 = vunpack.c.l.b16 %v639
        %v931 = vunpack.c.h.b16 %v639
        %v932 = vunpack.c.l.b16 %v640
        %v933 = vunpack.c.h.b16 %v640
        %v934 = vunpack.c.l.b16 %v641
        %v935 = vunpack.c.h.b16 %v641
        %v936 = vunpack.c.l.b16 %v642
        %v937 = vunpack.c.h.b16 %v642
        %v938 = vunpack.c.l.b16 %v643
        %v939 = vunpack.c.h.b16 %v643
        %v940 = vunpack.c.l.b16 %v644
        %v941 = vunpack.c.h.b16 %v644
        %v942 = vunpack.c.l.b16 %v645
        %v943 = vunpack.c.h.b16 %v645
        %v944 = vunpack.c.l.b16 %v646
        %v945 = vunpack.c.h.b16 %v646
        %v946 = vunpack.c.l.b16 %v647
        %v947 = vunpack.c.h.b16 %v647
        %v948 = vunpack.c.l.b16 %v648
        %v949 = vunpack.c.h.b16 %v648
        %v950 = vunpack.c.l.b16 %v649
        %v951 = vunpack.c.h.b16 %v649
        %v952 = vunpack.c.l.b16 %v650
        %v953 = vunpack.c.h.b16 %v650
        %v954 = vunpack.c.l.b16 %v651
        %v955 = vunpack.c.h.b16 %v651
        %v956 = vunpack.c.l.b16 %v652
        %v957 = vunpack.c.h.b16 %v652
        %v958 = vunpack.c.l.b16 %v653
        %v959 = vunpack.c.h.b16 %v653
        %v960 = vunpack.c.l.b16 %v654
        %v961 = vunpack.c.h.b16 %v654
        %v962 = vunpack.c.l.b16 %v655
        %v963 = vunpack.c.h.b16 %v655
        %v964 = vunpack.c.l.b16 %v656
        %v965 = vunpack.c.h.b16 %v656
        %v966 = vunpack.c.l.b16 %v657
        %v967 = vunpack.c.h.b16 %v657
        %v968 = vunpack.c.l.b16 %v658
        %v969 = vunpack.c.h.b16 %v658
        %v970 = vunpack.c.l.b16 %v659
        %v971 = vunpack.c.h.b16 %v659
        %v972 = vunpack.c.l.b16 %v660
        %v973 = vunpack.c.h.b16 %v660
        %v974 = vunpack.c.l.b16 %v661
        %v975 = vunpack.c.h.b16 %v661
        %v976 = vunpack.c.l.b16 %v662
        %v977 = vunpack.c.h.b16 %v662
        %v978 = vunpack.c.l.b16 %v663
        %v979 = vunpack.c.h.b16 %v663
        %v980 = vunpack.c.l.b16 %v664
        %v981 = vunpack.c.h.b16 %v664
        %v982 = vunpack.c.l.b16 %v665
        %v983 = vunpack.c.h.b16 %v665
        %v984 = vunpack.c.l.b16 %v666
        %v985 = vunpack.c.h.b16 %v666
        %v986 = vunpack.c.l.b16 %v667
        %v987 = vunpack.c.h.b16 %v667
        %v988 = vpack.c.b16 %v864, %v860
        %v989 = vpack.c.b16 %v865, %v861
        %v990 = vpack.c.b16 %v866, %v862
        %v991 = vpack.c.b16 %v867, %v863
        %v992 = vpack.c.b16 %v872, %v868
        %v993 = vpack.c.b16 %v873, %v869
        %v994 = vpack.c.b16 %v874, %v870
        %v995 = vpack.c.b16 %v875, %v871
        %v996 = vpack.c.b16 %v880, %v876
        %v997 = vpack.c.b16 %v881, %v877
        %v998 = vpack.c.b16 %v882, %v878
        %v999 = vpack.c.b16 %v883, %v879
        %v1000 = vpack.c.b16 %v888, %v884
        %v1001 = vpack.c.b16 %v889, %v885
        %v1002 = vpack.c.b16 %v890, %v886
        %v1003 = vpack.c.b16 %v891, %v887
        %v1004 = vpack.c.b16 %v896, %v892
        %v1005 = vpack.c.b16 %v897, %v893
        %v1006 = vpack.c.b16 %v898, %v894
        %v1007 = vpack.c.b16 %v899, %v895
        %v1008 = vpack.c.b16 %v904, %v900
        %v1009 = vpack.c.b16 %v905, %v901
        %v1010 = vpack.c.b16 %v906, %v902
        %v1011 = vpack.c.b16 %v907, %v903
        %v1012 = vpack.c.b16 %v912, %v908
        %v1013 = vpack.c.b16 %v913, %v909
        %v1014 = vpack.c.b16 %v914, %v910
        %v1015 = vpack.c.b16 %v915, %v911
        %v1016 = vpack.c.b16 %v920, %v916
        %v1017 = vpack.c.b16 %v921, %v917
        %v1018 = vpack.c.b16 %v922, %v918
        %v1019 = vpack.c.b16 %v923, %v919
        %v1020 = vpack.c.b16 %v928, %v924
        %v1021 = vpack.c.b16 %v929, %v925
        %v1022 = vpack.c.b16 %v930, %v926
        %v1023 = vpack.c.b16 %v931, %v927
        %v1024 = vpack.c.b16 %v936, %v932
        %v1025 = vpack.c.b16 %v937, %v933
        %v1026 = vpack.c.b16 %v938, %v934
        %v1027 = vpack.c.b16 %v939, %v935
        %v1028 = vpack.c.b16 %v944, %v940
        %v1029 = vpack.c.b16 %v945, %v941
        %v1030 = vpack.c.b16 %v946, %v942
        %v1031 = vpack.c.b16 %v947, %v943
        %v1032 = vpack.c.b16 %v952, %v948
        %v1033 = vpack.c.b16 %v953, %v949
        %v1034 = vpack.c.b16 %v954, %v950
        %v1035 = vpack.c.b16 %v955, %v951
        %v1036 = vpack.c.b16 %v960, %v956
        %v1037 = vpack.c.b16 %v961, %v957
        %v1038 = vpack.c.b16 %v962, %v958
        %v1039 = vpack.c.b16 %v963, %v959
        %v1040 = vpack.c.b16 %v968, %v964
        %v1041 = vpack.c.b16 %v969, %v965
        %v1042 = vpack.c.b16 %v970, %v966
        %v1043 = vpack.c.b16 %v971, %v967
        %v1044 = vpack.c.b16 %v976, %v972
        %v1045 = vpack.c.b16 %v977, %v973
        %v1046 = vpack.c.b16 %v978, %v974
        %v1047 = vpack.c.b16 %v979, %v975
        %v1048 = vpack.c.b16 %v984, %v980
        %v1049 = vpack.c.b16 %v985, %v981
        %v1050 = vpack.c.b16 %v986, %v982
        %v1051 = vpack.c.b16 %v987, %v983
        %v1244 = vunpack.c.l.b16 %v668
        %v1245 = vunpack.c.h.b16 %v668
        %v1246 = vunpack.c.l.b16 %v669
        %v1247 = vunpack.c.h.b16 %v669
        %v1248 = vunpack.c.l.b16 %v670
        %v1249 = vunpack.c.h.b16 %v670
        %v1250 = vunpack.c.l.b16 %v671
        %v1251 = vunpack.c.h.b16 %v671
        %v1252 = vunpack.c.l.b16 %v672
        %v1253 = vunpack.c.h.b16 %v672
        %v1254 = vunpack.c.l.b16 %v673
        %v1255 = vunpack.c.h.b16 %v673
        %v1256 = vunpack.c.l.b16 %v674
        %v1257 = vunpack.c.h.b16 %v674
        %v1258 = vunpack.c.l.b16 %v675
        %v1259 = vunpack.c.h.b16 %v675
        %v1260 = vunpack.c.l.b16 %v676
        %v1261 = vunpack.c.h.b16 %v676
        %v1262 = vunpack.c.l.b16 %v677
        %v1263 = vunpack.c.h.b16 %v677
        %v1264 = vunpack.c.l.b16 %v678
        %v1265 = vunpack.c.h.b16 %v678
        %v1266 = vunpack.c.l.b16 %v679
        %v1267 = vunpack.c.h.b16 %v679
        %v1268 = vunpack.c.l.b16 %v680
        %v1269 = vunpack.c.h.b16 %v680
        %v1270 = vunpack.c.l.b16 %v681
        %v1271 = vunpack.c.h.b16 %v681
        %v1272 = vunpack.c.l.b16 %v682
        %v1273 = vunpack.c.h.b16 %v682
        %v1274 = vunpack.c.l.b16 %v683
        %v1275 = vunpack.c.h.b16 %v683
        %v1276 = vunpack.c.l.b16 %v684
        %v1277 = vunpack.c.h.b16 %v684
        %v1278 = vunpack.c.l.b16 %v685
        %v1279 = vunpack.c.h.b16 %v685
        %v1280 = vunpack.c.l.b16 %v686
        %v1281 = vunpack.c.h.b16 %v686
        %v1282 = vunpack.c.l.b16 %v687
        %v1283 = vunpack.c.h.b16 %v687
        %v1284 = vunpack.c.l.b16 %v688
        %v1285 = vunpack.c.h.b16 %v688
        %v1286 = vunpack.c.l.b16 %v689
        %v1287 = vunpack.c.h.b16 %v689
        %v1288 = vunpack.c.l.b16 %v690
        %v1289 = vunpack.c.h.b16 %v690
        %v1290 = vunpack.c.l.b16 %v691
        %v1291 = vunpack.c.h.b16 %v691
        %v1292 = vunpack.c.l.b16 %v692
        %v1293 = vunpack.c.h.b16 %v692
        %v1294 = vunpack.c.l.b16 %v693
        %v1295 = vunpack.c.h.b16 %v693
        %v1296 = vunpack.c.l.b16 %v694
        %v1297 = vunpack.c.h.b16 %v694
        %v1298 = vunpack.c.l.b16 %v695
        %v1299 = vunpack.c.h.b16 %v695
        %v1300 = vunpack.c.l.b16 %v696
        %v1301 = vunpack.c.h.b16 %v696
        %v1302 = vunpack.c.l.b16 %v697
        %v1303 = vunpack.c.h.b16 %v697
        %v1304 = vunpack.c.l.b16 %v698
        %v1305 = vunpack.c.h.b16 %v698
        %v1306 = vunpack.c.l.b16 %v699
        %v1307 = vunpack.c.h.b16 %v699
        %v1308 = vunpack.c.l.b16 %v700
        %v1309 = vunpack.c.h.b16 %v700
        %v1310 = vunpack.c.l.b16 %v701
        %v1311 = vunpack.c.h.b16 %v701
        %v1312 = vunpack.c.l.b16 %v702
        %v1313 = vunpack.c.h.b16 %v702
        %v1314 = vunpack.c.l.b16 %v703
        %v1315 = vunpack.c.h.b16 %v703
        %v1316 = vunpack.c.l.b16 %v704
        %v1317 = vunpack.c.h.b16 %v704
        %v1318 = vunpack.c.l.b16 %v705
        %v1319 = vunpack.c.h.b16 %v705
        %v1320 = vunpack.c.l.b16 %v706
        %v1321 = vunpack.c.h.b16 %v706
        %v1322 = vunpack.c.l.b16 %v707
        %v1323 = vunpack.c.h.b16 %v707
        %v1324 = vunpack.c.l.b16 %v708
        %v1325 = vunpack.c.h.b16 %v708
        %v1326 = vunpack.c.l.b16 %v709
        %v1327 = vunpack.c.h.b16 %v709
        %v1328 = vunpack.c.l.b16 %v710
        %v1329 = vunpack.c.h.b16 %v710
        %v1330 = vunpack.c.l.b16 %v711
        %v1331 = vunpack.c.h.b16 %v711
        %v1332 = vunpack.c.l.b16 %v712
        %v1333 = vunpack.c.h.b16 %v712
        %v1334 = vunpack.c.l.b16 %v713
        %v1335 = vunpack.c.h.b16 %v713
        %v1336 = vunpack.c.l.b16 %v714
        %v1337 = vunpack.c.h.b16 %v714
        %v1338 = vunpack.c.l.b16 %v715
        %v1339 = vunpack.c.h.b16 %v715
        %v1340 = vunpack.c.l.b16 %v716
        %v1341 = vunpack.c.h.b16 %v716
        %v1342 = vunpack.c.l.b16 %v717
        %v1343 = vunpack.c.h.b16 %v717
        %v1344 = vunpack.c.l.b16 %v718
        %v1345 = vunpack.c.h.b16 %v718
        %v1346 = vunpack.c.l.b16 %v719
        %v1347 = vunpack.c.h.b16 %v719
        %v1348 = vunpack.c.l.b16 %v720
        %v1349 = vunpack.c.h.b16 %v720
        %v1350 = vunpack.c.l.b16 %v721
        %v1351 = vunpack.c.h.b16 %v721
        %v1352 = vunpack.c.l.b16 %v722
        %v1353 = vunpack.c.h.b16 %v722
        %v1354 = vunpack.c.l.b16 %v723
        %v1355 = vunpack.c.h.b16 %v723
        %v1356 = vunpack.c.l.b16 %v724
        %v1357 = vunpack.c.h.b16 %v724
        %v1358 = vunpack.c.l.b16 %v725
        %v1359 = vunpack.c.h.b16 %v725
        %v1360 = vunpack.c.l.b16 %v726
        %v1361 = vunpack.c.h.b16 %v726
        %v1362 = vunpack.c.l.b16 %v727
        %v1363 = vunpack.c.h.b16 %v727
        %v1364 = vunpack.c.l.b16 %v728
        %v1365 = vunpack.c.h.b16 %v728
        %v1366 = vunpack.c.l.b16 %v729
        %v1367 = vunpack.c.h.b16 %v729
        %v1368 = vunpack.c.l.b16 %v730
        %v1369 = vunpack.c.h.b16 %v730
        %v1370 = vunpack.c.l.b16 %v731
        %v1371 = vunpack.c.h.b16 %v731
        %v1372 = vunpack.c.l.b16 %v732
        %v1373 = vunpack.c.h.b16 %v732
        %v1374 = vunpack.c.l.b16 %v733
        %v1375 = vunpack.c.h.b16 %v733
        %v1376 = vunpack.c.l.b16 %v734
        %v1377 = vunpack.c.h.b16 %v734
        %v1378 = vunpack.c.l.b16 %v735
        %v1379 = vunpack.c.h.b16 %v735
        %v1380 = vunpack.c.l.b16 %v736
        %v1381 = vunpack.c.h.b16 %v736
        %v1382 = vunpack.c.l.b16 %v737
        %v1383 = vunpack.c.h.b16 %v737
        %v1384 = vunpack.c.l.b16 %v738
        %v1385 = vunpack.c.h.b16 %v738
        %v1386 = vunpack.c.l.b16 %v739
        %v1387 = vunpack.c.h.b16 %v739
        %v1388 = vunpack.c.l.b16 %v740
        %v1389 = vunpack.c.h.b16 %v740
        %v1390 = vunpack.c.l.b16 %v741
        %v1391 = vunpack.c.h.b16 %v741
        %v1392 = vunpack.c.l.b16 %v742
        %v1393 = vunpack.c.h.b16 %v742
        %v1394 = vunpack.c.l.b16 %v743
        %v1395 = vunpack.c.h.b16 %v743
        %v1396 = vunpack.c.l.b16 %v744
        %v1397 = vunpack.c.h.b16 %v744
        %v1398 = vunpack.c.l.b16 %v745
        %v1399 = vunpack.c.h.b16 %v745
        %v1400 = vunpack.c.l.b16 %v746
        %v1401 = vunpack.c.h.b16 %v746
        %v1402 = vunpack.c.l.b16 %v747
        %v1403 = vunpack.c.h.b16 %v747
        %v1404 = vunpack.c.l.b16 %v748
        %v1405 = vunpack.c.h.b16 %v748
        %v1406 = vunpack.c.l.b16 %v749
        %v1407 = vunpack.c.h.b16 %v749
        %v1408 = vunpack.c.l.b16 %v750
        %v1409 = vunpack.c.h.b16 %v750
        %v1410 = vunpack.c.l.b16 %v751
        %v1411 = vunpack.c.h.b16 %v751
        %v1412 = vunpack.c.l.b16 %v752
        %v1413 = vunpack.c.h.b16 %v752
        %v1414 = vunpack.c.l.b16 %v753
        %v1415 = vunpack.c.h.b16 %v753
        %v1416 = vunpack.c.l.b16 %v754
        %v1417 = vunpack.c.h.b16 %v754
        %v1418 = vunpack.c.l.b16 %v755
        %v1419 = vunpack.c.h.b16 %v755
        %v1420 = vunpack.c.l.b16 %v756
        %v1421 = vunpack.c.h.b16 %v756
        %v1422 = vunpack.c.l.b16 %v757
        %v1423 = vunpack.c.h.b16 %v757
        %v1424 = vunpack.c.l.b16 %v758
        %v1425 = vunpack.c.h.b16 %v758
        %v1426 = vunpack.c.l.b16 %v759
        %v1427 = vunpack.c.h.b16 %v759
        %v1428 = vunpack.c.l.b16 %v760
        %v1429 = vunpack.c.h.b16 %v760
        %v1430 = vunpack.c.l.b16 %v761
        %v1431 = vunpack.c.h.b16 %v761
        %v1432 = vunpack.c.l.b16 %v762
        %v1433 = vunpack.c.h.b16 %v762
        %v1434 = vunpack.c.l.b16 %v763
        %v1435 = vunpack.c.h.b16 %v763
        %v1436 = vunpack.c.l.b16 %v764
        %v1437 = vunpack.c.h.b16 %v764
        %v1438 = vunpack.c.l.b16 %v765
        %v1439 = vunpack.c.h.b16 %v765
        %v1440 = vunpack.c.l.b16 %v766
        %v1441 = vunpack.c.h.b16 %v766
        %v1442 = vunpack.c.l.b16 %v767
        %v1443 = vunpack.c.h.b16 %v767
        %v1444 = vunpack.c.l.b16 %v768
        %v1445 = vunpack.c.h.b16 %v768
        %v1446 = vunpack.c.l.b16 %v769
        %v1447 = vunpack.c.h.b16 %v769
        %v1448 = vunpack.c.l.b16 %v770
        %v1449 = vunpack.c.h.b16 %v770
        %v1450 = vunpack.c.l.b16 %v771
        %v1451 = vunpack.c.h.b16 %v771
        %v1452 = vunpack.c.l.b16 %v772
        %v1453 = vunpack.c.h.b16 %v772
        %v1454 = vunpack.c.l.b16 %v773
        %v1455 = vunpack.c.h.b16 %v773
        %v1456 = vunpack.c.l.b16 %v774
        %v1457 = vunpack.c.h.b16 %v774
        %v1458 = vunpack.c.l.b16 %v775
        %v1459 = vunpack.c.h.b16 %v775
        %v1460 = vunpack.c.l.b16 %v776
        %v1461 = vunpack.c.h.b16 %v776
        %v1462 = vunpack.c.l.b16 %v777
        %v1463 = vunpack.c.h.b16 %v777
        %v1464 = vunpack.c.l.b16 %v778
        %v1465 = vunpack.c.h.b16 %v778
        %v1466 = vunpack.c.l.b16 %v779
        %v1467 = vunpack.c.h.b16 %v779
        %v1468 = vunpack.c.l.b16 %v780
        %v1469 = vunpack.c.h.b16 %v780
        %v1470 = vunpack.c.l.b16 %v781
        %v1471 = vunpack.c.h.b16 %v781
        %v1472 = vunpack.c.l.b16 %v782
        %v1473 = vunpack.c.h.b16 %v782
        %v1474 = vunpack.c.l.b16 %v783
        %v1475 = vunpack.c.h.b16 %v783
        %v1476 = vunpack.c.l.b16 %v784
        %v1477 = vunpack.c.h.b16 %v784
        %v1478 = vunpack.c.l.b16 %v785
        %v1479 = vunpack.c.h.b16 %v785
        %v1480 = vunpack.c.l.b16 %v786
        %v1481 = vunpack.c.h.b16 %v786
        %v1482 = vunpack.c.l.b16 %v787
        %v1483 = vunpack.c.h.b16 %v787
        %v1484 = vunpack.c.l.b16 %v788
        %v1485 = vunpack.c.h.b16 %v788
        %v1486 = vunpack.c.l.b16 %v789
        %v1487 = vunpack.c.h.b16 %v789
        %v1488 = vunpack.c.l.b16 %v790
        %v1489 = vunpack.c.h.b16 %v790
        %v1490 = vunpack.c.l.b16 %v791
        %v1491 = vunpack.c.h.b16 %v791
        %v1492 = vunpack.c.l.b16 %v792
        %v1493 = vunpack.c.h.b16 %v792
        %v1494 = vunpack.c.l.b16 %v793
        %v1495 = vunpack.c.h.b16 %v793
        %v1496 = vunpack.c.l.b16 %v794
        %v1497 = vunpack.c.h.b16 %v794
        %v1498 = vunpack.c.l.b16 %v795
        %v1499 = vunpack.c.h.b16 %v795
        %v1500 = vpack.c.b16 %v1248, %v1244
        %v1501 = vpack.c.b16 %v1249, %v1245
        %v1502 = vpack.c.b16 %v1250, %v1246
        %v1503 = vpack.c.b16 %v1251, %v1247
        %v1504 = vpack.c.b16 %v1256, %v1252
        %v1505 = vpack.c.b16 %v1257, %v1253
        %v1506 = vpack.c.b16 %v1258, %v1254
        %v1507 = vpack.c.b16 %v1259, %v1255
        %v1508 = vpack.c.b16 %v1264, %v1260
        %v1509 = vpack.c.b16 %v1265, %v1261
        %v1510 = vpack.c.b16 %v1266, %v1262
        %v1511 = vpack.c.b16 %v1267, %v1263
        %v1512 = vpack.c.b16 %v1272, %v1268
        %v1513 = vpack.c.b16 %v1273, %v1269
        %v1514 = vpack.c.b16 %v1274, %v1270
        %v1515 = vpack.c.b16 %v1275, %v1271
        %v1516 = vpack.c.b16 %v1280, %v1276
        %v1517 = vpack.c.b16 %v1281, %v1277
        %v1518 = vpack.c.b16 %v1282, %v1278
        %v1519 = vpack.c.b16 %v1283, %v1279
        %v1520 = vpack.c.b16 %v1288, %v1284
        %v1521 = vpack.c.b16 %v1289, %v1285
        %v1522 = vpack.c.b16 %v1290, %v1286
        %v1523 = vpack.c.b16 %v1291, %v1287
        %v1524 = vpack.c.b16 %v1296, %v1292
        %v1525 = vpack.c.b16 %v1297, %v1293
        %v1526 = vpack.c.b16 %v1298, %v1294
        %v1527 = vpack.c.b16 %v1299, %v1295
        %v1528 = vpack.c.b16 %v1304, %v1300
        %v1529 = vpack.c.b16 %v1305, %v1301
        %v1530 = vpack.c.b16 %v1306, %v1302
        %v1531 = vpack.c.b16 %v1307, %v1303
        %v1532 = vpack.c.b16 %v1312, %v1308
        %v1533 = vpack.c.b16 %v1313, %v1309
        %v1534 = vpack.c.b16 %v1314, %v1310
        %v1535 = vpack.c.b16 %v1315, %v1311
        %v1536 = vpack.c.b16 %v1320, %v1316
        %v1537 = vpack.c.b16 %v1321, %v1317
        %v1538 = vpack.c.b16 %v1322, %v1318
        %v1539 = vpack.c.b16 %v1323, %v1319
        %v1540 = vpack.c.b16 %v1328, %v1324
        %v1541 = vpack.c.b16 %v1329, %v1325
        %v1542 = vpack.c.b16 %v1330, %v1326
        %v1543 = vpack.c.b16 %v1331, %v1327
        %v1544 = vpack.c.b16 %v1336, %v1332
        %v1545 = vpack.c.b16 %v1337, %v1333
        %v1546 = vpack.c.b16 %v1338, %v1334
        %v1547 = vpack.c.b16 %v1339, %v1335
        %v1548 = vpack.c.b16 %v1344, %v1340
        %v1549 = vpack.c.b16 %v1345, %v1341
        %v1550 = vpack.c.b16 %v1346, %v1342
        %v1551 = vpack.c.b16 %v1347, %v1343
        %v1552 = vpack.c.b16 %v1352, %v1348
        %v1553 = vpack.c.b16 %v1353, %v1349
        %v1554 = vpack.c.b16 %v1354, %v1350
        %v1555 = vpack.c.b16 %v1355, %v1351
        %v1556 = vpack.c.b16 %v1360, %v1356
        %v1557 = vpack.c.b16 %v1361, %v1357
        %v1558 = vpack.c.b16 %v1362, %v1358
        %v1559 = vpack.c.b16 %v1363, %v1359
        %v1560 = vpack.c.b16 %v1368, %v1364
        %v1561 = vpack.c.b16 %v1369, %v1365
        %v1562 = vpack.c.b16 %v1370, %v1366
        %v1563 = vpack.c.b16 %v1371, %v1367
        %v1564 = vpack.c.b16 %v1376, %v1372
        %v1565 = vpack.c.b16 %v1377, %v1373
        %v1566 = vpack.c.b16 %v1378, %v1374
        %v1567 = vpack.c.b16 %v1379, %v1375
        %v1568 = vpack.c.b16 %v1384, %v1380
        %v1569 = vpack.c.b16 %v1385, %v1381
        %v1570 = vpack.c.b16 %v1386, %v1382
        %v1571 = vpack.c.b16 %v1387, %v1383
        %v1572 = vpack.c.b16 %v1392, %v1388
        %v1573 = vpack.c.b16 %v1393, %v1389
        %v1574 = vpack.c.b16 %v1394, %v1390
        %v1575 = vpack.c.b16 %v1395, %v1391
        %v1576 = vpack.c.b16 %v1400, %v1396
        %v1577 = vpack.c.b16 %v1401, %v1397
        %v1578 = vpack.c.b16 %v1402, %v1398
        %v1579 = vpack.c.b16 %v1403, %v1399
        %v1580 = vpack.c.b16 %v1408, %v1404
        %v1581 = vpack.c.b16 %v1409, %v1405
        %v1582 = vpack.c.b16 %v1410, %v1406
        %v1583 = vpack.c.b16 %v1411, %v1407
        %v1584 = vpack.c.b16 %v1416, %v1412
        %v1585 = vpack.c.b16 %v1417, %v1413
        %v1586 = vpack.c.b16 %v1418, %v1414
        %v1587 = vpack.c.b16 %v1419, %v1415
        %v1588 = vpack.c.b16 %v1424, %v1420
        %v1589 = vpack.c.b16 %v1425, %v1421
        %v1590 = vpack.c.b16 %v1426, %v1422
        %v1591 = vpack.c.b16 %v1427, %v1423
        %v1592 = vpack.c.b16 %v1432, %v1428
        %v1593 = vpack.c.b16 %v1433, %v1429
        %v1594 = vpack.c.b16 %v1434, %v1430
        %v1595 = vpack.c.b16 %v1435, %v1431
        %v1596 = vpack.c.b16 %v1440, %v1436
        %v1597 = vpack.c.b16 %v1441, %v1437
        %v1598 = vpack.c.b16 %v1442, %v1438
        %v1599 = vpack.c.b16 %v1443, %v1439
        %v1600 = vpack.c.b16 %v1448, %v1444
        %v1601 = vpack.c.b16 %v1449, %v1445
        %v1602 = vpack.c.b16 %v1450, %v1446
        %v1603 = vpack.c.b16 %v1451, %v1447
        %v1604 = vpack.c.b16 %v1456, %v1452
        %v1605 = vpack.c.b16 %v1457, %v1453
        %v1606 = vpack.c.b16 %v1458, %v1454
        %v1607 = vpack.c.b16 %v1459, %v1455
        %v1608 = vpack.c.b16 %v1464, %v1460
        %v1609 = vpack.c.b16 %v1465, %v1461
        %v1610 = vpack.c.b16 %v1466, %v1462
        %v1611 = vpack.c.b16 %v1467, %v1463
        %v1612 = vpack.c.b16 %v1472, %v1468
        %v1613 = vpack.c.b16 %v1473, %v1469
        %v1614 = vpack.c.b16 %v1474, %v1470
        %v1615 = vpack.c.b16 %v1475, %v1471
        %v1616 = vpack.c.b16 %v1480, %v1476
        %v1617 = vpack.c.b16 %v1481, %v1477
        %v1618 = vpack.c.b16 %v1482, %v1478
        %v1619 = vpack.c.b16 %v1483, %v1479
        %v1620 = vpack.c.b16 %v1488, %v1484
        %v1621 = vpack.c.b16 %v1489, %v1485
        %v1622 = vpack.c.b16 %v1490, %v1486
        %v1623 = vpack.c.b16 %v1491, %v1487
        %v1624 = vpack.c.b16 %v1496, %v1492
        %v1625 = vpack.c.b16 %v1497, %v1493
        %v1626 = vpack.c.b16 %v1498, %v1494
        %v1627 = vpack.c.b16 %v1499, %v1495
        %1756 = vmatprep.subr.bf16.mxu0 %v1529
        %1757 = vmatpush1.bf16.msra.mxu0 %v1528
        %1758 = vmatprep.subr.bf16.mxu0 %v1525
        %1759 = vmatpush1.bf16.msra.mxu0 %v1524
        %1760 = vmatprep.subr.bf16.mxu0 %v1521
        %1761 = vmatpush1.bf16.msra.mxu0 %v1520
        %1762 = vmatprep.subr.bf16.mxu0 %v1517
        %1763 = vmatpush1.bf16.msra.mxu0 %v1516
        %1764 = vmatprep.subr.bf16.mxu0 %v1513
        %1765 = vmatpush1.bf16.msra.mxu0 %v1512
        %1766 = vmatprep.subr.bf16.mxu0 %v1509
        %1767 = vmatpush1.bf16.msra.mxu0 %v1508
        %1768 = vmatprep.subr.bf16.mxu0 %v1505
        %1769 = vmatpush1.bf16.msra.mxu0 %v1504
        %1770 = vmatprep.subr.bf16.mxu0 %v1501
        %1771 = vmatpush1.bf16.msra.mxu0 %v1500
        %1772 = vmatprep.subr.bf16.mxu0 %v1561
        %1773 = vmatpush2.bf16.msra.mxu0 %v1560
        %1774 = vmatprep.subr.bf16.mxu0 %v1557
        %1775 = vmatpush2.bf16.msra.mxu0 %v1556
        %1776 = vmatprep.subr.bf16.mxu0 %v1553
        %1777 = vmatpush2.bf16.msra.mxu0 %v1552
        %1778 = vmatprep.subr.bf16.mxu0 %v1549
        %1779 = vmatpush2.bf16.msra.mxu0 %v1548
        %1780 = vmatprep.subr.bf16.mxu0 %v1545
        %1781 = vmatpush2.bf16.msra.mxu0 %v1544
        %1782 = vmatprep.subr.bf16.mxu0 %v1541
        %1783 = vmatpush2.bf16.msra.mxu0 %v1540
        %1784 = vmatprep.subr.bf16.mxu0 %v1537
        %1785 = vmatpush2.bf16.msra.mxu0 %v1536
        %1786 = vmatprep.subr.bf16.mxu0 %v1533
        %1787 = vmatpush2.bf16.msra.mxu0 %v1532
        %1788 = vmatprep.mubr.bf16.mxu0 %v989
        %1789 = vmatmul.mubr.bf16.gmra.mxu0 %v988
        %v1790 = vpop.f32.mrf.mxu0
        %v1791 = vadd.f32 0.0, %v1790
        %v1792 = vpop.f32.mrf.mxu0
        %v1793 = vadd.f32 0.0, %v1792
        %v1794 = vpop.f32.mrf.mxu0
        %v1795 = vadd.f32 0.0, %v1794
        %v1796 = vpop.f32.mrf.mxu0
        %v1797 = vadd.f32 0.0, %v1796
        %1798 = vmatprep.mubr.bf16.mxu0 %v993
        %1799 = vmatmul.mubr.bf16.gmra.mxu0 %v992
        %v1800 = vpop.f32.mrf.mxu0
        %v1801 = vadd.f32 0.0, %v1800
        %v1802 = vpop.f32.mrf.mxu0
        %v1803 = vadd.f32 0.0, %v1802
        %v1804 = vpop.f32.mrf.mxu0
        %v1805 = vadd.f32 0.0, %v1804
        %v1806 = vpop.f32.mrf.mxu0
        %v1807 = vadd.f32 0.0, %v1806
        %1808 = vmatprep.mubr.bf16.mxu0 %v997
        %1809 = vmatmul.mubr.bf16.gmra.mxu0 %v996
        %v1810 = vpop.f32.mrf.mxu0
        %v1811 = vadd.f32 0.0, %v1810
        %v1812 = vpop.f32.mrf.mxu0
        %v1813 = vadd.f32 0.0, %v1812
        %v1814 = vpop.f32.mrf.mxu0
        %v1815 = vadd.f32 0.0, %v1814
        %v1816 = vpop.f32.mrf.mxu0
        %v1817 = vadd.f32 0.0, %v1816
        %1818 = vmatprep.mubr.bf16.mxu0 %v1001
        %1819 = vmatmul.mubr.bf16.gmra.mxu0 %v1000
        %v1820 = vpop.f32.mrf.mxu0
        %v1821 = vadd.f32 0.0, %v1820
        %v1822 = vpop.f32.mrf.mxu0
        %v1823 = vadd.f32 0.0, %v1822
        %v1824 = vpop.f32.mrf.mxu0
        %v1825 = vadd.f32 0.0, %v1824
        %v1826 = vpop.f32.mrf.mxu0
        %v1827 = vadd.f32 0.0, %v1826
        %1828 = vmatprep.mubr.bf16.mxu0 %v1005
        %1829 = vmatmul.mubr.bf16.gmra.mxu0 %v1004
        %v1830 = vpop.f32.mrf.mxu0
        %v1831 = vadd.f32 0.0, %v1830
        %v1832 = vpop.f32.mrf.mxu0
        %v1833 = vadd.f32 0.0, %v1832
        %v1834 = vpop.f32.mrf.mxu0
        %v1835 = vadd.f32 0.0, %v1834
        %v1836 = vpop.f32.mrf.mxu0
        %v1837 = vadd.f32 0.0, %v1836
        %1838 = vmatprep.mubr.bf16.mxu0 %v1009
        %1839 = vmatmul.mubr.bf16.gmra.mxu0 %v1008
        %v1840 = vpop.f32.mrf.mxu0
        %v1841 = vadd.f32 0.0, %v1840
        %v1842 = vpop.f32.mrf.mxu0
        %v1843 = vadd.f32 0.0, %v1842
        %v1844 = vpop.f32.mrf.mxu0
        %v1845 = vadd.f32 0.0, %v1844
        %v1846 = vpop.f32.mrf.mxu0
        %v1847 = vadd.f32 0.0, %v1846
        %1848 = vmatprep.mubr.bf16.mxu0 %v1013
        %1849 = vmatmul.mubr.bf16.gmra.mxu0 %v1012
        %v1850 = vpop.f32.mrf.mxu0
        %v1851 = vadd.f32 0.0, %v1850
        %v1852 = vpop.f32.mrf.mxu0
        %v1853 = vadd.f32 0.0, %v1852
        %v1854 = vpop.f32.mrf.mxu0
        %v1855 = vadd.f32 0.0, %v1854
        %v1856 = vpop.f32.mrf.mxu0
        %v1857 = vadd.f32 0.0, %v1856
        %1858 = vmatprep.mubr.bf16.mxu0 %v1017
        %1859 = vmatmul.mubr.bf16.gmra.mxu0 %v1016
        %v1860 = vpop.f32.mrf.mxu0
        %v1861 = vadd.f32 0.0, %v1860
        %v1862 = vpop.f32.mrf.mxu0
        %v1863 = vadd.f32 0.0, %v1862
        %v1864 = vpop.f32.mrf.mxu0
        %v1865 = vadd.f32 0.0, %v1864
        %v1866 = vpop.f32.mrf.mxu0
        %v1867 = vadd.f32 0.0, %v1866
        %1868 = vmatprep.mubr.bf16.mxu0 %v1021
        %1869 = vmatmul.mubr.bf16.gmra.mxu0 %v1020
        %v1870 = vpop.f32.mrf.mxu0
        %v1871 = vadd.f32 0.0, %v1870
        %v1872 = vpop.f32.mrf.mxu0
        %v1873 = vadd.f32 0.0, %v1872
        %v1874 = vpop.f32.mrf.mxu0
        %v1875 = vadd.f32 0.0, %v1874
        %v1876 = vpop.f32.mrf.mxu0
        %v1877 = vadd.f32 0.0, %v1876
        %1878 = vmatprep.mubr.bf16.mxu0 %v1025
        %1879 = vmatmul.mubr.bf16.gmra.mxu0 %v1024
        %v1880 = vpop.f32.mrf.mxu0
        %v1881 = vadd.f32 0.0, %v1880
        %v1882 = vpop.f32.mrf.mxu0
        %v1883 = vadd.f32 0.0, %v1882
        %v1884 = vpop.f32.mrf.mxu0
        %v1885 = vadd.f32 0.0, %v1884
        %v1886 = vpop.f32.mrf.mxu0
        %v1887 = vadd.f32 0.0, %v1886
        %1888 = vmatprep.mubr.bf16.mxu0 %v1029
        %1889 = vmatmul.mubr.bf16.gmra.mxu0 %v1028
        %v1890 = vpop.f32.mrf.mxu0
        %v1891 = vadd.f32 0.0, %v1890
        %v1892 = vpop.f32.mrf.mxu0
        %v1893 = vadd.f32 0.0, %v1892
        %v1894 = vpop.f32.mrf.mxu0
        %v1895 = vadd.f32 0.0, %v1894
        %v1896 = vpop.f32.mrf.mxu0
        %v1897 = vadd.f32 0.0, %v1896
        %1898 = vmatprep.mubr.bf16.mxu0 %v1033
        %1899 = vmatmul.mubr.bf16.gmra.mxu0 %v1032
        %v1900 = vpop.f32.mrf.mxu0
        %v1901 = vadd.f32 0.0, %v1900
        %v1902 = vpop.f32.mrf.mxu0
        %v1903 = vadd.f32 0.0, %v1902
        %v1904 = vpop.f32.mrf.mxu0
        %v1905 = vadd.f32 0.0, %v1904
        %v1906 = vpop.f32.mrf.mxu0
        %v1907 = vadd.f32 0.0, %v1906
        %1908 = vmatprep.mubr.bf16.mxu0 %v1037
        %1909 = vmatmul.mubr.bf16.gmra.mxu0 %v1036
        %v1910 = vpop.f32.mrf.mxu0
        %v1911 = vadd.f32 0.0, %v1910
        %v1912 = vpop.f32.mrf.mxu0
        %v1913 = vadd.f32 0.0, %v1912
        %v1914 = vpop.f32.mrf.mxu0
        %v1915 = vadd.f32 0.0, %v1914
        %v1916 = vpop.f32.mrf.mxu0
        %v1917 = vadd.f32 0.0, %v1916
        %1918 = vmatprep.mubr.bf16.mxu0 %v1041
        %1919 = vmatmul.mubr.bf16.gmra.mxu0 %v1040
        %v1920 = vpop.f32.mrf.mxu0
        %v1921 = vadd.f32 0.0, %v1920
        %v1922 = vpop.f32.mrf.mxu0
        %v1923 = vadd.f32 0.0, %v1922
        %v1924 = vpop.f32.mrf.mxu0
        %v1925 = vadd.f32 0.0, %v1924
        %v1926 = vpop.f32.mrf.mxu0
        %v1927 = vadd.f32 0.0, %v1926
        %1928 = vmatprep.mubr.bf16.mxu0 %v1045
        %1929 = vmatmul.mubr.bf16.gmra.mxu0 %v1044
        %v1930 = vpop.f32.mrf.mxu0
        %v1931 = vadd.f32 0.0, %v1930
        %v1932 = vpop.f32.mrf.mxu0
        %v1933 = vadd.f32 0.0, %v1932
        %v1934 = vpop.f32.mrf.mxu0
        %v1935 = vadd.f32 0.0, %v1934
        %v1936 = vpop.f32.mrf.mxu0
        %v1937 = vadd.f32 0.0, %v1936
        %1938 = vmatprep.mubr.bf16.mxu0 %v1049
        %1939 = vmatmul.mubr.bf16.gmra.mxu0 %v1048
        %v1940 = vpop.f32.mrf.mxu0
        %v1941 = vadd.f32 0.0, %v1940
        %v1942 = vpop.f32.mrf.mxu0
        %v1943 = vadd.f32 0.0, %v1942
        %v1944 = vpop.f32.mrf.mxu0
        %v1945 = vadd.f32 0.0, %v1944
        %v1946 = vpop.f32.mrf.mxu0
        %v1947 = vadd.f32 0.0, %v1946
        %1948 = vdwg.mxu0
        %1949 = vmatprep.subr.bf16.mxu0 %v1593
        %1950 = vmatpush1.bf16.msra.mxu0 %v1592
        %1951 = vmatprep.subr.bf16.mxu0 %v1589
        %1952 = vmatpush1.bf16.msra.mxu0 %v1588
        %1953 = vmatprep.subr.bf16.mxu0 %v1585
        %1954 = vmatpush1.bf16.msra.mxu0 %v1584
        %1955 = vmatprep.subr.bf16.mxu0 %v1581
        %1956 = vmatpush1.bf16.msra.mxu0 %v1580
        %1957 = vmatprep.subr.bf16.mxu0 %v1577
        %1958 = vmatpush1.bf16.msra.mxu0 %v1576
        %1959 = vmatprep.subr.bf16.mxu0 %v1573
        %1960 = vmatpush1.bf16.msra.mxu0 %v1572
        %1961 = vmatprep.subr.bf16.mxu0 %v1569
        %1962 = vmatpush1.bf16.msra.mxu0 %v1568
        %1963 = vmatprep.subr.bf16.mxu0 %v1565
        %1964 = vmatpush1.bf16.msra.mxu0 %v1564
        %1965 = vmatprep.subr.bf16.mxu0 %v1625
        %1966 = vmatpush2.bf16.msra.mxu0 %v1624
        %1967 = vmatprep.subr.bf16.mxu0 %v1621
        %1968 = vmatpush2.bf16.msra.mxu0 %v1620
        %1969 = vmatprep.subr.bf16.mxu0 %v1617
        %1970 = vmatpush2.bf16.msra.mxu0 %v1616
        %1971 = vmatprep.subr.bf16.mxu0 %v1613
        %1972 = vmatpush2.bf16.msra.mxu0 %v1612
        %1973 = vmatprep.subr.bf16.mxu0 %v1609
        %1974 = vmatpush2.bf16.msra.mxu0 %v1608
        %1975 = vmatprep.subr.bf16.mxu0 %v1605
        %1976 = vmatpush2.bf16.msra.mxu0 %v1604
        %1977 = vmatprep.subr.bf16.mxu0 %v1601
        %1978 = vmatpush2.bf16.msra.mxu0 %v1600
        %1979 = vmatprep.subr.bf16.mxu0 %v1597
        %1980 = vmatpush2.bf16.msra.mxu0 %v1596
        %1981 = vmatprep.mubr.bf16.mxu0 %v991
        %1982 = vmatmul.mubr.bf16.gmra.mxu0 %v990
        %v1983 = vpop.f32.mrf.mxu0
        %v1984 = vadd.f32 %v1791, %v1983
        %v1985 = vpop.f32.mrf.mxu0
        %v1986 = vadd.f32 %v1793, %v1985
        %v1987 = vpop.f32.mrf.mxu0
        %v1988 = vadd.f32 %v1795, %v1987
        %v1989 = vpop.f32.mrf.mxu0
        %v1990 = vadd.f32 %v1797, %v1989
        %1991 = vmatprep.mubr.bf16.mxu0 %v995
        %1992 = vmatmul.mubr.bf16.gmra.mxu0 %v994
        %v1993 = vpop.f32.mrf.mxu0
        %v1994 = vadd.f32 %v1801, %v1993
        %v1995 = vpop.f32.mrf.mxu0
        %v1996 = vadd.f32 %v1803, %v1995
        %v1997 = vpop.f32.mrf.mxu0
        %v1998 = vadd.f32 %v1805, %v1997
        %v1999 = vpop.f32.mrf.mxu0
        %v2000 = vadd.f32 %v1807, %v1999
        %2001 = vmatprep.mubr.bf16.mxu0 %v999
        %2002 = vmatmul.mubr.bf16.gmra.mxu0 %v998
        %v2003 = vpop.f32.mrf.mxu0
        %v2004 = vadd.f32 %v1811, %v2003
        %v2005 = vpop.f32.mrf.mxu0
        %v2006 = vadd.f32 %v1813, %v2005
        %v2007 = vpop.f32.mrf.mxu0
        %v2008 = vadd.f32 %v1815, %v2007
        %v2009 = vpop.f32.mrf.mxu0
        %v2010 = vadd.f32 %v1817, %v2009
        %2011 = vmatprep.mubr.bf16.mxu0 %v1003
        %2012 = vmatmul.mubr.bf16.gmra.mxu0 %v1002
        %v2013 = vpop.f32.mrf.mxu0
        %v2014 = vadd.f32 %v1821, %v2013
        %v2015 = vpop.f32.mrf.mxu0
        %v2016 = vadd.f32 %v1823, %v2015
        %v2017 = vpop.f32.mrf.mxu0
        %v2018 = vadd.f32 %v1825, %v2017
        %v2019 = vpop.f32.mrf.mxu0
        %v2020 = vadd.f32 %v1827, %v2019
        %2021 = vmatprep.mubr.bf16.mxu0 %v1007
        %2022 = vmatmul.mubr.bf16.gmra.mxu0 %v1006
        %v2023 = vpop.f32.mrf.mxu0
        %v2024 = vadd.f32 %v1831, %v2023
        %v2025 = vpop.f32.mrf.mxu0
        %v2026 = vadd.f32 %v1833, %v2025
        %v2027 = vpop.f32.mrf.mxu0
        %v2028 = vadd.f32 %v1835, %v2027
        %v2029 = vpop.f32.mrf.mxu0
        %v2030 = vadd.f32 %v1837, %v2029
        %2031 = vmatprep.mubr.bf16.mxu0 %v1011
        %2032 = vmatmul.mubr.bf16.gmra.mxu0 %v1010
        %v2033 = vpop.f32.mrf.mxu0
        %v2034 = vadd.f32 %v1841, %v2033
        %v2035 = vpop.f32.mrf.mxu0
        %v2036 = vadd.f32 %v1843, %v2035
        %v2037 = vpop.f32.mrf.mxu0
        %v2038 = vadd.f32 %v1845, %v2037
        %v2039 = vpop.f32.mrf.mxu0
        %v2040 = vadd.f32 %v1847, %v2039
        %2041 = vmatprep.mubr.bf16.mxu0 %v1015
        %2042 = vmatmul.mubr.bf16.gmra.mxu0 %v1014
        %v2043 = vpop.f32.mrf.mxu0
        %v2044 = vadd.f32 %v1851, %v2043
        %v2045 = vpop.f32.mrf.mxu0
        %v2046 = vadd.f32 %v1853, %v2045
        %v2047 = vpop.f32.mrf.mxu0
        %v2048 = vadd.f32 %v1855, %v2047
        %v2049 = vpop.f32.mrf.mxu0
        %v2050 = vadd.f32 %v1857, %v2049
        %2051 = vmatprep.mubr.bf16.mxu0 %v1019
        %2052 = vmatmul.mubr.bf16.gmra.mxu0 %v1018
        %v2053 = vpop.f32.mrf.mxu0
        %v2054 = vadd.f32 %v1861, %v2053
        %v2055 = vpop.f32.mrf.mxu0
        %v2056 = vadd.f32 %v1863, %v2055
        %v2057 = vpop.f32.mrf.mxu0
        %v2058 = vadd.f32 %v1865, %v2057
        %v2059 = vpop.f32.mrf.mxu0
        %v2060 = vadd.f32 %v1867, %v2059
        %2061 = vmatprep.mubr.bf16.mxu0 %v1023
        %2062 = vmatmul.mubr.bf16.gmra.mxu0 %v1022
        %v2063 = vpop.f32.mrf.mxu0
        %v2064 = vadd.f32 %v1871, %v2063
        %v2065 = vpop.f32.mrf.mxu0
        %v2066 = vadd.f32 %v1873, %v2065
        %v2067 = vpop.f32.mrf.mxu0
        %v2068 = vadd.f32 %v1875, %v2067
        %v2069 = vpop.f32.mrf.mxu0
        %v2070 = vadd.f32 %v1877, %v2069
        %2071 = vmatprep.mubr.bf16.mxu0 %v1027
        %2072 = vmatmul.mubr.bf16.gmra.mxu0 %v1026
        %v2073 = vpop.f32.mrf.mxu0
        %v2074 = vadd.f32 %v1881, %v2073
        %v2075 = vpop.f32.mrf.mxu0
        %v2076 = vadd.f32 %v1883, %v2075
        %v2077 = vpop.f32.mrf.mxu0
        %v2078 = vadd.f32 %v1885, %v2077
        %v2079 = vpop.f32.mrf.mxu0
        %v2080 = vadd.f32 %v1887, %v2079
        %2081 = vmatprep.mubr.bf16.mxu0 %v1031
        %2082 = vmatmul.mubr.bf16.gmra.mxu0 %v1030
        %v2083 = vpop.f32.mrf.mxu0
        %v2084 = vadd.f32 %v1891, %v2083
        %v2085 = vpop.f32.mrf.mxu0
        %v2086 = vadd.f32 %v1893, %v2085
        %v2087 = vpop.f32.mrf.mxu0
        %v2088 = vadd.f32 %v1895, %v2087
        %v2089 = vpop.f32.mrf.mxu0
        %v2090 = vadd.f32 %v1897, %v2089
        %2091 = vmatprep.mubr.bf16.mxu0 %v1035
        %2092 = vmatmul.mubr.bf16.gmra.mxu0 %v1034
        %v2093 = vpop.f32.mrf.mxu0
        %v2094 = vadd.f32 %v1901, %v2093
        %v2095 = vpop.f32.mrf.mxu0
        %v2096 = vadd.f32 %v1903, %v2095
        %v2097 = vpop.f32.mrf.mxu0
        %v2098 = vadd.f32 %v1905, %v2097
        %v2099 = vpop.f32.mrf.mxu0
        %v2100 = vadd.f32 %v1907, %v2099
        %2101 = vmatprep.mubr.bf16.mxu0 %v1039
        %2102 = vmatmul.mubr.bf16.gmra.mxu0 %v1038
        %v2103 = vpop.f32.mrf.mxu0
        %v2104 = vadd.f32 %v1911, %v2103
        %v2105 = vpop.f32.mrf.mxu0
        %v2106 = vadd.f32 %v1913, %v2105
        %v2107 = vpop.f32.mrf.mxu0
        %v2108 = vadd.f32 %v1915, %v2107
        %v2109 = vpop.f32.mrf.mxu0
        %v2110 = vadd.f32 %v1917, %v2109
        %2111 = vmatprep.mubr.bf16.mxu0 %v1043
        %2112 = vmatmul.mubr.bf16.gmra.mxu0 %v1042
        %v2113 = vpop.f32.mrf.mxu0
        %v2114 = vadd.f32 %v1921, %v2113
        %v2115 = vpop.f32.mrf.mxu0
        %v2116 = vadd.f32 %v1923, %v2115
        %v2117 = vpop.f32.mrf.mxu0
        %v2118 = vadd.f32 %v1925, %v2117
        %v2119 = vpop.f32.mrf.mxu0
        %v2120 = vadd.f32 %v1927, %v2119
        %2121 = vmatprep.mubr.bf16.mxu0 %v1047
        %2122 = vmatmul.mubr.bf16.gmra.mxu0 %v1046
        %v2123 = vpop.f32.mrf.mxu0
        %v2124 = vadd.f32 %v1931, %v2123
        %v2125 = vpop.f32.mrf.mxu0
        %v2126 = vadd.f32 %v1933, %v2125
        %v2127 = vpop.f32.mrf.mxu0
        %v2128 = vadd.f32 %v1935, %v2127
        %v2129 = vpop.f32.mrf.mxu0
        %v2130 = vadd.f32 %v1937, %v2129
        %2131 = vmatprep.mubr.bf16.mxu0 %v1051
        %2132 = vmatmul.mubr.bf16.gmra.mxu0 %v1050
        %v2133 = vpop.f32.mrf.mxu0
        %v2134 = vadd.f32 %v1941, %v2133
        %v2135 = vpop.f32.mrf.mxu0
        %v2136 = vadd.f32 %v1943, %v2135
        %v2137 = vpop.f32.mrf.mxu0
        %v2138 = vadd.f32 %v1945, %v2137
        %v2139 = vpop.f32.mrf.mxu0
        %v2140 = vadd.f32 %v1947, %v2139
        %2141 = vdwg.mxu0
        %2142 = vmatprep.subr.bf16.mxu0 %v1531
        %2143 = vmatpush1.bf16.msra.mxu0 %v1530
        %2144 = vmatprep.subr.bf16.mxu0 %v1527
        %2145 = vmatpush1.bf16.msra.mxu0 %v1526
        %2146 = vmatprep.subr.bf16.mxu0 %v1523
        %2147 = vmatpush1.bf16.msra.mxu0 %v1522
        %2148 = vmatprep.subr.bf16.mxu0 %v1519
        %2149 = vmatpush1.bf16.msra.mxu0 %v1518
        %2150 = vmatprep.subr.bf16.mxu0 %v1515
        %2151 = vmatpush1.bf16.msra.mxu0 %v1514
        %2152 = vmatprep.subr.bf16.mxu0 %v1511
        %2153 = vmatpush1.bf16.msra.mxu0 %v1510
        %2154 = vmatprep.subr.bf16.mxu0 %v1507
        %2155 = vmatpush1.bf16.msra.mxu0 %v1506
        %2156 = vmatprep.subr.bf16.mxu0 %v1503
        %2157 = vmatpush1.bf16.msra.mxu0 %v1502
        %2158 = vmatprep.subr.bf16.mxu0 %v1563
        %2159 = vmatpush2.bf16.msra.mxu0 %v1562
        %2160 = vmatprep.subr.bf16.mxu0 %v1559
        %2161 = vmatpush2.bf16.msra.mxu0 %v1558
        %2162 = vmatprep.subr.bf16.mxu0 %v1555
        %2163 = vmatpush2.bf16.msra.mxu0 %v1554
        %2164 = vmatprep.subr.bf16.mxu0 %v1551
        %2165 = vmatpush2.bf16.msra.mxu0 %v1550
        %2166 = vmatprep.subr.bf16.mxu0 %v1547
        %2167 = vmatpush2.bf16.msra.mxu0 %v1546
        %2168 = vmatprep.subr.bf16.mxu0 %v1543
        %2169 = vmatpush2.bf16.msra.mxu0 %v1542
        %2170 = vmatprep.subr.bf16.mxu0 %v1539
        %2171 = vmatpush2.bf16.msra.mxu0 %v1538
        %2172 = vmatprep.subr.bf16.mxu0 %v1535
        %2173 = vmatpush2.bf16.msra.mxu0 %v1534
        %2174 = vmatprep.mubr.bf16.mxu0 %v989
        %2175 = vmatmul.mubr.bf16.gmra.mxu0 %v988
        %v2176 = vpop.f32.mrf.mxu0
        %v2177 = vadd.f32 0.0, %v2176
        %v2178 = vpop.f32.mrf.mxu0
        %v2179 = vadd.f32 0.0, %v2178
        %v2180 = vpop.f32.mrf.mxu0
        %v2181 = vadd.f32 0.0, %v2180
        %v2182 = vpop.f32.mrf.mxu0
        %v2183 = vadd.f32 0.0, %v2182
        %2184 = vmatprep.mubr.bf16.mxu0 %v993
        %2185 = vmatmul.mubr.bf16.gmra.mxu0 %v992
        %v2186 = vpop.f32.mrf.mxu0
        %v2187 = vadd.f32 0.0, %v2186
        %v2188 = vpop.f32.mrf.mxu0
        %v2189 = vadd.f32 0.0, %v2188
        %v2190 = vpop.f32.mrf.mxu0
        %v2191 = vadd.f32 0.0, %v2190
        %v2192 = vpop.f32.mrf.mxu0
        %v2193 = vadd.f32 0.0, %v2192
        %2194 = vmatprep.mubr.bf16.mxu0 %v997
        %2195 = vmatmul.mubr.bf16.gmra.mxu0 %v996
        %v2196 = vpop.f32.mrf.mxu0
        %v2197 = vadd.f32 0.0, %v2196
        %v2198 = vpop.f32.mrf.mxu0
        %v2199 = vadd.f32 0.0, %v2198
        %v2200 = vpop.f32.mrf.mxu0
        %v2201 = vadd.f32 0.0, %v2200
        %v2202 = vpop.f32.mrf.mxu0
        %v2203 = vadd.f32 0.0, %v2202
        %2204 = vmatprep.mubr.bf16.mxu0 %v1001
        %2205 = vmatmul.mubr.bf16.gmra.mxu0 %v1000
        %v2206 = vpop.f32.mrf.mxu0
        %v2207 = vadd.f32 0.0, %v2206
        %v2208 = vpop.f32.mrf.mxu0
        %v2209 = vadd.f32 0.0, %v2208
        %v2210 = vpop.f32.mrf.mxu0
        %v2211 = vadd.f32 0.0, %v2210
        %v2212 = vpop.f32.mrf.mxu0
        %v2213 = vadd.f32 0.0, %v2212
        %2214 = vmatprep.mubr.bf16.mxu0 %v1005
        %2215 = vmatmul.mubr.bf16.gmra.mxu0 %v1004
        %v2216 = vpop.f32.mrf.mxu0
        %v2217 = vadd.f32 0.0, %v2216
        %v2218 = vpop.f32.mrf.mxu0
        %v2219 = vadd.f32 0.0, %v2218
        %v2220 = vpop.f32.mrf.mxu0
        %v2221 = vadd.f32 0.0, %v2220
        %v2222 = vpop.f32.mrf.mxu0
        %v2223 = vadd.f32 0.0, %v2222
        %2224 = vmatprep.mubr.bf16.mxu0 %v1009
        %2225 = vmatmul.mubr.bf16.gmra.mxu0 %v1008
        %v2226 = vpop.f32.mrf.mxu0
        %v2227 = vadd.f32 0.0, %v2226
        %v2228 = vpop.f32.mrf.mxu0
        %v2229 = vadd.f32 0.0, %v2228
        %v2230 = vpop.f32.mrf.mxu0
        %v2231 = vadd.f32 0.0, %v2230
        %v2232 = vpop.f32.mrf.mxu0
        %v2233 = vadd.f32 0.0, %v2232
        %2234 = vmatprep.mubr.bf16.mxu0 %v1013
        %2235 = vmatmul.mubr.bf16.gmra.mxu0 %v1012
        %v2236 = vpop.f32.mrf.mxu0
        %v2237 = vadd.f32 0.0, %v2236
        %v2238 = vpop.f32.mrf.mxu0
        %v2239 = vadd.f32 0.0, %v2238
        %v2240 = vpop.f32.mrf.mxu0
        %v2241 = vadd.f32 0.0, %v2240
        %v2242 = vpop.f32.mrf.mxu0
        %v2243 = vadd.f32 0.0, %v2242
        %2244 = vmatprep.mubr.bf16.mxu0 %v1017
        %2245 = vmatmul.mubr.bf16.gmra.mxu0 %v1016
        %v2246 = vpop.f32.mrf.mxu0
        %v2247 = vadd.f32 0.0, %v2246
        %v2248 = vpop.f32.mrf.mxu0
        %v2249 = vadd.f32 0.0, %v2248
        %v2250 = vpop.f32.mrf.mxu0
        %v2251 = vadd.f32 0.0, %v2250
        %v2252 = vpop.f32.mrf.mxu0
        %v2253 = vadd.f32 0.0, %v2252
        %2254 = vmatprep.mubr.bf16.mxu0 %v1021
        %2255 = vmatmul.mubr.bf16.gmra.mxu0 %v1020
        %v2256 = vpop.f32.mrf.mxu0
        %v2257 = vadd.f32 0.0, %v2256
        %v2258 = vpop.f32.mrf.mxu0
        %v2259 = vadd.f32 0.0, %v2258
        %v2260 = vpop.f32.mrf.mxu0
        %v2261 = vadd.f32 0.0, %v2260
        %v2262 = vpop.f32.mrf.mxu0
        %v2263 = vadd.f32 0.0, %v2262
        %2264 = vmatprep.mubr.bf16.mxu0 %v1025
        %2265 = vmatmul.mubr.bf16.gmra.mxu0 %v1024
        %v2266 = vpop.f32.mrf.mxu0
        %v2267 = vadd.f32 0.0, %v2266
        %v2268 = vpop.f32.mrf.mxu0
        %v2269 = vadd.f32 0.0, %v2268
        %v2270 = vpop.f32.mrf.mxu0
        %v2271 = vadd.f32 0.0, %v2270
        %v2272 = vpop.f32.mrf.mxu0
        %v2273 = vadd.f32 0.0, %v2272
        %2274 = vmatprep.mubr.bf16.mxu0 %v1029
        %2275 = vmatmul.mubr.bf16.gmra.mxu0 %v1028
        %v2276 = vpop.f32.mrf.mxu0
        %v2277 = vadd.f32 0.0, %v2276
        %v2278 = vpop.f32.mrf.mxu0
        %v2279 = vadd.f32 0.0, %v2278
        %v2280 = vpop.f32.mrf.mxu0
        %v2281 = vadd.f32 0.0, %v2280
        %v2282 = vpop.f32.mrf.mxu0
        %v2283 = vadd.f32 0.0, %v2282
        %2284 = vmatprep.mubr.bf16.mxu0 %v1033
        %2285 = vmatmul.mubr.bf16.gmra.mxu0 %v1032
        %v2286 = vpop.f32.mrf.mxu0
        %v2287 = vadd.f32 0.0, %v2286
        %v2288 = vpop.f32.mrf.mxu0
        %v2289 = vadd.f32 0.0, %v2288
        %v2290 = vpop.f32.mrf.mxu0
        %v2291 = vadd.f32 0.0, %v2290
        %v2292 = vpop.f32.mrf.mxu0
        %v2293 = vadd.f32 0.0, %v2292
        %2294 = vmatprep.mubr.bf16.mxu0 %v1037
        %2295 = vmatmul.mubr.bf16.gmra.mxu0 %v1036
        %v2296 = vpop.f32.mrf.mxu0
        %v2297 = vadd.f32 0.0, %v2296
        %v2298 = vpop.f32.mrf.mxu0
        %v2299 = vadd.f32 0.0, %v2298
        %v2300 = vpop.f32.mrf.mxu0
        %v2301 = vadd.f32 0.0, %v2300
        %v2302 = vpop.f32.mrf.mxu0
        %v2303 = vadd.f32 0.0, %v2302
        %2304 = vmatprep.mubr.bf16.mxu0 %v1041
        %2305 = vmatmul.mubr.bf16.gmra.mxu0 %v1040
        %v2306 = vpop.f32.mrf.mxu0
        %v2307 = vadd.f32 0.0, %v2306
        %v2308 = vpop.f32.mrf.mxu0
        %v2309 = vadd.f32 0.0, %v2308
        %v2310 = vpop.f32.mrf.mxu0
        %v2311 = vadd.f32 0.0, %v2310
        %v2312 = vpop.f32.mrf.mxu0
        %v2313 = vadd.f32 0.0, %v2312
        %2314 = vmatprep.mubr.bf16.mxu0 %v1045
        %2315 = vmatmul.mubr.bf16.gmra.mxu0 %v1044
        %v2316 = vpop.f32.mrf.mxu0
        %v2317 = vadd.f32 0.0, %v2316
        %v2318 = vpop.f32.mrf.mxu0
        %v2319 = vadd.f32 0.0, %v2318
        %v2320 = vpop.f32.mrf.mxu0
        %v2321 = vadd.f32 0.0, %v2320
        %v2322 = vpop.f32.mrf.mxu0
        %v2323 = vadd.f32 0.0, %v2322
        %2324 = vmatprep.mubr.bf16.mxu0 %v1049
        %2325 = vmatmul.mubr.bf16.gmra.mxu0 %v1048
        %v2326 = vpop.f32.mrf.mxu0
        %v2327 = vadd.f32 0.0, %v2326
        %v2328 = vpop.f32.mrf.mxu0
        %v2329 = vadd.f32 0.0, %v2328
        %v2330 = vpop.f32.mrf.mxu0
        %v2331 = vadd.f32 0.0, %v2330
        %v2332 = vpop.f32.mrf.mxu0
        %v2333 = vadd.f32 0.0, %v2332
        %2334 = vdwg.mxu0
        %2335 = vmatprep.subr.bf16.mxu0 %v1595
        %2336 = vmatpush1.bf16.msra.mxu0 %v1594
        %2337 = vmatprep.subr.bf16.mxu0 %v1591
        %2338 = vmatpush1.bf16.msra.mxu0 %v1590
        %2339 = vmatprep.subr.bf16.mxu0 %v1587
        %2340 = vmatpush1.bf16.msra.mxu0 %v1586
        %2341 = vmatprep.subr.bf16.mxu0 %v1583
        %2342 = vmatpush1.bf16.msra.mxu0 %v1582
        %2343 = vmatprep.subr.bf16.mxu0 %v1579
        %2344 = vmatpush1.bf16.msra.mxu0 %v1578
        %2345 = vmatprep.subr.bf16.mxu0 %v1575
        %2346 = vmatpush1.bf16.msra.mxu0 %v1574
        %2347 = vmatprep.subr.bf16.mxu0 %v1571
        %2348 = vmatpush1.bf16.msra.mxu0 %v1570
        %2349 = vmatprep.subr.bf16.mxu0 %v1567
        %2350 = vmatpush1.bf16.msra.mxu0 %v1566
        %2351 = vmatprep.subr.bf16.mxu0 %v1627
        %2352 = vmatpush2.bf16.msra.mxu0 %v1626
        %2353 = vmatprep.subr.bf16.mxu0 %v1623
        %2354 = vmatpush2.bf16.msra.mxu0 %v1622
        %2355 = vmatprep.subr.bf16.mxu0 %v1619
        %2356 = vmatpush2.bf16.msra.mxu0 %v1618
        %2357 = vmatprep.subr.bf16.mxu0 %v1615
        %2358 = vmatpush2.bf16.msra.mxu0 %v1614
        %2359 = vmatprep.subr.bf16.mxu0 %v1611
        %2360 = vmatpush2.bf16.msra.mxu0 %v1610
        %2361 = vmatprep.subr.bf16.mxu0 %v1607
        %2362 = vmatpush2.bf16.msra.mxu0 %v1606
        %2363 = vmatprep.subr.bf16.mxu0 %v1603
        %2364 = vmatpush2.bf16.msra.mxu0 %v1602
        %2365 = vmatprep.subr.bf16.mxu0 %v1599
        %2366 = vmatpush2.bf16.msra.mxu0 %v1598
        %2367 = vmatprep.mubr.bf16.mxu0 %v991
        %2368 = vmatmul.mubr.bf16.gmra.mxu0 %v990
        %v2369 = vpop.f32.mrf.mxu0
        %v2370 = vadd.f32 %v2177, %v2369
        %v2371 = vpop.f32.mrf.mxu0
        %v2372 = vadd.f32 %v2179, %v2371
        %v2373 = vpop.f32.mrf.mxu0
        %v2374 = vadd.f32 %v2181, %v2373
        %v2375 = vpop.f32.mrf.mxu0
        %v2376 = vadd.f32 %v2183, %v2375
        %2377 = vmatprep.mubr.bf16.mxu0 %v995
        %2378 = vmatmul.mubr.bf16.gmra.mxu0 %v994
        %v2379 = vpop.f32.mrf.mxu0
        %v2380 = vadd.f32 %v2187, %v2379
        %v2381 = vpop.f32.mrf.mxu0
        %v2382 = vadd.f32 %v2189, %v2381
        %v2383 = vpop.f32.mrf.mxu0
        %v2384 = vadd.f32 %v2191, %v2383
        %v2385 = vpop.f32.mrf.mxu0
        %v2386 = vadd.f32 %v2193, %v2385
        %2387 = vmatprep.mubr.bf16.mxu0 %v999
        %2388 = vmatmul.mubr.bf16.gmra.mxu0 %v998
        %v2389 = vpop.f32.mrf.mxu0
        %v2390 = vadd.f32 %v2197, %v2389
        %v2391 = vpop.f32.mrf.mxu0
        %v2392 = vadd.f32 %v2199, %v2391
        %v2393 = vpop.f32.mrf.mxu0
        %v2394 = vadd.f32 %v2201, %v2393
        %v2395 = vpop.f32.mrf.mxu0
        %v2396 = vadd.f32 %v2203, %v2395
        %2397 = vmatprep.mubr.bf16.mxu0 %v1003
        %2398 = vmatmul.mubr.bf16.gmra.mxu0 %v1002
        %v2399 = vpop.f32.mrf.mxu0
        %v2400 = vadd.f32 %v2207, %v2399
        %v2401 = vpop.f32.mrf.mxu0
        %v2402 = vadd.f32 %v2209, %v2401
        %v2403 = vpop.f32.mrf.mxu0
        %v2404 = vadd.f32 %v2211, %v2403
        %v2405 = vpop.f32.mrf.mxu0
        %v2406 = vadd.f32 %v2213, %v2405
        %2407 = vmatprep.mubr.bf16.mxu0 %v1007
        %2408 = vmatmul.mubr.bf16.gmra.mxu0 %v1006
        %v2409 = vpop.f32.mrf.mxu0
        %v2410 = vadd.f32 %v2217, %v2409
        %v2411 = vpop.f32.mrf.mxu0
        %v2412 = vadd.f32 %v2219, %v2411
        %v2413 = vpop.f32.mrf.mxu0
        %v2414 = vadd.f32 %v2221, %v2413
        %v2415 = vpop.f32.mrf.mxu0
        %v2416 = vadd.f32 %v2223, %v2415
        %2417 = vmatprep.mubr.bf16.mxu0 %v1011
        %2418 = vmatmul.mubr.bf16.gmra.mxu0 %v1010
        %v2419 = vpop.f32.mrf.mxu0
        %v2420 = vadd.f32 %v2227, %v2419
        %v2421 = vpop.f32.mrf.mxu0
        %v2422 = vadd.f32 %v2229, %v2421
        %v2423 = vpop.f32.mrf.mxu0
        %v2424 = vadd.f32 %v2231, %v2423
        %v2425 = vpop.f32.mrf.mxu0
        %v2426 = vadd.f32 %v2233, %v2425
        %2427 = vmatprep.mubr.bf16.mxu0 %v1015
        %2428 = vmatmul.mubr.bf16.gmra.mxu0 %v1014
        %v2429 = vpop.f32.mrf.mxu0
        %v2430 = vadd.f32 %v2237, %v2429
        %v2431 = vpop.f32.mrf.mxu0
        %v2432 = vadd.f32 %v2239, %v2431
        %v2433 = vpop.f32.mrf.mxu0
        %v2434 = vadd.f32 %v2241, %v2433
        %v2435 = vpop.f32.mrf.mxu0
        %v2436 = vadd.f32 %v2243, %v2435
        %2437 = vmatprep.mubr.bf16.mxu0 %v1019
        %2438 = vmatmul.mubr.bf16.gmra.mxu0 %v1018
        %v2439 = vpop.f32.mrf.mxu0
        %v2440 = vadd.f32 %v2247, %v2439
        %v2441 = vpop.f32.mrf.mxu0
        %v2442 = vadd.f32 %v2249, %v2441
        %v2443 = vpop.f32.mrf.mxu0
        %v2444 = vadd.f32 %v2251, %v2443
        %v2445 = vpop.f32.mrf.mxu0
        %v2446 = vadd.f32 %v2253, %v2445
        %2447 = vmatprep.mubr.bf16.mxu0 %v1023
        %2448 = vmatmul.mubr.bf16.gmra.mxu0 %v1022
        %v2449 = vpop.f32.mrf.mxu0
        %v2450 = vadd.f32 %v2257, %v2449
        %v2451 = vpop.f32.mrf.mxu0
        %v2452 = vadd.f32 %v2259, %v2451
        %v2453 = vpop.f32.mrf.mxu0
        %v2454 = vadd.f32 %v2261, %v2453
        %v2455 = vpop.f32.mrf.mxu0
        %v2456 = vadd.f32 %v2263, %v2455
        %2457 = vmatprep.mubr.bf16.mxu0 %v1027
        %2458 = vmatmul.mubr.bf16.gmra.mxu0 %v1026
        %v2459 = vpop.f32.mrf.mxu0
        %v2460 = vadd.f32 %v2267, %v2459
        %v2461 = vpop.f32.mrf.mxu0
        %v2462 = vadd.f32 %v2269, %v2461
        %v2463 = vpop.f32.mrf.mxu0
        %v2464 = vadd.f32 %v2271, %v2463
        %v2465 = vpop.f32.mrf.mxu0
        %v2466 = vadd.f32 %v2273, %v2465
        %2467 = vmatprep.mubr.bf16.mxu0 %v1031
        %2468 = vmatmul.mubr.bf16.gmra.mxu0 %v1030
        %v2469 = vpop.f32.mrf.mxu0
        %v2470 = vadd.f32 %v2277, %v2469
        %v2471 = vpop.f32.mrf.mxu0
        %v2472 = vadd.f32 %v2279, %v2471
        %v2473 = vpop.f32.mrf.mxu0
        %v2474 = vadd.f32 %v2281, %v2473
        %v2475 = vpop.f32.mrf.mxu0
        %v2476 = vadd.f32 %v2283, %v2475
        %2477 = vmatprep.mubr.bf16.mxu0 %v1035
        %2478 = vmatmul.mubr.bf16.gmra.mxu0 %v1034
        %v2479 = vpop.f32.mrf.mxu0
        %v2480 = vadd.f32 %v2287, %v2479
        %v2481 = vpop.f32.mrf.mxu0
        %v2482 = vadd.f32 %v2289, %v2481
        %v2483 = vpop.f32.mrf.mxu0
        %v2484 = vadd.f32 %v2291, %v2483
        %v2485 = vpop.f32.mrf.mxu0
        %v2486 = vadd.f32 %v2293, %v2485
        %2487 = vmatprep.mubr.bf16.mxu0 %v1039
        %2488 = vmatmul.mubr.bf16.gmra.mxu0 %v1038
        %v2489 = vpop.f32.mrf.mxu0
        %v2490 = vadd.f32 %v2297, %v2489
        %v2491 = vpop.f32.mrf.mxu0
        %v2492 = vadd.f32 %v2299, %v2491
        %v2493 = vpop.f32.mrf.mxu0
        %v2494 = vadd.f32 %v2301, %v2493
        %v2495 = vpop.f32.mrf.mxu0
        %v2496 = vadd.f32 %v2303, %v2495
        %2497 = vmatprep.mubr.bf16.mxu0 %v1043
        %2498 = vmatmul.mubr.bf16.gmra.mxu0 %v1042
        %v2499 = vpop.f32.mrf.mxu0
        %v2500 = vadd.f32 %v2307, %v2499
        %v2501 = vpop.f32.mrf.mxu0
        %v2502 = vadd.f32 %v2309, %v2501
        %v2503 = vpop.f32.mrf.mxu0
        %v2504 = vadd.f32 %v2311, %v2503
        %v2505 = vpop.f32.mrf.mxu0
        %v2506 = vadd.f32 %v2313, %v2505
        %2507 = vmatprep.mubr.bf16.mxu0 %v1047
        %2508 = vmatmul.mubr.bf16.gmra.mxu0 %v1046
        %v2509 = vpop.f32.mrf.mxu0
        %v2510 = vadd.f32 %v2317, %v2509
        %v2511 = vpop.f32.mrf.mxu0
        %v2512 = vadd.f32 %v2319, %v2511
        %v2513 = vpop.f32.mrf.mxu0
        %v2514 = vadd.f32 %v2321, %v2513
        %v2515 = vpop.f32.mrf.mxu0
        %v2516 = vadd.f32 %v2323, %v2515
        %2517 = vmatprep.mubr.bf16.mxu0 %v1051
        %2518 = vmatmul.mubr.bf16.gmra.mxu0 %v1050
        %v2519 = vpop.f32.mrf.mxu0
        %v2520 = vadd.f32 %v2327, %v2519
        %v2521 = vpop.f32.mrf.mxu0
        %v2522 = vadd.f32 %v2329, %v2521
        %v2523 = vpop.f32.mrf.mxu0
        %v2524 = vadd.f32 %v2331, %v2523
        %v2525 = vpop.f32.mrf.mxu0
        %v2526 = vadd.f32 %v2333, %v2525
        %2527 = vdwg.mxu0
        %v2528 = vadd.f32 %v476, %v1984
        %v2529 = vadd.f32 %v477, %v1986
        %v2530 = vadd.f32 %v478, %v2370
        %v2531 = vadd.f32 %v479, %v2372
        %v2532 = vadd.f32 %v480, %v1988
        %v2533 = vadd.f32 %v481, %v1990
        %v2534 = vadd.f32 %v482, %v2374
        %v2535 = vadd.f32 %v483, %v2376
        %v2536 = vadd.f32 %v484, %v1994
        %v2537 = vadd.f32 %v485, %v1996
        %v2538 = vadd.f32 %v486, %v2380
        %v2539 = vadd.f32 %v487, %v2382
        %v2540 = vadd.f32 %v488, %v1998
        %v2541 = vadd.f32 %v489, %v2000
        %v2542 = vadd.f32 %v490, %v2384
        %v2543 = vadd.f32 %v491, %v2386
        %v2544 = vadd.f32 %v492, %v2004
        %v2545 = vadd.f32 %v493, %v2006
        %v2546 = vadd.f32 %v494, %v2390
        %v2547 = vadd.f32 %v495, %v2392
        %v2548 = vadd.f32 %v496, %v2008
        %v2549 = vadd.f32 %v497, %v2010
        %v2550 = vadd.f32 %v498, %v2394
        %v2551 = vadd.f32 %v499, %v2396
        %v2552 = vadd.f32 %v500, %v2014
        %v2553 = vadd.f32 %v501, %v2016
        %v2554 = vadd.f32 %v502, %v2400
        %v2555 = vadd.f32 %v503, %v2402
        %v2556 = vadd.f32 %v504, %v2018
        %v2557 = vadd.f32 %v505, %v2020
        %v2558 = vadd.f32 %v506, %v2404
        %v2559 = vadd.f32 %v507, %v2406
        %v2560 = vadd.f32 %v508, %v2024
        %v2561 = vadd.f32 %v509, %v2026
        %v2562 = vadd.f32 %v510, %v2410
        %v2563 = vadd.f32 %v511, %v2412
        %v2564 = vadd.f32 %v512, %v2028
        %v2565 = vadd.f32 %v513, %v2030
        %v2566 = vadd.f32 %v514, %v2414
        %v2567 = vadd.f32 %v515, %v2416
        %v2568 = vadd.f32 %v516, %v2034
        %v2569 = vadd.f32 %v517, %v2036
        %v2570 = vadd.f32 %v518, %v2420
        %v2571 = vadd.f32 %v519, %v2422
        %v2572 = vadd.f32 %v520, %v2038
        %v2573 = vadd.f32 %v521, %v2040
        %v2574 = vadd.f32 %v522, %v2424
        %v2575 = vadd.f32 %v523, %v2426
        %v2576 = vadd.f32 %v524, %v2044
        %v2577 = vadd.f32 %v525, %v2046
        %v2578 = vadd.f32 %v526, %v2430
        %v2579 = vadd.f32 %v527, %v2432
        %v2580 = vadd.f32 %v528, %v2048
        %v2581 = vadd.f32 %v529, %v2050
        %v2582 = vadd.f32 %v530, %v2434
        %v2583 = vadd.f32 %v531, %v2436
        %v2584 = vadd.f32 %v532, %v2054
        %v2585 = vadd.f32 %v533, %v2056
        %v2586 = vadd.f32 %v534, %v2440
        %v2587 = vadd.f32 %v535, %v2442
        %v2588 = vadd.f32 %v536, %v2058
        %v2589 = vadd.f32 %v537, %v2060
        %v2590 = vadd.f32 %v538, %v2444
        %v2591 = vadd.f32 %v539, %v2446
        %v2592 = vadd.f32 %v540, %v2064
        %v2593 = vadd.f32 %v541, %v2066
        %v2594 = vadd.f32 %v542, %v2450
        %v2595 = vadd.f32 %v543, %v2452
        %v2596 = vadd.f32 %v544, %v2068
        %v2597 = vadd.f32 %v545, %v2070
        %v2598 = vadd.f32 %v546, %v2454
        %v2599 = vadd.f32 %v547, %v2456
        %v2600 = vadd.f32 %v548, %v2074
        %v2601 = vadd.f32 %v549, %v2076
        %v2602 = vadd.f32 %v550, %v2460
        %v2603 = vadd.f32 %v551, %v2462
        %v2604 = vadd.f32 %v552, %v2078
        %v2605 = vadd.f32 %v553, %v2080
        %v2606 = vadd.f32 %v554, %v2464
        %v2607 = vadd.f32 %v555, %v2466
        %v2608 = vadd.f32 %v556, %v2084
        %v2609 = vadd.f32 %v557, %v2086
        %v2610 = vadd.f32 %v558, %v2470
        %v2611 = vadd.f32 %v559, %v2472
        %v2612 = vadd.f32 %v560, %v2088
        %v2613 = vadd.f32 %v561, %v2090
        %v2614 = vadd.f32 %v562, %v2474
        %v2615 = vadd.f32 %v563, %v2476
        %v2616 = vadd.f32 %v564, %v2094
        %v2617 = vadd.f32 %v565, %v2096
        %v2618 = vadd.f32 %v566, %v2480
        %v2619 = vadd.f32 %v567, %v2482
        %v2620 = vadd.f32 %v568, %v2098
        %v2621 = vadd.f32 %v569, %v2100
        %v2622 = vadd.f32 %v570, %v2484
        %v2623 = vadd.f32 %v571, %v2486
        %v2624 = vadd.f32 %v572, %v2104
        %v2625 = vadd.f32 %v573, %v2106
        %v2626 = vadd.f32 %v574, %v2490
        %v2627 = vadd.f32 %v575, %v2492
        %v2628 = vadd.f32 %v576, %v2108
        %v2629 = vadd.f32 %v577, %v2110
        %v2630 = vadd.f32 %v578, %v2494
        %v2631 = vadd.f32 %v579, %v2496
        %v2632 = vadd.f32 %v580, %v2114
        %v2633 = vadd.f32 %v581, %v2116
        %v2634 = vadd.f32 %v582, %v2500
        %v2635 = vadd.f32 %v583, %v2502
        %v2636 = vadd.f32 %v584, %v2118
        %v2637 = vadd.f32 %v585, %v2120
        %v2638 = vadd.f32 %v586, %v2504
        %v2639 = vadd.f32 %v587, %v2506
        %v2640 = vadd.f32 %v588, %v2124
        %v2641 = vadd.f32 %v589, %v2126
        %v2642 = vadd.f32 %v590, %v2510
        %v2643 = vadd.f32 %v591, %v2512
        %v2644 = vadd.f32 %v592, %v2128
        %v2645 = vadd.f32 %v593, %v2130
        %v2646 = vadd.f32 %v594, %v2514
        %v2647 = vadd.f32 %v595, %v2516
        %v2648 = vadd.f32 %v596, %v2134
        %v2649 = vadd.f32 %v597, %v2136
        %v2650 = vadd.f32 %v598, %v2520
        %v2651 = vadd.f32 %v599, %v2522
        %v2652 = vadd.f32 %v600, %v2138
        %v2653 = vadd.f32 %v601, %v2140
        %v2654 = vadd.f32 %v602, %v2524
        %v2655 = vadd.f32 %v603, %v2526
        %2656 = vst [vmem:[#allocation2] sm:$0xff] %v2528
        %2657 = vst [vmem:[#allocation2 + $0x8] sm:$0xff] %v2529
        %2658 = vst [vmem:[#allocation2 + $0x10] sm:$0xff] %v2530
        %2659 = vst [vmem:[#allocation2 + $0x18] sm:$0xff] %v2531
        %2660 = vst [vmem:[#allocation2 + $0x20] sm:$0xff] %v2532
        %2661 = vst [vmem:[#allocation2 + $0x28] sm:$0xff] %v2533
        %2662 = vst [vmem:[#allocation2 + $0x30] sm:$0xff] %v2534
        %2663 = vst [vmem:[#allocation2 + $0x38] sm:$0xff] %v2535
        %2664 = vst [vmem:[#allocation2 + $0x40] sm:$0xff] %v2536
        %2665 = vst [vmem:[#allocation2 + $0x48] sm:$0xff] %v2537
        %2666 = vst [vmem:[#allocation2 + $0x50] sm:$0xff] %v2538
        %2667 = vst [vmem:[#allocation2 + $0x58] sm:$0xff] %v2539
        %2668 = vst [vmem:[#allocation2 + $0x60] sm:$0xff] %v2540
        %2669 = vst [vmem:[#allocation2 + $0x68] sm:$0xff] %v2541
        %2670 = vst [vmem:[#allocation2 + $0x70] sm:$0xff] %v2542
        %2671 = vst [vmem:[#allocation2 + $0x78] sm:$0xff] %v2543
        %2672 = vst [vmem:[#allocation2 + $0x80] sm:$0xff] %v2544
        %2673 = vst [vmem:[#allocation2 + $0x88] sm:$0xff] %v2545
        %2674 = vst [vmem:[#allocation2 + $0x90] sm:$0xff] %v2546
        %2675 = vst [vmem:[#allocation2 + $0x98] sm:$0xff] %v2547
        %2676 = vst [vmem:[#allocation2 + $0xa0] sm:$0xff] %v2548
        %2677 = vst [vmem:[#allocation2 + $0xa8] sm:$0xff] %v2549
        %2678 = vst [vmem:[#allocation2 + $0xb0] sm:$0xff] %v2550
        %2679 = vst [vmem:[#allocation2 + $0xb8] sm:$0xff] %v2551
        %2680 = vst [vmem:[#allocation2 + $0xc0] sm:$0xff] %v2552
        %2681 = vst [vmem:[#allocation2 + $0xc8] sm:$0xff] %v2553
        %2682 = vst [vmem:[#allocation2 + $0xd0] sm:$0xff] %v2554
        %2683 = vst [vmem:[#allocation2 + $0xd8] sm:$0xff] %v2555
        %2684 = vst [vmem:[#allocation2 + $0xe0] sm:$0xff] %v2556
        %2685 = vst [vmem:[#allocation2 + $0xe8] sm:$0xff] %v2557
        %2686 = vst [vmem:[#allocation2 + $0xf0] sm:$0xff] %v2558
        %2687 = vst [vmem:[#allocation2 + $0xf8] sm:$0xff] %v2559
        %2688 = vst [vmem:[#allocation2 + $0x100] sm:$0xff] %v2560
        %2689 = vst [vmem:[#allocation2 + $0x108] sm:$0xff] %v2561
        %2690 = vst [vmem:[#allocation2 + $0x110] sm:$0xff] %v2562
        %2691 = vst [vmem:[#allocation2 + $0x118] sm:$0xff] %v2563
        %2692 = vst [vmem:[#allocation2 + $0x120] sm:$0xff] %v2564
        %2693 = vst [vmem:[#allocation2 + $0x128] sm:$0xff] %v2565
        %2694 = vst [vmem:[#allocation2 + $0x130] sm:$0xff] %v2566
        %2695 = vst [vmem:[#allocation2 + $0x138] sm:$0xff] %v2567
        %2696 = vst [vmem:[#allocation2 + $0x140] sm:$0xff] %v2568
        %2697 = vst [vmem:[#allocation2 + $0x148] sm:$0xff] %v2569
        %2698 = vst [vmem:[#allocation2 + $0x150] sm:$0xff] %v2570
        %2699 = vst [vmem:[#allocation2 + $0x158] sm:$0xff] %v2571
        %2700 = vst [vmem:[#allocation2 + $0x160] sm:$0xff] %v2572
        %2701 = vst [vmem:[#allocation2 + $0x168] sm:$0xff] %v2573
        %2702 = vst [vmem:[#allocation2 + $0x170] sm:$0xff] %v2574
        %2703 = vst [vmem:[#allocation2 + $0x178] sm:$0xff] %v2575
        %2704 = vst [vmem:[#allocation2 + $0x180] sm:$0xff] %v2576
        %2705 = vst [vmem:[#allocation2 + $0x188] sm:$0xff] %v2577
        %2706 = vst [vmem:[#allocation2 + $0x190] sm:$0xff] %v2578
        %2707 = vst [vmem:[#allocation2 + $0x198] sm:$0xff] %v2579
        %2708 = vst [vmem:[#allocation2 + $0x1a0] sm:$0xff] %v2580
        %2709 = vst [vmem:[#allocation2 + $0x1a8] sm:$0xff] %v2581
        %2710 = vst [vmem:[#allocation2 + $0x1b0] sm:$0xff] %v2582
        %2711 = vst [vmem:[#allocation2 + $0x1b8] sm:$0xff] %v2583
        %2712 = vst [vmem:[#allocation2 + $0x1c0] sm:$0xff] %v2584
        %2713 = vst [vmem:[#allocation2 + $0x1c8] sm:$0xff] %v2585
        %2714 = vst [vmem:[#allocation2 + $0x1d0] sm:$0xff] %v2586
        %2715 = vst [vmem:[#allocation2 + $0x1d8] sm:$0xff] %v2587
        %2716 = vst [vmem:[#allocation2 + $0x1e0] sm:$0xff] %v2588
        %2717 = vst [vmem:[#allocation2 + $0x1e8] sm:$0xff] %v2589
        %2718 = vst [vmem:[#allocation2 + $0x1f0] sm:$0xff] %v2590
        %2719 = vst [vmem:[#allocation2 + $0x1f8] sm:$0xff] %v2591
        %2720 = vst [vmem:[#allocation2 + $0x200] sm:$0xff] %v2592
        %2721 = vst [vmem:[#allocation2 + $0x208] sm:$0xff] %v2593
        %2722 = vst [vmem:[#allocation2 + $0x210] sm:$0xff] %v2594
        %2723 = vst [vmem:[#allocation2 + $0x218] sm:$0xff] %v2595
        %2724 = vst [vmem:[#allocation2 + $0x220] sm:$0xff] %v2596
        %2725 = vst [vmem:[#allocation2 + $0x228] sm:$0xff] %v2597
        %2726 = vst [vmem:[#allocation2 + $0x230] sm:$0xff] %v2598
        %2727 = vst [vmem:[#allocation2 + $0x238] sm:$0xff] %v2599
        %2728 = vst [vmem:[#allocation2 + $0x240] sm:$0xff] %v2600
        %2729 = vst [vmem:[#allocation2 + $0x248] sm:$0xff] %v2601
        %2730 = vst [vmem:[#allocation2 + $0x250] sm:$0xff] %v2602
        %2731 = vst [vmem:[#allocation2 + $0x258] sm:$0xff] %v2603
        %2732 = vst [vmem:[#allocation2 + $0x260] sm:$0xff] %v2604
        %2733 = vst [vmem:[#allocation2 + $0x268] sm:$0xff] %v2605
        %2734 = vst [vmem:[#allocation2 + $0x270] sm:$0xff] %v2606
        %2735 = vst [vmem:[#allocation2 + $0x278] sm:$0xff] %v2607
        %2736 = vst [vmem:[#allocation2 + $0x280] sm:$0xff] %v2608
        %2737 = vst [vmem:[#allocation2 + $0x288] sm:$0xff] %v2609
        %2738 = vst [vmem:[#allocation2 + $0x290] sm:$0xff] %v2610
        %2739 = vst [vmem:[#allocation2 + $0x298] sm:$0xff] %v2611
        %2740 = vst [vmem:[#allocation2 + $0x2a0] sm:$0xff] %v2612
        %2741 = vst [vmem:[#allocation2 + $0x2a8] sm:$0xff] %v2613
        %2742 = vst [vmem:[#allocation2 + $0x2b0] sm:$0xff] %v2614
        %2743 = vst [vmem:[#allocation2 + $0x2b8] sm:$0xff] %v2615
        %2744 = vst [vmem:[#allocation2 + $0x2c0] sm:$0xff] %v2616
        %2745 = vst [vmem:[#allocation2 + $0x2c8] sm:$0xff] %v2617
        %2746 = vst [vmem:[#allocation2 + $0x2d0] sm:$0xff] %v2618
        %2747 = vst [vmem:[#allocation2 + $0x2d8] sm:$0xff] %v2619
        %2748 = vst [vmem:[#allocation2 + $0x2e0] sm:$0xff] %v2620
        %2749 = vst [vmem:[#allocation2 + $0x2e8] sm:$0xff] %v2621
        %2750 = vst [vmem:[#allocation2 + $0x2f0] sm:$0xff] %v2622
        %2751 = vst [vmem:[#allocation2 + $0x2f8] sm:$0xff] %v2623
        %2752 = vst [vmem:[#allocation2 + $0x300] sm:$0xff] %v2624
        %2753 = vst [vmem:[#allocation2 + $0x308] sm:$0xff] %v2625
        %2754 = vst [vmem:[#allocation2 + $0x310] sm:$0xff] %v2626
        %2755 = vst [vmem:[#allocation2 + $0x318] sm:$0xff] %v2627
        %2756 = vst [vmem:[#allocation2 + $0x320] sm:$0xff] %v2628
        %2757 = vst [vmem:[#allocation2 + $0x328] sm:$0xff] %v2629
        %2758 = vst [vmem:[#allocation2 + $0x330] sm:$0xff] %v2630
        %2759 = vst [vmem:[#allocation2 + $0x338] sm:$0xff] %v2631
        %2760 = vst [vmem:[#allocation2 + $0x340] sm:$0xff] %v2632
        %2761 = vst [vmem:[#allocation2 + $0x348] sm:$0xff] %v2633
        %2762 = vst [vmem:[#allocation2 + $0x350] sm:$0xff] %v2634
        %2763 = vst [vmem:[#allocation2 + $0x358] sm:$0xff] %v2635
        %2764 = vst [vmem:[#allocation2 + $0x360] sm:$0xff] %v2636
        %2765 = vst [vmem:[#allocation2 + $0x368] sm:$0xff] %v2637
        %2766 = vst [vmem:[#allocation2 + $0x370] sm:$0xff] %v2638
        %2767 = vst [vmem:[#allocation2 + $0x378] sm:$0xff] %v2639
        %2768 = vst [vmem:[#allocation2 + $0x380] sm:$0xff] %v2640
        %2769 = vst [vmem:[#allocation2 + $0x388] sm:$0xff] %v2641
        %2770 = vst [vmem:[#allocation2 + $0x390] sm:$0xff] %v2642
        %2771 = vst [vmem:[#allocation2 + $0x398] sm:$0xff] %v2643
        %2772 = vst [vmem:[#allocation2 + $0x3a0] sm:$0xff] %v2644
        %2773 = vst [vmem:[#allocation2 + $0x3a8] sm:$0xff] %v2645
        %2774 = vst [vmem:[#allocation2 + $0x3b0] sm:$0xff] %v2646
        %2775 = vst [vmem:[#allocation2 + $0x3b8] sm:$0xff] %v2647
        %2776 = vst [vmem:[#allocation2 + $0x3c0] sm:$0xff] %v2648
        %2777 = vst [vmem:[#allocation2 + $0x3c8] sm:$0xff] %v2649
        %2778 = vst [vmem:[#allocation2 + $0x3d0] sm:$0xff] %v2650
        %2779 = vst [vmem:[#allocation2 + $0x3d8] sm:$0xff] %v2651
        %2780 = vst [vmem:[#allocation2 + $0x3e0] sm:$0xff] %v2652
        %2781 = vst [vmem:[#allocation2 + $0x3e8] sm:$0xff] %v2653
        %2782 = vst [vmem:[#allocation2 + $0x3f0] sm:$0xff] %v2654
        %2783 = vst [vmem:[#allocation2 + $0x3f8] sm:$0xff] %v2655
        %p2784 = scmp.eq.s32.totalorder %s31, 1
        // Predicated region
        $region65: #{tpu_custom_call.1} parent=39 // pred_check
          %p2785 = pneg %p2784
        $region66: #{tpu_custom_call.1} parent=39 // pred_check_branch
          %2787 = sbr.rel (%p2785) target = $region68
        $region67: #{tpu_custom_call.1} parent=39 // pred_region
          %v2788 = vld [vmem:[#allocation2] sm:$0xff]
          %v2789 = vld [vmem:[#allocation2 + $0x8] sm:$0xff]
          %v2790 = vld [vmem:[#allocation2 + $0x10] sm:$0xff]
          %v2791 = vld [vmem:[#allocation2 + $0x18] sm:$0xff]
          %v2792 = vld [vmem:[#allocation2 + $0x20] sm:$0xff]
          %v2793 = vld [vmem:[#allocation2 + $0x28] sm:$0xff]
          %v2794 = vld [vmem:[#allocation2 + $0x30] sm:$0xff]
          %v2795 = vld [vmem:[#allocation2 + $0x38] sm:$0xff]
          %v2796 = vld [vmem:[#allocation2 + $0x40] sm:$0xff]
          %v2797 = vld [vmem:[#allocation2 + $0x48] sm:$0xff]
          %v2798 = vld [vmem:[#allocation2 + $0x50] sm:$0xff]
          %v2799 = vld [vmem:[#allocation2 + $0x58] sm:$0xff]
          %v2800 = vld [vmem:[#allocation2 + $0x60] sm:$0xff]
          %v2801 = vld [vmem:[#allocation2 + $0x68] sm:$0xff]
          %v2802 = vld [vmem:[#allocation2 + $0x70] sm:$0xff]
          %v2803 = vld [vmem:[#allocation2 + $0x78] sm:$0xff]
          %v2804 = vld [vmem:[#allocation2 + $0x80] sm:$0xff]
          %v2805 = vld [vmem:[#allocation2 + $0x88] sm:$0xff]
          %v2806 = vld [vmem:[#allocation2 + $0x90] sm:$0xff]
          %v2807 = vld [vmem:[#allocation2 + $0x98] sm:$0xff]
          %v2808 = vld [vmem:[#allocation2 + $0xa0] sm:$0xff]
          %v2809 = vld [vmem:[#allocation2 + $0xa8] sm:$0xff]
          %v2810 = vld [vmem:[#allocation2 + $0xb0] sm:$0xff]
          %v2811 = vld [vmem:[#allocation2 + $0xb8] sm:$0xff]
          %v2812 = vld [vmem:[#allocation2 + $0xc0] sm:$0xff]
          %v2813 = vld [vmem:[#allocation2 + $0xc8] sm:$0xff]
          %v2814 = vld [vmem:[#allocation2 + $0xd0] sm:$0xff]
          %v2815 = vld [vmem:[#allocation2 + $0xd8] sm:$0xff]
          %v2816 = vld [vmem:[#allocation2 + $0xe0] sm:$0xff]
          %v2817 = vld [vmem:[#allocation2 + $0xe8] sm:$0xff]
          %v2818 = vld [vmem:[#allocation2 + $0xf0] sm:$0xff]
          %v2819 = vld [vmem:[#allocation2 + $0xf8] sm:$0xff]
          %v2820 = vld [vmem:[#allocation2 + $0x100] sm:$0xff]
          %v2821 = vld [vmem:[#allocation2 + $0x108] sm:$0xff]
          %v2822 = vld [vmem:[#allocation2 + $0x110] sm:$0xff]
          %v2823 = vld [vmem:[#allocation2 + $0x118] sm:$0xff]
          %v2824 = vld [vmem:[#allocation2 + $0x120] sm:$0xff]
          %v2825 = vld [vmem:[#allocation2 + $0x128] sm:$0xff]
          %v2826 = vld [vmem:[#allocation2 + $0x130] sm:$0xff]
          %v2827 = vld [vmem:[#allocation2 + $0x138] sm:$0xff]
          %v2828 = vld [vmem:[#allocation2 + $0x140] sm:$0xff]
          %v2829 = vld [vmem:[#allocation2 + $0x148] sm:$0xff]
          %v2830 = vld [vmem:[#allocation2 + $0x150] sm:$0xff]
          %v2831 = vld [vmem:[#allocation2 + $0x158] sm:$0xff]
          %v2832 = vld [vmem:[#allocation2 + $0x160] sm:$0xff]
          %v2833 = vld [vmem:[#allocation2 + $0x168] sm:$0xff]
          %v2834 = vld [vmem:[#allocation2 + $0x170] sm:$0xff]
          %v2835 = vld [vmem:[#allocation2 + $0x178] sm:$0xff]
          %v2836 = vld [vmem:[#allocation2 + $0x180] sm:$0xff]
          %v2837 = vld [vmem:[#allocation2 + $0x188] sm:$0xff]
          %v2838 = vld [vmem:[#allocation2 + $0x190] sm:$0xff]
          %v2839 = vld [vmem:[#allocation2 + $0x198] sm:$0xff]
          %v2840 = vld [vmem:[#allocation2 + $0x1a0] sm:$0xff]
          %v2841 = vld [vmem:[#allocation2 + $0x1a8] sm:$0xff]
          %v2842 = vld [vmem:[#allocation2 + $0x1b0] sm:$0xff]
          %v2843 = vld [vmem:[#allocation2 + $0x1b8] sm:$0xff]
          %v2844 = vld [vmem:[#allocation2 + $0x1c0] sm:$0xff]
          %v2845 = vld [vmem:[#allocation2 + $0x1c8] sm:$0xff]
          %v2846 = vld [vmem:[#allocation2 + $0x1d0] sm:$0xff]
          %v2847 = vld [vmem:[#allocation2 + $0x1d8] sm:$0xff]
          %v2848 = vld [vmem:[#allocation2 + $0x1e0] sm:$0xff]
          %v2849 = vld [vmem:[#allocation2 + $0x1e8] sm:$0xff]
          %v2850 = vld [vmem:[#allocation2 + $0x1f0] sm:$0xff]
          %v2851 = vld [vmem:[#allocation2 + $0x1f8] sm:$0xff]
          %v2852 = vld [vmem:[#allocation2 + $0x200] sm:$0xff]
          %v2853 = vld [vmem:[#allocation2 + $0x208] sm:$0xff]
          %v2854 = vld [vmem:[#allocation2 + $0x210] sm:$0xff]
          %v2855 = vld [vmem:[#allocation2 + $0x218] sm:$0xff]
          %v2856 = vld [vmem:[#allocation2 + $0x220] sm:$0xff]
          %v2857 = vld [vmem:[#allocation2 + $0x228] sm:$0xff]
          %v2858 = vld [vmem:[#allocation2 + $0x230] sm:$0xff]
          %v2859 = vld [vmem:[#allocation2 + $0x238] sm:$0xff]
          %v2860 = vld [vmem:[#allocation2 + $0x240] sm:$0xff]
          %v2861 = vld [vmem:[#allocation2 + $0x248] sm:$0xff]
          %v2862 = vld [vmem:[#allocation2 + $0x250] sm:$0xff]
          %v2863 = vld [vmem:[#allocation2 + $0x258] sm:$0xff]
          %v2864 = vld [vmem:[#allocation2 + $0x260] sm:$0xff]
          %v2865 = vld [vmem:[#allocation2 + $0x268] sm:$0xff]
          %v2866 = vld [vmem:[#allocation2 + $0x270] sm:$0xff]
          %v2867 = vld [vmem:[#allocation2 + $0x278] sm:$0xff]
          %v2868 = vld [vmem:[#allocation2 + $0x280] sm:$0xff]
          %v2869 = vld [vmem:[#allocation2 + $0x288] sm:$0xff]
          %v2870 = vld [vmem:[#allocation2 + $0x290] sm:$0xff]
          %v2871 = vld [vmem:[#allocation2 + $0x298] sm:$0xff]
          %v2872 = vld [vmem:[#allocation2 + $0x2a0] sm:$0xff]
          %v2873 = vld [vmem:[#allocation2 + $0x2a8] sm:$0xff]
          %v2874 = vld [vmem:[#allocation2 + $0x2b0] sm:$0xff]
          %v2875 = vld [vmem:[#allocation2 + $0x2b8] sm:$0xff]
          %v2876 = vld [vmem:[#allocation2 + $0x2c0] sm:$0xff]
          %v2877 = vld [vmem:[#allocation2 + $0x2c8] sm:$0xff]
          %v2878 = vld [vmem:[#allocation2 + $0x2d0] sm:$0xff]
          %v2879 = vld [vmem:[#allocation2 + $0x2d8] sm:$0xff]
          %v2880 = vld [vmem:[#allocation2 + $0x2e0] sm:$0xff]
          %v2881 = vld [vmem:[#allocation2 + $0x2e8] sm:$0xff]
          %v2882 = vld [vmem:[#allocation2 + $0x2f0] sm:$0xff]
          %v2883 = vld [vmem:[#allocation2 + $0x2f8] sm:$0xff]
          %v2884 = vld [vmem:[#allocation2 + $0x300] sm:$0xff]
          %v2885 = vld [vmem:[#allocation2 + $0x308] sm:$0xff]
          %v2886 = vld [vmem:[#allocation2 + $0x310] sm:$0xff]
          %v2887 = vld [vmem:[#allocation2 + $0x318] sm:$0xff]
          %v2888 = vld [vmem:[#allocation2 + $0x320] sm:$0xff]
          %v2889 = vld [vmem:[#allocation2 + $0x328] sm:$0xff]
          %v2890 = vld [vmem:[#allocation2 + $0x330] sm:$0xff]
          %v2891 = vld [vmem:[#allocation2 + $0x338] sm:$0xff]
          %v2892 = vld [vmem:[#allocation2 + $0x340] sm:$0xff]
          %v2893 = vld [vmem:[#allocation2 + $0x348] sm:$0xff]
          %v2894 = vld [vmem:[#allocation2 + $0x350] sm:$0xff]
          %v2895 = vld [vmem:[#allocation2 + $0x358] sm:$0xff]
          %v2896 = vld [vmem:[#allocation2 + $0x360] sm:$0xff]
          %v2897 = vld [vmem:[#allocation2 + $0x368] sm:$0xff]
          %v2898 = vld [vmem:[#allocation2 + $0x370] sm:$0xff]
          %v2899 = vld [vmem:[#allocation2 + $0x378] sm:$0xff]
          %v2900 = vld [vmem:[#allocation2 + $0x380] sm:$0xff]
          %v2901 = vld [vmem:[#allocation2 + $0x388] sm:$0xff]
          %v2902 = vld [vmem:[#allocation2 + $0x390] sm:$0xff]
          %v2903 = vld [vmem:[#allocation2 + $0x398] sm:$0xff]
          %v2904 = vld [vmem:[#allocation2 + $0x3a0] sm:$0xff]
          %v2905 = vld [vmem:[#allocation2 + $0x3a8] sm:$0xff]
          %v2906 = vld [vmem:[#allocation2 + $0x3b0] sm:$0xff]
          %v2907 = vld [vmem:[#allocation2 + $0x3b8] sm:$0xff]
          %v2908 = vld [vmem:[#allocation2 + $0x3c0] sm:$0xff]
          %v2909 = vld [vmem:[#allocation2 + $0x3c8] sm:$0xff]
          %v2910 = vld [vmem:[#allocation2 + $0x3d0] sm:$0xff]
          %v2911 = vld [vmem:[#allocation2 + $0x3d8] sm:$0xff]
          %v2912 = vld [vmem:[#allocation2 + $0x3e0] sm:$0xff]
          %v2913 = vld [vmem:[#allocation2 + $0x3e8] sm:$0xff]
          %v2914 = vld [vmem:[#allocation2 + $0x3f0] sm:$0xff]
          %v2915 = vld [vmem:[#allocation2 + $0x3f8] sm:$0xff]
          %v2916 = vpack.c.bf16 %v2792, %v2788
          %v2917 = vpack.c.bf16 %v2793, %v2789
          %v2918 = vpack.c.bf16 %v2794, %v2790
          %v2919 = vpack.c.bf16 %v2795, %v2791
          %v2920 = vpack.c.bf16 %v2800, %v2796
          %v2921 = vpack.c.bf16 %v2801, %v2797
          %v2922 = vpack.c.bf16 %v2802, %v2798
          %v2923 = vpack.c.bf16 %v2803, %v2799
          %v2924 = vpack.c.bf16 %v2808, %v2804
          %v2925 = vpack.c.bf16 %v2809, %v2805
          %v2926 = vpack.c.bf16 %v2810, %v2806
          %v2927 = vpack.c.bf16 %v2811, %v2807
          %v2928 = vpack.c.bf16 %v2816, %v2812
          %v2929 = vpack.c.bf16 %v2817, %v2813
          %v2930 = vpack.c.bf16 %v2818, %v2814
          %v2931 = vpack.c.bf16 %v2819, %v2815
          %v2932 = vpack.c.bf16 %v2824, %v2820
          %v2933 = vpack.c.bf16 %v2825, %v2821
          %v2934 = vpack.c.bf16 %v2826, %v2822
          %v2935 = vpack.c.bf16 %v2827, %v2823
          %v2936 = vpack.c.bf16 %v2832, %v2828
          %v2937 = vpack.c.bf16 %v2833, %v2829
          %v2938 = vpack.c.bf16 %v2834, %v2830
          %v2939 = vpack.c.bf16 %v2835, %v2831
          %v2940 = vpack.c.bf16 %v2840, %v2836
          %v2941 = vpack.c.bf16 %v2841, %v2837
          %v2942 = vpack.c.bf16 %v2842, %v2838
          %v2943 = vpack.c.bf16 %v2843, %v2839
          %v2944 = vpack.c.bf16 %v2848, %v2844
          %v2945 = vpack.c.bf16 %v2849, %v2845
          %v2946 = vpack.c.bf16 %v2850, %v2846
          %v2947 = vpack.c.bf16 %v2851, %v2847
          %v2948 = vpack.c.bf16 %v2856, %v2852
          %v2949 = vpack.c.bf16 %v2857, %v2853
          %v2950 = vpack.c.bf16 %v2858, %v2854
          %v2951 = vpack.c.bf16 %v2859, %v2855
          %v2952 = vpack.c.bf16 %v2864, %v2860
          %v2953 = vpack.c.bf16 %v2865, %v2861
          %v2954 = vpack.c.bf16 %v2866, %v2862
          %v2955 = vpack.c.bf16 %v2867, %v2863
          %v2956 = vpack.c.bf16 %v2872, %v2868
          %v2957 = vpack.c.bf16 %v2873, %v2869
          %v2958 = vpack.c.bf16 %v2874, %v2870
          %v2959 = vpack.c.bf16 %v2875, %v2871
          %v2960 = vpack.c.bf16 %v2880, %v2876
          %v2961 = vpack.c.bf16 %v2881, %v2877
          %v2962 = vpack.c.bf16 %v2882, %v2878
          %v2963 = vpack.c.bf16 %v2883, %v2879
          %v2964 = vpack.c.bf16 %v2888, %v2884
          %v2965 = vpack.c.bf16 %v2889, %v2885
          %v2966 = vpack.c.bf16 %v2890, %v2886
          %v2967 = vpack.c.bf16 %v2891, %v2887
          %v2968 = vpack.c.bf16 %v2896, %v2892
          %v2969 = vpack.c.bf16 %v2897, %v2893
          %v2970 = vpack.c.bf16 %v2898, %v2894
          %v2971 = vpack.c.bf16 %v2899, %v2895
          %v2972 = vpack.c.bf16 %v2904, %v2900
          %v2973 = vpack.c.bf16 %v2905, %v2901
          %v2974 = vpack.c.bf16 %v2906, %v2902
          %v2975 = vpack.c.bf16 %v2907, %v2903
          %v2976 = vpack.c.bf16 %v2912, %v2908
          %v2977 = vpack.c.bf16 %v2913, %v2909
          %v2978 = vpack.c.bf16 %v2914, %v2910
          %v2979 = vpack.c.bf16 %v2915, %v2911
          %v2980 = vld [vmem:[#allocation8] sm:$0xff]
          %v2981 = vld [vmem:[#allocation8 + $0x8] sm:$0xff]
          %v2982 = vld [vmem:[#allocation8 + $0x10] sm:$0xff]
          %v2983 = vld [vmem:[#allocation8 + $0x18] sm:$0xff]
          %v2984 = vld [vmem:[#allocation8 + $0x20] sm:$0xff]
          %v2985 = vld [vmem:[#allocation8 + $0x28] sm:$0xff]
          %v2986 = vld [vmem:[#allocation8 + $0x30] sm:$0xff]
          %v2987 = vld [vmem:[#allocation8 + $0x38] sm:$0xff]
          %v2988 = vld [vmem:[#allocation8 + $0x40] sm:$0xff]
          %v2989 = vld [vmem:[#allocation8 + $0x48] sm:$0xff]
          %v2990 = vld [vmem:[#allocation8 + $0x50] sm:$0xff]
          %v2991 = vld [vmem:[#allocation8 + $0x58] sm:$0xff]
          %v2992 = vld [vmem:[#allocation8 + $0x60] sm:$0xff]
          %v2993 = vld [vmem:[#allocation8 + $0x68] sm:$0xff]
          %v2994 = vld [vmem:[#allocation8 + $0x70] sm:$0xff]
          %v2995 = vld [vmem:[#allocation8 + $0x78] sm:$0xff]
          %v2996 = vld [vmem:[#allocation8 + $0x80] sm:$0xff]
          %v2997 = vld [vmem:[#allocation8 + $0x88] sm:$0xff]
          %v2998 = vld [vmem:[#allocation8 + $0x90] sm:$0xff]
          %v2999 = vld [vmem:[#allocation8 + $0x98] sm:$0xff]
          %v3000 = vld [vmem:[#allocation8 + $0xa0] sm:$0xff]
          %v3001 = vld [vmem:[#allocation8 + $0xa8] sm:$0xff]
          %v3002 = vld [vmem:[#allocation8 + $0xb0] sm:$0xff]
          %v3003 = vld [vmem:[#allocation8 + $0xb8] sm:$0xff]
          %v3004 = vld [vmem:[#allocation8 + $0xc0] sm:$0xff]
          %v3005 = vld [vmem:[#allocation8 + $0xc8] sm:$0xff]
          %v3006 = vld [vmem:[#allocation8 + $0xd0] sm:$0xff]
          %v3007 = vld [vmem:[#allocation8 + $0xd8] sm:$0xff]
          %v3008 = vld [vmem:[#allocation8 + $0xe0] sm:$0xff]
          %v3009 = vld [vmem:[#allocation8 + $0xe8] sm:$0xff]
          %v3010 = vld [vmem:[#allocation8 + $0xf0] sm:$0xff]
          %v3011 = vld [vmem:[#allocation8 + $0xf8] sm:$0xff]
          %v3012 = vld [vmem:[#allocation8 + $0x100] sm:$0xff]
          %v3013 = vld [vmem:[#allocation8 + $0x108] sm:$0xff]
          %v3014 = vld [vmem:[#allocation8 + $0x110] sm:$0xff]
          %v3015 = vld [vmem:[#allocation8 + $0x118] sm:$0xff]
          %v3016 = vld [vmem:[#allocation8 + $0x120] sm:$0xff]
          %v3017 = vld [vmem:[#allocation8 + $0x128] sm:$0xff]
          %v3018 = vld [vmem:[#allocation8 + $0x130] sm:$0xff]
          %v3019 = vld [vmem:[#allocation8 + $0x138] sm:$0xff]
          %v3020 = vld [vmem:[#allocation8 + $0x140] sm:$0xff]
          %v3021 = vld [vmem:[#allocation8 + $0x148] sm:$0xff]
          %v3022 = vld [vmem:[#allocation8 + $0x150] sm:$0xff]
          %v3023 = vld [vmem:[#allocation8 + $0x158] sm:$0xff]
          %v3024 = vld [vmem:[#allocation8 + $0x160] sm:$0xff]
          %v3025 = vld [vmem:[#allocation8 + $0x168] sm:$0xff]
          %v3026 = vld [vmem:[#allocation8 + $0x170] sm:$0xff]
          %v3027 = vld [vmem:[#allocation8 + $0x178] sm:$0xff]
          %v3028 = vld [vmem:[#allocation8 + $0x180] sm:$0xff]
          %v3029 = vld [vmem:[#allocation8 + $0x188] sm:$0xff]
          %v3030 = vld [vmem:[#allocation8 + $0x190] sm:$0xff]
          %v3031 = vld [vmem:[#allocation8 + $0x198] sm:$0xff]
          %v3032 = vld [vmem:[#allocation8 + $0x1a0] sm:$0xff]
          %v3033 = vld [vmem:[#allocation8 + $0x1a8] sm:$0xff]
          %v3034 = vld [vmem:[#allocation8 + $0x1b0] sm:$0xff]
          %v3035 = vld [vmem:[#allocation8 + $0x1b8] sm:$0xff]
          %v3036 = vld [vmem:[#allocation8 + $0x1c0] sm:$0xff]
          %v3037 = vld [vmem:[#allocation8 + $0x1c8] sm:$0xff]
          %v3038 = vld [vmem:[#allocation8 + $0x1d0] sm:$0xff]
          %v3039 = vld [vmem:[#allocation8 + $0x1d8] sm:$0xff]
          %v3040 = vld [vmem:[#allocation8 + $0x1e0] sm:$0xff]
          %v3041 = vld [vmem:[#allocation8 + $0x1e8] sm:$0xff]
          %v3042 = vld [vmem:[#allocation8 + $0x1f0] sm:$0xff]
          %v3043 = vld [vmem:[#allocation8 + $0x1f8] sm:$0xff]
          %v3044 = vld [vmem:[#allocation8 + $0x200] sm:$0xff]
          %v3045 = vld [vmem:[#allocation8 + $0x208] sm:$0xff]
          %v3046 = vld [vmem:[#allocation8 + $0x210] sm:$0xff]
          %v3047 = vld [vmem:[#allocation8 + $0x218] sm:$0xff]
          %v3048 = vld [vmem:[#allocation8 + $0x220] sm:$0xff]
          %v3049 = vld [vmem:[#allocation8 + $0x228] sm:$0xff]
          %v3050 = vld [vmem:[#allocation8 + $0x230] sm:$0xff]
          %v3051 = vld [vmem:[#allocation8 + $0x238] sm:$0xff]
          %v3052 = vld [vmem:[#allocation8 + $0x240] sm:$0xff]
          %v3053 = vld [vmem:[#allocation8 + $0x248] sm:$0xff]
          %v3054 = vld [vmem:[#allocation8 + $0x250] sm:$0xff]
          %v3055 = vld [vmem:[#allocation8 + $0x258] sm:$0xff]
          %v3056 = vld [vmem:[#allocation8 + $0x260] sm:$0xff]
          %v3057 = vld [vmem:[#allocation8 + $0x268] sm:$0xff]
          %v3058 = vld [vmem:[#allocation8 + $0x270] sm:$0xff]
          %v3059 = vld [vmem:[#allocation8 + $0x278] sm:$0xff]
          %v3060 = vld [vmem:[#allocation8 + $0x280] sm:$0xff]
          %v3061 = vld [vmem:[#allocation8 + $0x288] sm:$0xff]
          %v3062 = vld [vmem:[#allocation8 + $0x290] sm:$0xff]
          %v3063 = vld [vmem:[#allocation8 + $0x298] sm:$0xff]
          %v3064 = vld [vmem:[#allocation8 + $0x2a0] sm:$0xff]
          %v3065 = vld [vmem:[#allocation8 + $0x2a8] sm:$0xff]
          %v3066 = vld [vmem:[#allocation8 + $0x2b0] sm:$0xff]
          %v3067 = vld [vmem:[#allocation8 + $0x2b8] sm:$0xff]
          %v3068 = vld [vmem:[#allocation8 + $0x2c0] sm:$0xff]
          %v3069 = vld [vmem:[#allocation8 + $0x2c8] sm:$0xff]
          %v3070 = vld [vmem:[#allocation8 + $0x2d0] sm:$0xff]
          %v3071 = vld [vmem:[#allocation8 + $0x2d8] sm:$0xff]
          %v3072 = vld [vmem:[#allocation8 + $0x2e0] sm:$0xff]
          %v3073 = vld [vmem:[#allocation8 + $0x2e8] sm:$0xff]
          %v3074 = vld [vmem:[#allocation8 + $0x2f0] sm:$0xff]
          %v3075 = vld [vmem:[#allocation8 + $0x2f8] sm:$0xff]
          %v3076 = vld [vmem:[#allocation8 + $0x300] sm:$0xff]
          %v3077 = vld [vmem:[#allocation8 + $0x308] sm:$0xff]
          %v3078 = vld [vmem:[#allocation8 + $0x310] sm:$0xff]
          %v3079 = vld [vmem:[#allocation8 + $0x318] sm:$0xff]
          %v3080 = vld [vmem:[#allocation8 + $0x320] sm:$0xff]
          %v3081 = vld [vmem:[#allocation8 + $0x328] sm:$0xff]
          %v3082 = vld [vmem:[#allocation8 + $0x330] sm:$0xff]
          %v3083 = vld [vmem:[#allocation8 + $0x338] sm:$0xff]
          %v3084 = vld [vmem:[#allocation8 + $0x340] sm:$0xff]
          %v3085 = vld [vmem:[#allocation8 + $0x348] sm:$0xff]
          %v3086 = vld [vmem:[#allocation8 + $0x350] sm:$0xff]
          %v3087 = vld [vmem:[#allocation8 + $0x358] sm:$0xff]
          %v3088 = vld [vmem:[#allocation8 + $0x360] sm:$0xff]
          %v3089 = vld [vmem:[#allocation8 + $0x368] sm:$0xff]
          %v3090 = vld [vmem:[#allocation8 + $0x370] sm:$0xff]
          %v3091 = vld [vmem:[#allocation8 + $0x378] sm:$0xff]
          %v3092 = vld [vmem:[#allocation8 + $0x380] sm:$0xff]
          %v3093 = vld [vmem:[#allocation8 + $0x388] sm:$0xff]
          %v3094 = vld [vmem:[#allocation8 + $0x390] sm:$0xff]
          %v3095 = vld [vmem:[#allocation8 + $0x398] sm:$0xff]
          %v3096 = vld [vmem:[#allocation8 + $0x3a0] sm:$0xff]
          %v3097 = vld [vmem:[#allocation8 + $0x3a8] sm:$0xff]
          %v3098 = vld [vmem:[#allocation8 + $0x3b0] sm:$0xff]
          %v3099 = vld [vmem:[#allocation8 + $0x3b8] sm:$0xff]
          %v3100 = vld [vmem:[#allocation8 + $0x3c0] sm:$0xff]
          %v3101 = vld [vmem:[#allocation8 + $0x3c8] sm:$0xff]
          %v3102 = vld [vmem:[#allocation8 + $0x3d0] sm:$0xff]
          %v3103 = vld [vmem:[#allocation8 + $0x3d8] sm:$0xff]
          %v3104 = vld [vmem:[#allocation8 + $0x3e0] sm:$0xff]
          %v3105 = vld [vmem:[#allocation8 + $0x3e8] sm:$0xff]
          %v3106 = vld [vmem:[#allocation8 + $0x3f0] sm:$0xff]
          %v3107 = vld [vmem:[#allocation8 + $0x3f8] sm:$0xff]
          %v3108 = vld [vmem:[#allocation9] sm:$0xf]
          %v3110 = vlaneseq
          %v3111 = vshrl.u32 %v3110, 7
          %v3112 = vsub.s32 0, %v3111
          %v3113 = vrot.slane %v3108, %v3112
          %v3114 = vlaneseq
          %v3115 = vshrl.u32 %v3114, 7
          %v3116 = vsub.s32 1, %v3115
          %v3117 = vrot.slane %v3108, %v3116
          %v3118 = vlaneseq
          %v3119 = vshrl.u32 %v3118, 7
          %v3120 = vsub.s32 2, %v3119
          %v3121 = vrot.slane %v3108, %v3120
          %v3122 = vlaneseq
          %v3123 = vshrl.u32 %v3122, 7
          %v3124 = vsub.s32 3, %v3123
          %v3125 = vrot.slane %v3108, %v3124
          %v3258 = vunpack.c.l.b16 %v2980
          %v3259 = vunpack.c.h.b16 %v2980
          %v3260 = vunpack.c.l.b16 %v2981
          %v3261 = vunpack.c.h.b16 %v2981
          %v3262 = vunpack.c.l.b16 %v2982
          %v3263 = vunpack.c.h.b16 %v2982
          %v3264 = vunpack.c.l.b16 %v2983
          %v3265 = vunpack.c.h.b16 %v2983
          %v3266 = vunpack.c.l.b16 %v2984
          %v3267 = vunpack.c.h.b16 %v2984
          %v3268 = vunpack.c.l.b16 %v2985
          %v3269 = vunpack.c.h.b16 %v2985
          %v3270 = vunpack.c.l.b16 %v2986
          %v3271 = vunpack.c.h.b16 %v2986
          %v3272 = vunpack.c.l.b16 %v2987
          %v3273 = vunpack.c.h.b16 %v2987
          %v3274 = vunpack.c.l.b16 %v2988
          %v3275 = vunpack.c.h.b16 %v2988
          %v3276 = vunpack.c.l.b16 %v2989
          %v3277 = vunpack.c.h.b16 %v2989
          %v3278 = vunpack.c.l.b16 %v2990
          %v3279 = vunpack.c.h.b16 %v2990
          %v3280 = vunpack.c.l.b16 %v2991
          %v3281 = vunpack.c.h.b16 %v2991
          %v3282 = vunpack.c.l.b16 %v2992
          %v3283 = vunpack.c.h.b16 %v2992
          %v3284 = vunpack.c.l.b16 %v2993
          %v3285 = vunpack.c.h.b16 %v2993
          %v3286 = vunpack.c.l.b16 %v2994
          %v3287 = vunpack.c.h.b16 %v2994
          %v3288 = vunpack.c.l.b16 %v2995
          %v3289 = vunpack.c.h.b16 %v2995
          %v3290 = vunpack.c.l.b16 %v2996
          %v3291 = vunpack.c.h.b16 %v2996
          %v3292 = vunpack.c.l.b16 %v2997
          %v3293 = vunpack.c.h.b16 %v2997
          %v3294 = vunpack.c.l.b16 %v2998
          %v3295 = vunpack.c.h.b16 %v2998
          %v3296 = vunpack.c.l.b16 %v2999
          %v3297 = vunpack.c.h.b16 %v2999
          %v3298 = vunpack.c.l.b16 %v3000
          %v3299 = vunpack.c.h.b16 %v3000
          %v3300 = vunpack.c.l.b16 %v3001
          %v3301 = vunpack.c.h.b16 %v3001
          %v3302 = vunpack.c.l.b16 %v3002
          %v3303 = vunpack.c.h.b16 %v3002
          %v3304 = vunpack.c.l.b16 %v3003
          %v3305 = vunpack.c.h.b16 %v3003
          %v3306 = vunpack.c.l.b16 %v3004
          %v3307 = vunpack.c.h.b16 %v3004
          %v3308 = vunpack.c.l.b16 %v3005
          %v3309 = vunpack.c.h.b16 %v3005
          %v3310 = vunpack.c.l.b16 %v3006
          %v3311 = vunpack.c.h.b16 %v3006
          %v3312 = vunpack.c.l.b16 %v3007
          %v3313 = vunpack.c.h.b16 %v3007
          %v3314 = vunpack.c.l.b16 %v3008
          %v3315 = vunpack.c.h.b16 %v3008
          %v3316 = vunpack.c.l.b16 %v3009
          %v3317 = vunpack.c.h.b16 %v3009
          %v3318 = vunpack.c.l.b16 %v3010
          %v3319 = vunpack.c.h.b16 %v3010
          %v3320 = vunpack.c.l.b16 %v3011
          %v3321 = vunpack.c.h.b16 %v3011
          %v3322 = vunpack.c.l.b16 %v3012
          %v3323 = vunpack.c.h.b16 %v3012
          %v3324 = vunpack.c.l.b16 %v3013
          %v3325 = vunpack.c.h.b16 %v3013
          %v3326 = vunpack.c.l.b16 %v3014
          %v3327 = vunpack.c.h.b16 %v3014
          %v3328 = vunpack.c.l.b16 %v3015
          %v3329 = vunpack.c.h.b16 %v3015
          %v3330 = vunpack.c.l.b16 %v3016
          %v3331 = vunpack.c.h.b16 %v3016
          %v3332 = vunpack.c.l.b16 %v3017
          %v3333 = vunpack.c.h.b16 %v3017
          %v3334 = vunpack.c.l.b16 %v3018
          %v3335 = vunpack.c.h.b16 %v3018
          %v3336 = vunpack.c.l.b16 %v3019
          %v3337 = vunpack.c.h.b16 %v3019
          %v3338 = vunpack.c.l.b16 %v3020
          %v3339 = vunpack.c.h.b16 %v3020
          %v3340 = vunpack.c.l.b16 %v3021
          %v3341 = vunpack.c.h.b16 %v3021
          %v3342 = vunpack.c.l.b16 %v3022
          %v3343 = vunpack.c.h.b16 %v3022
          %v3344 = vunpack.c.l.b16 %v3023
          %v3345 = vunpack.c.h.b16 %v3023
          %v3346 = vunpack.c.l.b16 %v3024
          %v3347 = vunpack.c.h.b16 %v3024
          %v3348 = vunpack.c.l.b16 %v3025
          %v3349 = vunpack.c.h.b16 %v3025
          %v3350 = vunpack.c.l.b16 %v3026
          %v3351 = vunpack.c.h.b16 %v3026
          %v3352 = vunpack.c.l.b16 %v3027
          %v3353 = vunpack.c.h.b16 %v3027
          %v3354 = vunpack.c.l.b16 %v3028
          %v3355 = vunpack.c.h.b16 %v3028
          %v3356 = vunpack.c.l.b16 %v3029
          %v3357 = vunpack.c.h.b16 %v3029
          %v3358 = vunpack.c.l.b16 %v3030
          %v3359 = vunpack.c.h.b16 %v3030
          %v3360 = vunpack.c.l.b16 %v3031
          %v3361 = vunpack.c.h.b16 %v3031
          %v3362 = vunpack.c.l.b16 %v3032
          %v3363 = vunpack.c.h.b16 %v3032
          %v3364 = vunpack.c.l.b16 %v3033
          %v3365 = vunpack.c.h.b16 %v3033
          %v3366 = vunpack.c.l.b16 %v3034
          %v3367 = vunpack.c.h.b16 %v3034
          %v3368 = vunpack.c.l.b16 %v3035
          %v3369 = vunpack.c.h.b16 %v3035
          %v3370 = vunpack.c.l.b16 %v3036
          %v3371 = vunpack.c.h.b16 %v3036
          %v3372 = vunpack.c.l.b16 %v3037
          %v3373 = vunpack.c.h.b16 %v3037
          %v3374 = vunpack.c.l.b16 %v3038
          %v3375 = vunpack.c.h.b16 %v3038
          %v3376 = vunpack.c.l.b16 %v3039
          %v3377 = vunpack.c.h.b16 %v3039
          %v3378 = vunpack.c.l.b16 %v3040
          %v3379 = vunpack.c.h.b16 %v3040
          %v3380 = vunpack.c.l.b16 %v3041
          %v3381 = vunpack.c.h.b16 %v3041
          %v3382 = vunpack.c.l.b16 %v3042
          %v3383 = vunpack.c.h.b16 %v3042
          %v3384 = vunpack.c.l.b16 %v3043
          %v3385 = vunpack.c.h.b16 %v3043
          %v3386 = vunpack.c.l.b16 %v3044
          %v3387 = vunpack.c.h.b16 %v3044
          %v3388 = vunpack.c.l.b16 %v3045
          %v3389 = vunpack.c.h.b16 %v3045
          %v3390 = vunpack.c.l.b16 %v3046
          %v3391 = vunpack.c.h.b16 %v3046
          %v3392 = vunpack.c.l.b16 %v3047
          %v3393 = vunpack.c.h.b16 %v3047
          %v3394 = vunpack.c.l.b16 %v3048
          %v3395 = vunpack.c.h.b16 %v3048
          %v3396 = vunpack.c.l.b16 %v3049
          %v3397 = vunpack.c.h.b16 %v3049
          %v3398 = vunpack.c.l.b16 %v3050
          %v3399 = vunpack.c.h.b16 %v3050
          %v3400 = vunpack.c.l.b16 %v3051
          %v3401 = vunpack.c.h.b16 %v3051
          %v3402 = vunpack.c.l.b16 %v3052
          %v3403 = vunpack.c.h.b16 %v3052
          %v3404 = vunpack.c.l.b16 %v3053
          %v3405 = vunpack.c.h.b16 %v3053
          %v3406 = vunpack.c.l.b16 %v3054
          %v3407 = vunpack.c.h.b16 %v3054
          %v3408 = vunpack.c.l.b16 %v3055
          %v3409 = vunpack.c.h.b16 %v3055
          %v3410 = vunpack.c.l.b16 %v3056
          %v3411 = vunpack.c.h.b16 %v3056
          %v3412 = vunpack.c.l.b16 %v3057
          %v3413 = vunpack.c.h.b16 %v3057
          %v3414 = vunpack.c.l.b16 %v3058
          %v3415 = vunpack.c.h.b16 %v3058
          %v3416 = vunpack.c.l.b16 %v3059
          %v3417 = vunpack.c.h.b16 %v3059
          %v3418 = vunpack.c.l.b16 %v3060
          %v3419 = vunpack.c.h.b16 %v3060
          %v3420 = vunpack.c.l.b16 %v3061
          %v3421 = vunpack.c.h.b16 %v3061
          %v3422 = vunpack.c.l.b16 %v3062
          %v3423 = vunpack.c.h.b16 %v3062
          %v3424 = vunpack.c.l.b16 %v3063
          %v3425 = vunpack.c.h.b16 %v3063
          %v3426 = vunpack.c.l.b16 %v3064
          %v3427 = vunpack.c.h.b16 %v3064
          %v3428 = vunpack.c.l.b16 %v3065
          %v3429 = vunpack.c.h.b16 %v3065
          %v3430 = vunpack.c.l.b16 %v3066
          %v3431 = vunpack.c.h.b16 %v3066
          %v3432 = vunpack.c.l.b16 %v3067
          %v3433 = vunpack.c.h.b16 %v3067
          %v3434 = vunpack.c.l.b16 %v3068
          %v3435 = vunpack.c.h.b16 %v3068
          %v3436 = vunpack.c.l.b16 %v3069
          %v3437 = vunpack.c.h.b16 %v3069
          %v3438 = vunpack.c.l.b16 %v3070
          %v3439 = vunpack.c.h.b16 %v3070
          %v3440 = vunpack.c.l.b16 %v3071
          %v3441 = vunpack.c.h.b16 %v3071
          %v3442 = vunpack.c.l.b16 %v3072
          %v3443 = vunpack.c.h.b16 %v3072
          %v3444 = vunpack.c.l.b16 %v3073
          %v3445 = vunpack.c.h.b16 %v3073
          %v3446 = vunpack.c.l.b16 %v3074
          %v3447 = vunpack.c.h.b16 %v3074
          %v3448 = vunpack.c.l.b16 %v3075
          %v3449 = vunpack.c.h.b16 %v3075
          %v3450 = vunpack.c.l.b16 %v3076
          %v3451 = vunpack.c.h.b16 %v3076
          %v3452 = vunpack.c.l.b16 %v3077
          %v3453 = vunpack.c.h.b16 %v3077
          %v3454 = vunpack.c.l.b16 %v3078
          %v3455 = vunpack.c.h.b16 %v3078
          %v3456 = vunpack.c.l.b16 %v3079
          %v3457 = vunpack.c.h.b16 %v3079
          %v3458 = vunpack.c.l.b16 %v3080
          %v3459 = vunpack.c.h.b16 %v3080
          %v3460 = vunpack.c.l.b16 %v3081
          %v3461 = vunpack.c.h.b16 %v3081
          %v3462 = vunpack.c.l.b16 %v3082
          %v3463 = vunpack.c.h.b16 %v3082
          %v3464 = vunpack.c.l.b16 %v3083
          %v3465 = vunpack.c.h.b16 %v3083
          %v3466 = vunpack.c.l.b16 %v3084
          %v3467 = vunpack.c.h.b16 %v3084
          %v3468 = vunpack.c.l.b16 %v3085
          %v3469 = vunpack.c.h.b16 %v3085
          %v3470 = vunpack.c.l.b16 %v3086
          %v3471 = vunpack.c.h.b16 %v3086
          %v3472 = vunpack.c.l.b16 %v3087
          %v3473 = vunpack.c.h.b16 %v3087
          %v3474 = vunpack.c.l.b16 %v3088
          %v3475 = vunpack.c.h.b16 %v3088
          %v3476 = vunpack.c.l.b16 %v3089
          %v3477 = vunpack.c.h.b16 %v3089
          %v3478 = vunpack.c.l.b16 %v3090
          %v3479 = vunpack.c.h.b16 %v3090
          %v3480 = vunpack.c.l.b16 %v3091
          %v3481 = vunpack.c.h.b16 %v3091
          %v3482 = vunpack.c.l.b16 %v3092
          %v3483 = vunpack.c.h.b16 %v3092
          %v3484 = vunpack.c.l.b16 %v3093
          %v3485 = vunpack.c.h.b16 %v3093
          %v3486 = vunpack.c.l.b16 %v3094
          %v3487 = vunpack.c.h.b16 %v3094
          %v3488 = vunpack.c.l.b16 %v3095
          %v3489 = vunpack.c.h.b16 %v3095
          %v3490 = vunpack.c.l.b16 %v3096
          %v3491 = vunpack.c.h.b16 %v3096
          %v3492 = vunpack.c.l.b16 %v3097
          %v3493 = vunpack.c.h.b16 %v3097
          %v3494 = vunpack.c.l.b16 %v3098
          %v3495 = vunpack.c.h.b16 %v3098
          %v3496 = vunpack.c.l.b16 %v3099
          %v3497 = vunpack.c.h.b16 %v3099
          %v3498 = vunpack.c.l.b16 %v3100
          %v3499 = vunpack.c.h.b16 %v3100
          %v3500 = vunpack.c.l.b16 %v3101
          %v3501 = vunpack.c.h.b16 %v3101
          %v3502 = vunpack.c.l.b16 %v3102
          %v3503 = vunpack.c.h.b16 %v3102
          %v3504 = vunpack.c.l.b16 %v3103
          %v3505 = vunpack.c.h.b16 %v3103
          %v3506 = vunpack.c.l.b16 %v3104
          %v3507 = vunpack.c.h.b16 %v3104
          %v3508 = vunpack.c.l.b16 %v3105
          %v3509 = vunpack.c.h.b16 %v3105
          %v3510 = vunpack.c.l.b16 %v3106
          %v3511 = vunpack.c.h.b16 %v3106
          %v3512 = vunpack.c.l.b16 %v3107
          %v3513 = vunpack.c.h.b16 %v3107
          %v3514 = vpack.c.b16 %v3262, %v3258
          %v3515 = vpack.c.b16 %v3263, %v3259
          %v3516 = vpack.c.b16 %v3264, %v3260
          %v3517 = vpack.c.b16 %v3265, %v3261
          %v3518 = vpack.c.b16 %v3270, %v3266
          %v3519 = vpack.c.b16 %v3271, %v3267
          %v3520 = vpack.c.b16 %v3272, %v3268
          %v3521 = vpack.c.b16 %v3273, %v3269
          %v3522 = vpack.c.b16 %v3278, %v3274
          %v3523 = vpack.c.b16 %v3279, %v3275
          %v3524 = vpack.c.b16 %v3280, %v3276
          %v3525 = vpack.c.b16 %v3281, %v3277
          %v3526 = vpack.c.b16 %v3286, %v3282
          %v3527 = vpack.c.b16 %v3287, %v3283
          %v3528 = vpack.c.b16 %v3288, %v3284
          %v3529 = vpack.c.b16 %v3289, %v3285
          %v3530 = vpack.c.b16 %v3294, %v3290
          %v3531 = vpack.c.b16 %v3295, %v3291
          %v3532 = vpack.c.b16 %v3296, %v3292
          %v3533 = vpack.c.b16 %v3297, %v3293
          %v3534 = vpack.c.b16 %v3302, %v3298
          %v3535 = vpack.c.b16 %v3303, %v3299
          %v3536 = vpack.c.b16 %v3304, %v3300
          %v3537 = vpack.c.b16 %v3305, %v3301
          %v3538 = vpack.c.b16 %v3310, %v3306
          %v3539 = vpack.c.b16 %v3311, %v3307
          %v3540 = vpack.c.b16 %v3312, %v3308
          %v3541 = vpack.c.b16 %v3313, %v3309
          %v3542 = vpack.c.b16 %v3318, %v3314
          %v3543 = vpack.c.b16 %v3319, %v3315
          %v3544 = vpack.c.b16 %v3320, %v3316
          %v3545 = vpack.c.b16 %v3321, %v3317
          %v3546 = vpack.c.b16 %v3326, %v3322
          %v3547 = vpack.c.b16 %v3327, %v3323
          %v3548 = vpack.c.b16 %v3328, %v3324
          %v3549 = vpack.c.b16 %v3329, %v3325
          %v3550 = vpack.c.b16 %v3334, %v3330
          %v3551 = vpack.c.b16 %v3335, %v3331
          %v3552 = vpack.c.b16 %v3336, %v3332
          %v3553 = vpack.c.b16 %v3337, %v3333
          %v3554 = vpack.c.b16 %v3342, %v3338
          %v3555 = vpack.c.b16 %v3343, %v3339
          %v3556 = vpack.c.b16 %v3344, %v3340
          %v3557 = vpack.c.b16 %v3345, %v3341
          %v3558 = vpack.c.b16 %v3350, %v3346
          %v3559 = vpack.c.b16 %v3351, %v3347
          %v3560 = vpack.c.b16 %v3352, %v3348
          %v3561 = vpack.c.b16 %v3353, %v3349
          %v3562 = vpack.c.b16 %v3358, %v3354
          %v3563 = vpack.c.b16 %v3359, %v3355
          %v3564 = vpack.c.b16 %v3360, %v3356
          %v3565 = vpack.c.b16 %v3361, %v3357
          %v3566 = vpack.c.b16 %v3366, %v3362
          %v3567 = vpack.c.b16 %v3367, %v3363
          %v3568 = vpack.c.b16 %v3368, %v3364
          %v3569 = vpack.c.b16 %v3369, %v3365
          %v3570 = vpack.c.b16 %v3374, %v3370
          %v3571 = vpack.c.b16 %v3375, %v3371
          %v3572 = vpack.c.b16 %v3376, %v3372
          %v3573 = vpack.c.b16 %v3377, %v3373
          %v3574 = vpack.c.b16 %v3382, %v3378
          %v3575 = vpack.c.b16 %v3383, %v3379
          %v3576 = vpack.c.b16 %v3384, %v3380
          %v3577 = vpack.c.b16 %v3385, %v3381
          %v3578 = vpack.c.b16 %v3390, %v3386
          %v3579 = vpack.c.b16 %v3391, %v3387
          %v3580 = vpack.c.b16 %v3392, %v3388
          %v3581 = vpack.c.b16 %v3393, %v3389
          %v3582 = vpack.c.b16 %v3398, %v3394
          %v3583 = vpack.c.b16 %v3399, %v3395
          %v3584 = vpack.c.b16 %v3400, %v3396
          %v3585 = vpack.c.b16 %v3401, %v3397
          %v3586 = vpack.c.b16 %v3406, %v3402
          %v3587 = vpack.c.b16 %v3407, %v3403
          %v3588 = vpack.c.b16 %v3408, %v3404
          %v3589 = vpack.c.b16 %v3409, %v3405
          %v3590 = vpack.c.b16 %v3414, %v3410
          %v3591 = vpack.c.b16 %v3415, %v3411
          %v3592 = vpack.c.b16 %v3416, %v3412
          %v3593 = vpack.c.b16 %v3417, %v3413
          %v3594 = vpack.c.b16 %v3422, %v3418
          %v3595 = vpack.c.b16 %v3423, %v3419
          %v3596 = vpack.c.b16 %v3424, %v3420
          %v3597 = vpack.c.b16 %v3425, %v3421
          %v3598 = vpack.c.b16 %v3430, %v3426
          %v3599 = vpack.c.b16 %v3431, %v3427
          %v3600 = vpack.c.b16 %v3432, %v3428
          %v3601 = vpack.c.b16 %v3433, %v3429
          %v3602 = vpack.c.b16 %v3438, %v3434
          %v3603 = vpack.c.b16 %v3439, %v3435
          %v3604 = vpack.c.b16 %v3440, %v3436
          %v3605 = vpack.c.b16 %v3441, %v3437
          %v3606 = vpack.c.b16 %v3446, %v3442
          %v3607 = vpack.c.b16 %v3447, %v3443
          %v3608 = vpack.c.b16 %v3448, %v3444
          %v3609 = vpack.c.b16 %v3449, %v3445
          %v3610 = vpack.c.b16 %v3454, %v3450
          %v3611 = vpack.c.b16 %v3455, %v3451
          %v3612 = vpack.c.b16 %v3456, %v3452
          %v3613 = vpack.c.b16 %v3457, %v3453
          %v3614 = vpack.c.b16 %v3462, %v3458
          %v3615 = vpack.c.b16 %v3463, %v3459
          %v3616 = vpack.c.b16 %v3464, %v3460
          %v3617 = vpack.c.b16 %v3465, %v3461
          %v3618 = vpack.c.b16 %v3470, %v3466
          %v3619 = vpack.c.b16 %v3471, %v3467
          %v3620 = vpack.c.b16 %v3472, %v3468
          %v3621 = vpack.c.b16 %v3473, %v3469
          %v3622 = vpack.c.b16 %v3478, %v3474
          %v3623 = vpack.c.b16 %v3479, %v3475
          %v3624 = vpack.c.b16 %v3480, %v3476
          %v3625 = vpack.c.b16 %v3481, %v3477
          %v3626 = vpack.c.b16 %v3486, %v3482
          %v3627 = vpack.c.b16 %v3487, %v3483
          %v3628 = vpack.c.b16 %v3488, %v3484
          %v3629 = vpack.c.b16 %v3489, %v3485
          %v3630 = vpack.c.b16 %v3494, %v3490
          %v3631 = vpack.c.b16 %v3495, %v3491
          %v3632 = vpack.c.b16 %v3496, %v3492
          %v3633 = vpack.c.b16 %v3497, %v3493
          %v3634 = vpack.c.b16 %v3502, %v3498
          %v3635 = vpack.c.b16 %v3503, %v3499
          %v3636 = vpack.c.b16 %v3504, %v3500
          %v3637 = vpack.c.b16 %v3505, %v3501
          %v3638 = vpack.c.b16 %v3510, %v3506
          %v3639 = vpack.c.b16 %v3511, %v3507
          %v3640 = vpack.c.b16 %v3512, %v3508
          %v3641 = vpack.c.b16 %v3513, %v3509
          %3770 = vmatprep.subr.bf16.mxu0 %v3543
          %3771 = vmatpush1.bf16.msra.mxu0 %v3542
          %3772 = vmatprep.subr.bf16.mxu0 %v3539
          %3773 = vmatpush1.bf16.msra.mxu0 %v3538
          %3774 = vmatprep.subr.bf16.mxu0 %v3535
          %3775 = vmatpush1.bf16.msra.mxu0 %v3534
          %3776 = vmatprep.subr.bf16.mxu0 %v3531
          %3777 = vmatpush1.bf16.msra.mxu0 %v3530
          %3778 = vmatprep.subr.bf16.mxu0 %v3527
          %3779 = vmatpush1.bf16.msra.mxu0 %v3526
          %3780 = vmatprep.subr.bf16.mxu0 %v3523
          %3781 = vmatpush1.bf16.msra.mxu0 %v3522
          %3782 = vmatprep.subr.bf16.mxu0 %v3519
          %3783 = vmatpush1.bf16.msra.mxu0 %v3518
          %3784 = vmatprep.subr.bf16.mxu0 %v3515
          %3785 = vmatpush1.bf16.msra.mxu0 %v3514
          %3786 = vmatprep.subr.bf16.mxu0 %v3575
          %3787 = vmatpush2.bf16.msra.mxu0 %v3574
          %3788 = vmatprep.subr.bf16.mxu0 %v3571
          %3789 = vmatpush2.bf16.msra.mxu0 %v3570
          %3790 = vmatprep.subr.bf16.mxu0 %v3567
          %3791 = vmatpush2.bf16.msra.mxu0 %v3566
          %3792 = vmatprep.subr.bf16.mxu0 %v3563
          %3793 = vmatpush2.bf16.msra.mxu0 %v3562
          %3794 = vmatprep.subr.bf16.mxu0 %v3559
          %3795 = vmatpush2.bf16.msra.mxu0 %v3558
          %3796 = vmatprep.subr.bf16.mxu0 %v3555
          %3797 = vmatpush2.bf16.msra.mxu0 %v3554
          %3798 = vmatprep.subr.bf16.mxu0 %v3551
          %3799 = vmatpush2.bf16.msra.mxu0 %v3550
          %3800 = vmatprep.subr.bf16.mxu0 %v3547
          %3801 = vmatpush2.bf16.msra.mxu0 %v3546
          %3802 = vmatprep.mubr.bf16.mxu0 %v2917
          %3803 = vmatmul.mubr.bf16.gmra.mxu0 %v2916
          %v3804 = vpop.f32.mrf.mxu0
          %v3805 = vadd.f32 %v3113, %v3804
          %v3806 = vpop.f32.mrf.mxu0
          %v3807 = vadd.f32 %v3117, %v3806
          %v3808 = vpop.f32.mrf.mxu0
          %v3809 = vadd.f32 %v3113, %v3808
          %v3810 = vpop.f32.mrf.mxu0
          %v3811 = vadd.f32 %v3117, %v3810
          %3812 = vmatprep.mubr.bf16.mxu0 %v2921
          %3813 = vmatmul.mubr.bf16.gmra.mxu0 %v2920
          %v3814 = vpop.f32.mrf.mxu0
          %v3815 = vadd.f32 %v3113, %v3814
          %v3816 = vpop.f32.mrf.mxu0
          %v3817 = vadd.f32 %v3117, %v3816
          %v3818 = vpop.f32.mrf.mxu0
          %v3819 = vadd.f32 %v3113, %v3818
          %v3820 = vpop.f32.mrf.mxu0
          %v3821 = vadd.f32 %v3117, %v3820
          %3822 = vmatprep.mubr.bf16.mxu0 %v2925
          %3823 = vmatmul.mubr.bf16.gmra.mxu0 %v2924
          %v3824 = vpop.f32.mrf.mxu0
          %v3825 = vadd.f32 %v3113, %v3824
          %v3826 = vpop.f32.mrf.mxu0
          %v3827 = vadd.f32 %v3117, %v3826
          %v3828 = vpop.f32.mrf.mxu0
          %v3829 = vadd.f32 %v3113, %v3828
          %v3830 = vpop.f32.mrf.mxu0
          %v3831 = vadd.f32 %v3117, %v3830
          %3832 = vmatprep.mubr.bf16.mxu0 %v2929
          %3833 = vmatmul.mubr.bf16.gmra.mxu0 %v2928
          %v3834 = vpop.f32.mrf.mxu0
          %v3835 = vadd.f32 %v3113, %v3834
          %v3836 = vpop.f32.mrf.mxu0
          %v3837 = vadd.f32 %v3117, %v3836
          %v3838 = vpop.f32.mrf.mxu0
          %v3839 = vadd.f32 %v3113, %v3838
          %v3840 = vpop.f32.mrf.mxu0
          %v3841 = vadd.f32 %v3117, %v3840
          %3842 = vmatprep.mubr.bf16.mxu0 %v2933
          %3843 = vmatmul.mubr.bf16.gmra.mxu0 %v2932
          %v3844 = vpop.f32.mrf.mxu0
          %v3845 = vadd.f32 %v3113, %v3844
          %v3846 = vpop.f32.mrf.mxu0
          %v3847 = vadd.f32 %v3117, %v3846
          %v3848 = vpop.f32.mrf.mxu0
          %v3849 = vadd.f32 %v3113, %v3848
          %v3850 = vpop.f32.mrf.mxu0
          %v3851 = vadd.f32 %v3117, %v3850
          %3852 = vmatprep.mubr.bf16.mxu0 %v2937
          %3853 = vmatmul.mubr.bf16.gmra.mxu0 %v2936
          %v3854 = vpop.f32.mrf.mxu0
          %v3855 = vadd.f32 %v3113, %v3854
          %v3856 = vpop.f32.mrf.mxu0
          %v3857 = vadd.f32 %v3117, %v3856
          %v3858 = vpop.f32.mrf.mxu0
          %v3859 = vadd.f32 %v3113, %v3858
          %v3860 = vpop.f32.mrf.mxu0
          %v3861 = vadd.f32 %v3117, %v3860
          %3862 = vmatprep.mubr.bf16.mxu0 %v2941
          %3863 = vmatmul.mubr.bf16.gmra.mxu0 %v2940
          %v3864 = vpop.f32.mrf.mxu0
          %v3865 = vadd.f32 %v3113, %v3864
          %v3866 = vpop.f32.mrf.mxu0
          %v3867 = vadd.f32 %v3117, %v3866
          %v3868 = vpop.f32.mrf.mxu0
          %v3869 = vadd.f32 %v3113, %v3868
          %v3870 = vpop.f32.mrf.mxu0
          %v3871 = vadd.f32 %v3117, %v3870
          %3872 = vmatprep.mubr.bf16.mxu0 %v2945
          %3873 = vmatmul.mubr.bf16.gmra.mxu0 %v2944
          %v3874 = vpop.f32.mrf.mxu0
          %v3875 = vadd.f32 %v3113, %v3874
          %v3876 = vpop.f32.mrf.mxu0
          %v3877 = vadd.f32 %v3117, %v3876
          %v3878 = vpop.f32.mrf.mxu0
          %v3879 = vadd.f32 %v3113, %v3878
          %v3880 = vpop.f32.mrf.mxu0
          %v3881 = vadd.f32 %v3117, %v3880
          %3882 = vmatprep.mubr.bf16.mxu0 %v2949
          %3883 = vmatmul.mubr.bf16.gmra.mxu0 %v2948
          %v3884 = vpop.f32.mrf.mxu0
          %v3885 = vadd.f32 %v3113, %v3884
          %v3886 = vpop.f32.mrf.mxu0
          %v3887 = vadd.f32 %v3117, %v3886
          %v3888 = vpop.f32.mrf.mxu0
          %v3889 = vadd.f32 %v3113, %v3888
          %v3890 = vpop.f32.mrf.mxu0
          %v3891 = vadd.f32 %v3117, %v3890
          %3892 = vmatprep.mubr.bf16.mxu0 %v2953
          %3893 = vmatmul.mubr.bf16.gmra.mxu0 %v2952
          %v3894 = vpop.f32.mrf.mxu0
          %v3895 = vadd.f32 %v3113, %v3894
          %v3896 = vpop.f32.mrf.mxu0
          %v3897 = vadd.f32 %v3117, %v3896
          %v3898 = vpop.f32.mrf.mxu0
          %v3899 = vadd.f32 %v3113, %v3898
          %v3900 = vpop.f32.mrf.mxu0
          %v3901 = vadd.f32 %v3117, %v3900
          %3902 = vmatprep.mubr.bf16.mxu0 %v2957
          %3903 = vmatmul.mubr.bf16.gmra.mxu0 %v2956
          %v3904 = vpop.f32.mrf.mxu0
          %v3905 = vadd.f32 %v3113, %v3904
          %v3906 = vpop.f32.mrf.mxu0
          %v3907 = vadd.f32 %v3117, %v3906
          %v3908 = vpop.f32.mrf.mxu0
          %v3909 = vadd.f32 %v3113, %v3908
          %v3910 = vpop.f32.mrf.mxu0
          %v3911 = vadd.f32 %v3117, %v3910
          %3912 = vmatprep.mubr.bf16.mxu0 %v2961
          %3913 = vmatmul.mubr.bf16.gmra.mxu0 %v2960
          %v3914 = vpop.f32.mrf.mxu0
          %v3915 = vadd.f32 %v3113, %v3914
          %v3916 = vpop.f32.mrf.mxu0
          %v3917 = vadd.f32 %v3117, %v3916
          %v3918 = vpop.f32.mrf.mxu0
          %v3919 = vadd.f32 %v3113, %v3918
          %v3920 = vpop.f32.mrf.mxu0
          %v3921 = vadd.f32 %v3117, %v3920
          %3922 = vmatprep.mubr.bf16.mxu0 %v2965
          %3923 = vmatmul.mubr.bf16.gmra.mxu0 %v2964
          %v3924 = vpop.f32.mrf.mxu0
          %v3925 = vadd.f32 %v3113, %v3924
          %v3926 = vpop.f32.mrf.mxu0
          %v3927 = vadd.f32 %v3117, %v3926
          %v3928 = vpop.f32.mrf.mxu0
          %v3929 = vadd.f32 %v3113, %v3928
          %v3930 = vpop.f32.mrf.mxu0
          %v3931 = vadd.f32 %v3117, %v3930
          %3932 = vmatprep.mubr.bf16.mxu0 %v2969
          %3933 = vmatmul.mubr.bf16.gmra.mxu0 %v2968
          %v3934 = vpop.f32.mrf.mxu0
          %v3935 = vadd.f32 %v3113, %v3934
          %v3936 = vpop.f32.mrf.mxu0
          %v3937 = vadd.f32 %v3117, %v3936
          %v3938 = vpop.f32.mrf.mxu0
          %v3939 = vadd.f32 %v3113, %v3938
          %v3940 = vpop.f32.mrf.mxu0
          %v3941 = vadd.f32 %v3117, %v3940
          %3942 = vmatprep.mubr.bf16.mxu0 %v2973
          %3943 = vmatmul.mubr.bf16.gmra.mxu0 %v2972
          %v3944 = vpop.f32.mrf.mxu0
          %v3945 = vadd.f32 %v3113, %v3944
          %v3946 = vpop.f32.mrf.mxu0
          %v3947 = vadd.f32 %v3117, %v3946
          %v3948 = vpop.f32.mrf.mxu0
          %v3949 = vadd.f32 %v3113, %v3948
          %v3950 = vpop.f32.mrf.mxu0
          %v3951 = vadd.f32 %v3117, %v3950
          %3952 = vmatprep.mubr.bf16.mxu0 %v2977
          %3953 = vmatmul.mubr.bf16.gmra.mxu0 %v2976
          %v3954 = vpop.f32.mrf.mxu0
          %v3955 = vadd.f32 %v3113, %v3954
          %v3956 = vpop.f32.mrf.mxu0
          %v3957 = vadd.f32 %v3117, %v3956
          %v3958 = vpop.f32.mrf.mxu0
          %v3959 = vadd.f32 %v3113, %v3958
          %v3960 = vpop.f32.mrf.mxu0
          %v3961 = vadd.f32 %v3117, %v3960
          %3962 = vdwg.mxu0
          %3963 = vmatprep.subr.bf16.mxu0 %v3607
          %3964 = vmatpush1.bf16.msra.mxu0 %v3606
          %3965 = vmatprep.subr.bf16.mxu0 %v3603
          %3966 = vmatpush1.bf16.msra.mxu0 %v3602
          %3967 = vmatprep.subr.bf16.mxu0 %v3599
          %3968 = vmatpush1.bf16.msra.mxu0 %v3598
          %3969 = vmatprep.subr.bf16.mxu0 %v3595
          %3970 = vmatpush1.bf16.msra.mxu0 %v3594
          %3971 = vmatprep.subr.bf16.mxu0 %v3591
          %3972 = vmatpush1.bf16.msra.mxu0 %v3590
          %3973 = vmatprep.subr.bf16.mxu0 %v3587
          %3974 = vmatpush1.bf16.msra.mxu0 %v3586
          %3975 = vmatprep.subr.bf16.mxu0 %v3583
          %3976 = vmatpush1.bf16.msra.mxu0 %v3582
          %3977 = vmatprep.subr.bf16.mxu0 %v3579
          %3978 = vmatpush1.bf16.msra.mxu0 %v3578
          %3979 = vmatprep.subr.bf16.mxu0 %v3639
          %3980 = vmatpush2.bf16.msra.mxu0 %v3638
          %3981 = vmatprep.subr.bf16.mxu0 %v3635
          %3982 = vmatpush2.bf16.msra.mxu0 %v3634
          %3983 = vmatprep.subr.bf16.mxu0 %v3631
          %3984 = vmatpush2.bf16.msra.mxu0 %v3630
          %3985 = vmatprep.subr.bf16.mxu0 %v3627
          %3986 = vmatpush2.bf16.msra.mxu0 %v3626
          %3987 = vmatprep.subr.bf16.mxu0 %v3623
          %3988 = vmatpush2.bf16.msra.mxu0 %v3622
          %3989 = vmatprep.subr.bf16.mxu0 %v3619
          %3990 = vmatpush2.bf16.msra.mxu0 %v3618
          %3991 = vmatprep.subr.bf16.mxu0 %v3615
          %3992 = vmatpush2.bf16.msra.mxu0 %v3614
          %3993 = vmatprep.subr.bf16.mxu0 %v3611
          %3994 = vmatpush2.bf16.msra.mxu0 %v3610
          %3995 = vmatprep.mubr.bf16.mxu0 %v2919
          %3996 = vmatmul.mubr.bf16.gmra.mxu0 %v2918
          %v3997 = vpop.f32.mrf.mxu0
          %v3998 = vadd.f32 %v3805, %v3997
          %v3999 = vpop.f32.mrf.mxu0
          %v4000 = vadd.f32 %v3807, %v3999
          %v4001 = vpop.f32.mrf.mxu0
          %v4002 = vadd.f32 %v3809, %v4001
          %v4003 = vpop.f32.mrf.mxu0
          %v4004 = vadd.f32 %v3811, %v4003
          %4005 = vmatprep.mubr.bf16.mxu0 %v2923
          %4006 = vmatmul.mubr.bf16.gmra.mxu0 %v2922
          %v4007 = vpop.f32.mrf.mxu0
          %v4008 = vadd.f32 %v3815, %v4007
          %v4009 = vpop.f32.mrf.mxu0
          %v4010 = vadd.f32 %v3817, %v4009
          %v4011 = vpop.f32.mrf.mxu0
          %v4012 = vadd.f32 %v3819, %v4011
          %v4013 = vpop.f32.mrf.mxu0
          %v4014 = vadd.f32 %v3821, %v4013
          %4015 = vmatprep.mubr.bf16.mxu0 %v2927
          %4016 = vmatmul.mubr.bf16.gmra.mxu0 %v2926
          %v4017 = vpop.f32.mrf.mxu0
          %v4018 = vadd.f32 %v3825, %v4017
          %v4019 = vpop.f32.mrf.mxu0
          %v4020 = vadd.f32 %v3827, %v4019
          %v4021 = vpop.f32.mrf.mxu0
          %v4022 = vadd.f32 %v3829, %v4021
          %v4023 = vpop.f32.mrf.mxu0
          %v4024 = vadd.f32 %v3831, %v4023
          %4025 = vmatprep.mubr.bf16.mxu0 %v2931
          %4026 = vmatmul.mubr.bf16.gmra.mxu0 %v2930
          %v4027 = vpop.f32.mrf.mxu0
          %v4028 = vadd.f32 %v3835, %v4027
          %v4029 = vpop.f32.mrf.mxu0
          %v4030 = vadd.f32 %v3837, %v4029
          %v4031 = vpop.f32.mrf.mxu0
          %v4032 = vadd.f32 %v3839, %v4031
          %v4033 = vpop.f32.mrf.mxu0
          %v4034 = vadd.f32 %v3841, %v4033
          %4035 = vmatprep.mubr.bf16.mxu0 %v2935
          %4036 = vmatmul.mubr.bf16.gmra.mxu0 %v2934
          %v4037 = vpop.f32.mrf.mxu0
          %v4038 = vadd.f32 %v3845, %v4037
          %v4039 = vpop.f32.mrf.mxu0
          %v4040 = vadd.f32 %v3847, %v4039
          %v4041 = vpop.f32.mrf.mxu0
          %v4042 = vadd.f32 %v3849, %v4041
          %v4043 = vpop.f32.mrf.mxu0
          %v4044 = vadd.f32 %v3851, %v4043
          %4045 = vmatprep.mubr.bf16.mxu0 %v2939
          %4046 = vmatmul.mubr.bf16.gmra.mxu0 %v2938
          %v4047 = vpop.f32.mrf.mxu0
          %v4048 = vadd.f32 %v3855, %v4047
          %v4049 = vpop.f32.mrf.mxu0
          %v4050 = vadd.f32 %v3857, %v4049
          %v4051 = vpop.f32.mrf.mxu0
          %v4052 = vadd.f32 %v3859, %v4051
          %v4053 = vpop.f32.mrf.mxu0
          %v4054 = vadd.f32 %v3861, %v4053
          %4055 = vmatprep.mubr.bf16.mxu0 %v2943
          %4056 = vmatmul.mubr.bf16.gmra.mxu0 %v2942
          %v4057 = vpop.f32.mrf.mxu0
          %v4058 = vadd.f32 %v3865, %v4057
          %v4059 = vpop.f32.mrf.mxu0
          %v4060 = vadd.f32 %v3867, %v4059
          %v4061 = vpop.f32.mrf.mxu0
          %v4062 = vadd.f32 %v3869, %v4061
          %v4063 = vpop.f32.mrf.mxu0
          %v4064 = vadd.f32 %v3871, %v4063
          %4065 = vmatprep.mubr.bf16.mxu0 %v2947
          %4066 = vmatmul.mubr.bf16.gmra.mxu0 %v2946
          %v4067 = vpop.f32.mrf.mxu0
          %v4068 = vadd.f32 %v3875, %v4067
          %v4069 = vpop.f32.mrf.mxu0
          %v4070 = vadd.f32 %v3877, %v4069
          %v4071 = vpop.f32.mrf.mxu0
          %v4072 = vadd.f32 %v3879, %v4071
          %v4073 = vpop.f32.mrf.mxu0
          %v4074 = vadd.f32 %v3881, %v4073
          %4075 = vmatprep.mubr.bf16.mxu0 %v2951
          %4076 = vmatmul.mubr.bf16.gmra.mxu0 %v2950
          %v4077 = vpop.f32.mrf.mxu0
          %v4078 = vadd.f32 %v3885, %v4077
          %v4079 = vpop.f32.mrf.mxu0
          %v4080 = vadd.f32 %v3887, %v4079
          %v4081 = vpop.f32.mrf.mxu0
          %v4082 = vadd.f32 %v3889, %v4081
          %v4083 = vpop.f32.mrf.mxu0
          %v4084 = vadd.f32 %v3891, %v4083
          %4085 = vmatprep.mubr.bf16.mxu0 %v2955
          %4086 = vmatmul.mubr.bf16.gmra.mxu0 %v2954
          %v4087 = vpop.f32.mrf.mxu0
          %v4088 = vadd.f32 %v3895, %v4087
          %v4089 = vpop.f32.mrf.mxu0
          %v4090 = vadd.f32 %v3897, %v4089
          %v4091 = vpop.f32.mrf.mxu0
          %v4092 = vadd.f32 %v3899, %v4091
          %v4093 = vpop.f32.mrf.mxu0
          %v4094 = vadd.f32 %v3901, %v4093
          %4095 = vmatprep.mubr.bf16.mxu0 %v2959
          %4096 = vmatmul.mubr.bf16.gmra.mxu0 %v2958
          %v4097 = vpop.f32.mrf.mxu0
          %v4098 = vadd.f32 %v3905, %v4097
          %v4099 = vpop.f32.mrf.mxu0
          %v4100 = vadd.f32 %v3907, %v4099
          %v4101 = vpop.f32.mrf.mxu0
          %v4102 = vadd.f32 %v3909, %v4101
          %v4103 = vpop.f32.mrf.mxu0
          %v4104 = vadd.f32 %v3911, %v4103
          %4105 = vmatprep.mubr.bf16.mxu0 %v2963
          %4106 = vmatmul.mubr.bf16.gmra.mxu0 %v2962
          %v4107 = vpop.f32.mrf.mxu0
          %v4108 = vadd.f32 %v3915, %v4107
          %v4109 = vpop.f32.mrf.mxu0
          %v4110 = vadd.f32 %v3917, %v4109
          %v4111 = vpop.f32.mrf.mxu0
          %v4112 = vadd.f32 %v3919, %v4111
          %v4113 = vpop.f32.mrf.mxu0
          %v4114 = vadd.f32 %v3921, %v4113
          %4115 = vmatprep.mubr.bf16.mxu0 %v2967
          %4116 = vmatmul.mubr.bf16.gmra.mxu0 %v2966
          %v4117 = vpop.f32.mrf.mxu0
          %v4118 = vadd.f32 %v3925, %v4117
          %v4119 = vpop.f32.mrf.mxu0
          %v4120 = vadd.f32 %v3927, %v4119
          %v4121 = vpop.f32.mrf.mxu0
          %v4122 = vadd.f32 %v3929, %v4121
          %v4123 = vpop.f32.mrf.mxu0
          %v4124 = vadd.f32 %v3931, %v4123
          %4125 = vmatprep.mubr.bf16.mxu0 %v2971
          %4126 = vmatmul.mubr.bf16.gmra.mxu0 %v2970
          %v4127 = vpop.f32.mrf.mxu0
          %v4128 = vadd.f32 %v3935, %v4127
          %v4129 = vpop.f32.mrf.mxu0
          %v4130 = vadd.f32 %v3937, %v4129
          %v4131 = vpop.f32.mrf.mxu0
          %v4132 = vadd.f32 %v3939, %v4131
          %v4133 = vpop.f32.mrf.mxu0
          %v4134 = vadd.f32 %v3941, %v4133
          %4135 = vmatprep.mubr.bf16.mxu0 %v2975
          %4136 = vmatmul.mubr.bf16.gmra.mxu0 %v2974
          %v4137 = vpop.f32.mrf.mxu0
          %v4138 = vadd.f32 %v3945, %v4137
          %v4139 = vpop.f32.mrf.mxu0
          %v4140 = vadd.f32 %v3947, %v4139
          %v4141 = vpop.f32.mrf.mxu0
          %v4142 = vadd.f32 %v3949, %v4141
          %v4143 = vpop.f32.mrf.mxu0
          %v4144 = vadd.f32 %v3951, %v4143
          %4145 = vmatprep.mubr.bf16.mxu0 %v2979
          %4146 = vmatmul.mubr.bf16.gmra.mxu0 %v2978
          %v4147 = vpop.f32.mrf.mxu0
          %v4148 = vadd.f32 %v3955, %v4147
          %v4149 = vpop.f32.mrf.mxu0
          %v4150 = vadd.f32 %v3957, %v4149
          %v4151 = vpop.f32.mrf.mxu0
          %v4152 = vadd.f32 %v3959, %v4151
          %v4153 = vpop.f32.mrf.mxu0
          %v4154 = vadd.f32 %v3961, %v4153
          %4155 = vdwg.mxu0
          %4156 = vmatprep.subr.bf16.mxu0 %v3545
          %4157 = vmatpush1.bf16.msra.mxu0 %v3544
          %4158 = vmatprep.subr.bf16.mxu0 %v3541
          %4159 = vmatpush1.bf16.msra.mxu0 %v3540
          %4160 = vmatprep.subr.bf16.mxu0 %v3537
          %4161 = vmatpush1.bf16.msra.mxu0 %v3536
          %4162 = vmatprep.subr.bf16.mxu0 %v3533
          %4163 = vmatpush1.bf16.msra.mxu0 %v3532
          %4164 = vmatprep.subr.bf16.mxu0 %v3529
          %4165 = vmatpush1.bf16.msra.mxu0 %v3528
          %4166 = vmatprep.subr.bf16.mxu0 %v3525
          %4167 = vmatpush1.bf16.msra.mxu0 %v3524
          %4168 = vmatprep.subr.bf16.mxu0 %v3521
          %4169 = vmatpush1.bf16.msra.mxu0 %v3520
          %4170 = vmatprep.subr.bf16.mxu0 %v3517
          %4171 = vmatpush1.bf16.msra.mxu0 %v3516
          %4172 = vmatprep.subr.bf16.mxu0 %v3577
          %4173 = vmatpush2.bf16.msra.mxu0 %v3576
          %4174 = vmatprep.subr.bf16.mxu0 %v3573
          %4175 = vmatpush2.bf16.msra.mxu0 %v3572
          %4176 = vmatprep.subr.bf16.mxu0 %v3569
          %4177 = vmatpush2.bf16.msra.mxu0 %v3568
          %4178 = vmatprep.subr.bf16.mxu0 %v3565
          %4179 = vmatpush2.bf16.msra.mxu0 %v3564
          %4180 = vmatprep.subr.bf16.mxu0 %v3561
          %4181 = vmatpush2.bf16.msra.mxu0 %v3560
          %4182 = vmatprep.subr.bf16.mxu0 %v3557
          %4183 = vmatpush2.bf16.msra.mxu0 %v3556
          %4184 = vmatprep.subr.bf16.mxu0 %v3553
          %4185 = vmatpush2.bf16.msra.mxu0 %v3552
          %4186 = vmatprep.subr.bf16.mxu0 %v3549
          %4187 = vmatpush2.bf16.msra.mxu0 %v3548
          %4188 = vmatprep.mubr.bf16.mxu0 %v2917
          %4189 = vmatmul.mubr.bf16.gmra.mxu0 %v2916
          %v4190 = vpop.f32.mrf.mxu0
          %v4191 = vadd.f32 %v3121, %v4190
          %v4192 = vpop.f32.mrf.mxu0
          %v4193 = vadd.f32 %v3125, %v4192
          %v4194 = vpop.f32.mrf.mxu0
          %v4195 = vadd.f32 %v3121, %v4194
          %v4196 = vpop.f32.mrf.mxu0
          %v4197 = vadd.f32 %v3125, %v4196
          %4198 = vmatprep.mubr.bf16.mxu0 %v2921
          %4199 = vmatmul.mubr.bf16.gmra.mxu0 %v2920
          %v4200 = vpop.f32.mrf.mxu0
          %v4201 = vadd.f32 %v3121, %v4200
          %v4202 = vpop.f32.mrf.mxu0
          %v4203 = vadd.f32 %v3125, %v4202
          %v4204 = vpop.f32.mrf.mxu0
          %v4205 = vadd.f32 %v3121, %v4204
          %v4206 = vpop.f32.mrf.mxu0
          %v4207 = vadd.f32 %v3125, %v4206
          %4208 = vmatprep.mubr.bf16.mxu0 %v2925
          %4209 = vmatmul.mubr.bf16.gmra.mxu0 %v2924
          %v4210 = vpop.f32.mrf.mxu0
          %v4211 = vadd.f32 %v3121, %v4210
          %v4212 = vpop.f32.mrf.mxu0
          %v4213 = vadd.f32 %v3125, %v4212
          %v4214 = vpop.f32.mrf.mxu0
          %v4215 = vadd.f32 %v3121, %v4214
          %v4216 = vpop.f32.mrf.mxu0
          %v4217 = vadd.f32 %v3125, %v4216
          %4218 = vmatprep.mubr.bf16.mxu0 %v2929
          %4219 = vmatmul.mubr.bf16.gmra.mxu0 %v2928
          %v4220 = vpop.f32.mrf.mxu0
          %v4221 = vadd.f32 %v3121, %v4220
          %v4222 = vpop.f32.mrf.mxu0
          %v4223 = vadd.f32 %v3125, %v4222
          %v4224 = vpop.f32.mrf.mxu0
          %v4225 = vadd.f32 %v3121, %v4224
          %v4226 = vpop.f32.mrf.mxu0
          %v4227 = vadd.f32 %v3125, %v4226
          %4228 = vmatprep.mubr.bf16.mxu0 %v2933
          %4229 = vmatmul.mubr.bf16.gmra.mxu0 %v2932
          %v4230 = vpop.f32.mrf.mxu0
          %v4231 = vadd.f32 %v3121, %v4230
          %v4232 = vpop.f32.mrf.mxu0
          %v4233 = vadd.f32 %v3125, %v4232
          %v4234 = vpop.f32.mrf.mxu0
          %v4235 = vadd.f32 %v3121, %v4234
          %v4236 = vpop.f32.mrf.mxu0
          %v4237 = vadd.f32 %v3125, %v4236
          %4238 = vmatprep.mubr.bf16.mxu0 %v2937
          %4239 = vmatmul.mubr.bf16.gmra.mxu0 %v2936
          %v4240 = vpop.f32.mrf.mxu0
          %v4241 = vadd.f32 %v3121, %v4240
          %v4242 = vpop.f32.mrf.mxu0
          %v4243 = vadd.f32 %v3125, %v4242
          %v4244 = vpop.f32.mrf.mxu0
          %v4245 = vadd.f32 %v3121, %v4244
          %v4246 = vpop.f32.mrf.mxu0
          %v4247 = vadd.f32 %v3125, %v4246
          %4248 = vmatprep.mubr.bf16.mxu0 %v2941
          %4249 = vmatmul.mubr.bf16.gmra.mxu0 %v2940
          %v4250 = vpop.f32.mrf.mxu0
          %v4251 = vadd.f32 %v3121, %v4250
          %v4252 = vpop.f32.mrf.mxu0
          %v4253 = vadd.f32 %v3125, %v4252
          %v4254 = vpop.f32.mrf.mxu0
          %v4255 = vadd.f32 %v3121, %v4254
          %v4256 = vpop.f32.mrf.mxu0
          %v4257 = vadd.f32 %v3125, %v4256
          %4258 = vmatprep.mubr.bf16.mxu0 %v2945
          %4259 = vmatmul.mubr.bf16.gmra.mxu0 %v2944
          %v4260 = vpop.f32.mrf.mxu0
          %v4261 = vadd.f32 %v3121, %v4260
          %v4262 = vpop.f32.mrf.mxu0
          %v4263 = vadd.f32 %v3125, %v4262
          %v4264 = vpop.f32.mrf.mxu0
          %v4265 = vadd.f32 %v3121, %v4264
          %v4266 = vpop.f32.mrf.mxu0
          %v4267 = vadd.f32 %v3125, %v4266
          %4268 = vmatprep.mubr.bf16.mxu0 %v2949
          %4269 = vmatmul.mubr.bf16.gmra.mxu0 %v2948
          %v4270 = vpop.f32.mrf.mxu0
          %v4271 = vadd.f32 %v3121, %v4270
          %v4272 = vpop.f32.mrf.mxu0
          %v4273 = vadd.f32 %v3125, %v4272
          %v4274 = vpop.f32.mrf.mxu0
          %v4275 = vadd.f32 %v3121, %v4274
          %v4276 = vpop.f32.mrf.mxu0
          %v4277 = vadd.f32 %v3125, %v4276
          %4278 = vmatprep.mubr.bf16.mxu0 %v2953
          %4279 = vmatmul.mubr.bf16.gmra.mxu0 %v2952
          %v4280 = vpop.f32.mrf.mxu0
          %v4281 = vadd.f32 %v3121, %v4280
          %v4282 = vpop.f32.mrf.mxu0
          %v4283 = vadd.f32 %v3125, %v4282
          %v4284 = vpop.f32.mrf.mxu0
          %v4285 = vadd.f32 %v3121, %v4284
          %v4286 = vpop.f32.mrf.mxu0
          %v4287 = vadd.f32 %v3125, %v4286
          %4288 = vmatprep.mubr.bf16.mxu0 %v2957
          %4289 = vmatmul.mubr.bf16.gmra.mxu0 %v2956
          %v4290 = vpop.f32.mrf.mxu0
          %v4291 = vadd.f32 %v3121, %v4290
          %v4292 = vpop.f32.mrf.mxu0
          %v4293 = vadd.f32 %v3125, %v4292
          %v4294 = vpop.f32.mrf.mxu0
          %v4295 = vadd.f32 %v3121, %v4294
          %v4296 = vpop.f32.mrf.mxu0
          %v4297 = vadd.f32 %v3125, %v4296
          %4298 = vmatprep.mubr.bf16.mxu0 %v2961
          %4299 = vmatmul.mubr.bf16.gmra.mxu0 %v2960
          %v4300 = vpop.f32.mrf.mxu0
          %v4301 = vadd.f32 %v3121, %v4300
          %v4302 = vpop.f32.mrf.mxu0
          %v4303 = vadd.f32 %v3125, %v4302
          %v4304 = vpop.f32.mrf.mxu0
          %v4305 = vadd.f32 %v3121, %v4304
          %v4306 = vpop.f32.mrf.mxu0
          %v4307 = vadd.f32 %v3125, %v4306
          %4308 = vmatprep.mubr.bf16.mxu0 %v2965
          %4309 = vmatmul.mubr.bf16.gmra.mxu0 %v2964
          %v4310 = vpop.f32.mrf.mxu0
          %v4311 = vadd.f32 %v3121, %v4310
          %v4312 = vpop.f32.mrf.mxu0
          %v4313 = vadd.f32 %v3125, %v4312
          %v4314 = vpop.f32.mrf.mxu0
          %v4315 = vadd.f32 %v3121, %v4314
          %v4316 = vpop.f32.mrf.mxu0
          %v4317 = vadd.f32 %v3125, %v4316
          %4318 = vmatprep.mubr.bf16.mxu0 %v2969
          %4319 = vmatmul.mubr.bf16.gmra.mxu0 %v2968
          %v4320 = vpop.f32.mrf.mxu0
          %v4321 = vadd.f32 %v3121, %v4320
          %v4322 = vpop.f32.mrf.mxu0
          %v4323 = vadd.f32 %v3125, %v4322
          %v4324 = vpop.f32.mrf.mxu0
          %v4325 = vadd.f32 %v3121, %v4324
          %v4326 = vpop.f32.mrf.mxu0
          %v4327 = vadd.f32 %v3125, %v4326
          %4328 = vmatprep.mubr.bf16.mxu0 %v2973
          %4329 = vmatmul.mubr.bf16.gmra.mxu0 %v2972
          %v4330 = vpop.f32.mrf.mxu0
          %v4331 = vadd.f32 %v3121, %v4330
          %v4332 = vpop.f32.mrf.mxu0
          %v4333 = vadd.f32 %v3125, %v4332
          %v4334 = vpop.f32.mrf.mxu0
          %v4335 = vadd.f32 %v3121, %v4334
          %v4336 = vpop.f32.mrf.mxu0
          %v4337 = vadd.f32 %v3125, %v4336
          %4338 = vmatprep.mubr.bf16.mxu0 %v2977
          %4339 = vmatmul.mubr.bf16.gmra.mxu0 %v2976
          %v4340 = vpop.f32.mrf.mxu0
          %v4341 = vadd.f32 %v3121, %v4340
          %v4342 = vpop.f32.mrf.mxu0
          %v4343 = vadd.f32 %v3125, %v4342
          %v4344 = vpop.f32.mrf.mxu0
          %v4345 = vadd.f32 %v3121, %v4344
          %v4346 = vpop.f32.mrf.mxu0
          %v4347 = vadd.f32 %v3125, %v4346
          %4348 = vdwg.mxu0
          %4349 = vmatprep.subr.bf16.mxu0 %v3609
          %4350 = vmatpush1.bf16.msra.mxu0 %v3608
          %4351 = vmatprep.subr.bf16.mxu0 %v3605
          %4352 = vmatpush1.bf16.msra.mxu0 %v3604
          %4353 = vmatprep.subr.bf16.mxu0 %v3601
          %4354 = vmatpush1.bf16.msra.mxu0 %v3600
          %4355 = vmatprep.subr.bf16.mxu0 %v3597
          %4356 = vmatpush1.bf16.msra.mxu0 %v3596
          %4357 = vmatprep.subr.bf16.mxu0 %v3593
          %4358 = vmatpush1.bf16.msra.mxu0 %v3592
          %4359 = vmatprep.subr.bf16.mxu0 %v3589
          %4360 = vmatpush1.bf16.msra.mxu0 %v3588
          %4361 = vmatprep.subr.bf16.mxu0 %v3585
          %4362 = vmatpush1.bf16.msra.mxu0 %v3584
          %4363 = vmatprep.subr.bf16.mxu0 %v3581
          %4364 = vmatpush1.bf16.msra.mxu0 %v3580
          %4365 = vmatprep.subr.bf16.mxu0 %v3641
          %4366 = vmatpush2.bf16.msra.mxu0 %v3640
          %4367 = vmatprep.subr.bf16.mxu0 %v3637
          %4368 = vmatpush2.bf16.msra.mxu0 %v3636
          %4369 = vmatprep.subr.bf16.mxu0 %v3633
          %4370 = vmatpush2.bf16.msra.mxu0 %v3632
          %4371 = vmatprep.subr.bf16.mxu0 %v3629
          %4372 = vmatpush2.bf16.msra.mxu0 %v3628
          %4373 = vmatprep.subr.bf16.mxu0 %v3625
          %4374 = vmatpush2.bf16.msra.mxu0 %v3624
          %4375 = vmatprep.subr.bf16.mxu0 %v3621
          %4376 = vmatpush2.bf16.msra.mxu0 %v3620
          %4377 = vmatprep.subr.bf16.mxu0 %v3617
          %4378 = vmatpush2.bf16.msra.mxu0 %v3616
          %4379 = vmatprep.subr.bf16.mxu0 %v3613
          %4380 = vmatpush2.bf16.msra.mxu0 %v3612
          %4381 = vmatprep.mubr.bf16.mxu0 %v2919
          %4382 = vmatmul.mubr.bf16.gmra.mxu0 %v2918
          %v4383 = vpop.f32.mrf.mxu0
          %v4384 = vadd.f32 %v4191, %v4383
          %v4385 = vpop.f32.mrf.mxu0
          %v4386 = vadd.f32 %v4193, %v4385
          %v4387 = vpop.f32.mrf.mxu0
          %v4388 = vadd.f32 %v4195, %v4387
          %v4389 = vpop.f32.mrf.mxu0
          %v4390 = vadd.f32 %v4197, %v4389
          %4391 = vmatprep.mubr.bf16.mxu0 %v2923
          %4392 = vmatmul.mubr.bf16.gmra.mxu0 %v2922
          %v4393 = vpop.f32.mrf.mxu0
          %v4394 = vadd.f32 %v4201, %v4393
          %v4395 = vpop.f32.mrf.mxu0
          %v4396 = vadd.f32 %v4203, %v4395
          %v4397 = vpop.f32.mrf.mxu0
          %v4398 = vadd.f32 %v4205, %v4397
          %v4399 = vpop.f32.mrf.mxu0
          %v4400 = vadd.f32 %v4207, %v4399
          %4401 = vmatprep.mubr.bf16.mxu0 %v2927
          %4402 = vmatmul.mubr.bf16.gmra.mxu0 %v2926
          %v4403 = vpop.f32.mrf.mxu0
          %v4404 = vadd.f32 %v4211, %v4403
          %v4405 = vpop.f32.mrf.mxu0
          %v4406 = vadd.f32 %v4213, %v4405
          %v4407 = vpop.f32.mrf.mxu0
          %v4408 = vadd.f32 %v4215, %v4407
          %v4409 = vpop.f32.mrf.mxu0
          %v4410 = vadd.f32 %v4217, %v4409
          %4411 = vmatprep.mubr.bf16.mxu0 %v2931
          %4412 = vmatmul.mubr.bf16.gmra.mxu0 %v2930
          %v4413 = vpop.f32.mrf.mxu0
          %v4414 = vadd.f32 %v4221, %v4413
          %v4415 = vpop.f32.mrf.mxu0
          %v4416 = vadd.f32 %v4223, %v4415
          %v4417 = vpop.f32.mrf.mxu0
          %v4418 = vadd.f32 %v4225, %v4417
          %v4419 = vpop.f32.mrf.mxu0
          %v4420 = vadd.f32 %v4227, %v4419
          %4421 = vmatprep.mubr.bf16.mxu0 %v2935
          %4422 = vmatmul.mubr.bf16.gmra.mxu0 %v2934
          %v4423 = vpop.f32.mrf.mxu0
          %v4424 = vadd.f32 %v4231, %v4423
          %v4425 = vpop.f32.mrf.mxu0
          %v4426 = vadd.f32 %v4233, %v4425
          %v4427 = vpop.f32.mrf.mxu0
          %v4428 = vadd.f32 %v4235, %v4427
          %v4429 = vpop.f32.mrf.mxu0
          %v4430 = vadd.f32 %v4237, %v4429
          %4431 = vmatprep.mubr.bf16.mxu0 %v2939
          %4432 = vmatmul.mubr.bf16.gmra.mxu0 %v2938
          %v4433 = vpop.f32.mrf.mxu0
          %v4434 = vadd.f32 %v4241, %v4433
          %v4435 = vpop.f32.mrf.mxu0
          %v4436 = vadd.f32 %v4243, %v4435
          %v4437 = vpop.f32.mrf.mxu0
          %v4438 = vadd.f32 %v4245, %v4437
          %v4439 = vpop.f32.mrf.mxu0
          %v4440 = vadd.f32 %v4247, %v4439
          %4441 = vmatprep.mubr.bf16.mxu0 %v2943
          %4442 = vmatmul.mubr.bf16.gmra.mxu0 %v2942
          %v4443 = vpop.f32.mrf.mxu0
          %v4444 = vadd.f32 %v4251, %v4443
          %v4445 = vpop.f32.mrf.mxu0
          %v4446 = vadd.f32 %v4253, %v4445
          %v4447 = vpop.f32.mrf.mxu0
          %v4448 = vadd.f32 %v4255, %v4447
          %v4449 = vpop.f32.mrf.mxu0
          %v4450 = vadd.f32 %v4257, %v4449
          %4451 = vmatprep.mubr.bf16.mxu0 %v2947
          %4452 = vmatmul.mubr.bf16.gmra.mxu0 %v2946
          %v4453 = vpop.f32.mrf.mxu0
          %v4454 = vadd.f32 %v4261, %v4453
          %v4455 = vpop.f32.mrf.mxu0
          %v4456 = vadd.f32 %v4263, %v4455
          %v4457 = vpop.f32.mrf.mxu0
          %v4458 = vadd.f32 %v4265, %v4457
          %v4459 = vpop.f32.mrf.mxu0
          %v4460 = vadd.f32 %v4267, %v4459
          %4461 = vmatprep.mubr.bf16.mxu0 %v2951
          %4462 = vmatmul.mubr.bf16.gmra.mxu0 %v2950
          %v4463 = vpop.f32.mrf.mxu0
          %v4464 = vadd.f32 %v4271, %v4463
          %v4465 = vpop.f32.mrf.mxu0
          %v4466 = vadd.f32 %v4273, %v4465
          %v4467 = vpop.f32.mrf.mxu0
          %v4468 = vadd.f32 %v4275, %v4467
          %v4469 = vpop.f32.mrf.mxu0
          %v4470 = vadd.f32 %v4277, %v4469
          %4471 = vmatprep.mubr.bf16.mxu0 %v2955
          %4472 = vmatmul.mubr.bf16.gmra.mxu0 %v2954
          %v4473 = vpop.f32.mrf.mxu0
          %v4474 = vadd.f32 %v4281, %v4473
          %v4475 = vpop.f32.mrf.mxu0
          %v4476 = vadd.f32 %v4283, %v4475
          %v4477 = vpop.f32.mrf.mxu0
          %v4478 = vadd.f32 %v4285, %v4477
          %v4479 = vpop.f32.mrf.mxu0
          %v4480 = vadd.f32 %v4287, %v4479
          %4481 = vmatprep.mubr.bf16.mxu0 %v2959
          %4482 = vmatmul.mubr.bf16.gmra.mxu0 %v2958
          %v4483 = vpop.f32.mrf.mxu0
          %v4484 = vadd.f32 %v4291, %v4483
          %v4485 = vpop.f32.mrf.mxu0
          %v4486 = vadd.f32 %v4293, %v4485
          %v4487 = vpop.f32.mrf.mxu0
          %v4488 = vadd.f32 %v4295, %v4487
          %v4489 = vpop.f32.mrf.mxu0
          %v4490 = vadd.f32 %v4297, %v4489
          %4491 = vmatprep.mubr.bf16.mxu0 %v2963
          %4492 = vmatmul.mubr.bf16.gmra.mxu0 %v2962
          %v4493 = vpop.f32.mrf.mxu0
          %v4494 = vadd.f32 %v4301, %v4493
          %v4495 = vpop.f32.mrf.mxu0
          %v4496 = vadd.f32 %v4303, %v4495
          %v4497 = vpop.f32.mrf.mxu0
          %v4498 = vadd.f32 %v4305, %v4497
          %v4499 = vpop.f32.mrf.mxu0
          %v4500 = vadd.f32 %v4307, %v4499
          %4501 = vmatprep.mubr.bf16.mxu0 %v2967
          %4502 = vmatmul.mubr.bf16.gmra.mxu0 %v2966
          %v4503 = vpop.f32.mrf.mxu0
          %v4504 = vadd.f32 %v4311, %v4503
          %v4505 = vpop.f32.mrf.mxu0
          %v4506 = vadd.f32 %v4313, %v4505
          %v4507 = vpop.f32.mrf.mxu0
          %v4508 = vadd.f32 %v4315, %v4507
          %v4509 = vpop.f32.mrf.mxu0
          %v4510 = vadd.f32 %v4317, %v4509
          %4511 = vmatprep.mubr.bf16.mxu0 %v2971
          %4512 = vmatmul.mubr.bf16.gmra.mxu0 %v2970
          %v4513 = vpop.f32.mrf.mxu0
          %v4514 = vadd.f32 %v4321, %v4513
          %v4515 = vpop.f32.mrf.mxu0
          %v4516 = vadd.f32 %v4323, %v4515
          %v4517 = vpop.f32.mrf.mxu0
          %v4518 = vadd.f32 %v4325, %v4517
          %v4519 = vpop.f32.mrf.mxu0
          %v4520 = vadd.f32 %v4327, %v4519
          %4521 = vmatprep.mubr.bf16.mxu0 %v2975
          %4522 = vmatmul.mubr.bf16.gmra.mxu0 %v2974
          %v4523 = vpop.f32.mrf.mxu0
          %v4524 = vadd.f32 %v4331, %v4523
          %v4525 = vpop.f32.mrf.mxu0
          %v4526 = vadd.f32 %v4333, %v4525
          %v4527 = vpop.f32.mrf.mxu0
          %v4528 = vadd.f32 %v4335, %v4527
          %v4529 = vpop.f32.mrf.mxu0
          %v4530 = vadd.f32 %v4337, %v4529
          %4531 = vmatprep.mubr.bf16.mxu0 %v2979
          %4532 = vmatmul.mubr.bf16.gmra.mxu0 %v2978
          %v4533 = vpop.f32.mrf.mxu0
          %v4534 = vadd.f32 %v4341, %v4533
          %v4535 = vpop.f32.mrf.mxu0
          %v4536 = vadd.f32 %v4343, %v4535
          %v4537 = vpop.f32.mrf.mxu0
          %v4538 = vadd.f32 %v4345, %v4537
          %v4539 = vpop.f32.mrf.mxu0
          %v4540 = vadd.f32 %v4347, %v4539
          %4541 = vdwg.mxu0
          %v4542 = vmul.f32 %v3998, %v3998
          %v4543 = vmul.f32 %v4000, %v4000
          %v4544 = vmul.f32 %v4384, %v4384
          %v4545 = vmul.f32 %v4386, %v4386
          %v4546 = vmul.f32 %v4002, %v4002
          %v4547 = vmul.f32 %v4004, %v4004
          %v4548 = vmul.f32 %v4388, %v4388
          %v4549 = vmul.f32 %v4390, %v4390
          %v4550 = vmul.f32 %v4008, %v4008
          %v4551 = vmul.f32 %v4010, %v4010
          %v4552 = vmul.f32 %v4394, %v4394
          %v4553 = vmul.f32 %v4396, %v4396
          %v4554 = vmul.f32 %v4012, %v4012
          %v4555 = vmul.f32 %v4014, %v4014
          %v4556 = vmul.f32 %v4398, %v4398
          %v4557 = vmul.f32 %v4400, %v4400
          %v4558 = vmul.f32 %v4018, %v4018
          %v4559 = vmul.f32 %v4020, %v4020
          %v4560 = vmul.f32 %v4404, %v4404
          %v4561 = vmul.f32 %v4406, %v4406
          %v4562 = vmul.f32 %v4022, %v4022
          %v4563 = vmul.f32 %v4024, %v4024
          %v4564 = vmul.f32 %v4408, %v4408
          %v4565 = vmul.f32 %v4410, %v4410
          %v4566 = vmul.f32 %v4028, %v4028
          %v4567 = vmul.f32 %v4030, %v4030
          %v4568 = vmul.f32 %v4414, %v4414
          %v4569 = vmul.f32 %v4416, %v4416
          %v4570 = vmul.f32 %v4032, %v4032
          %v4571 = vmul.f32 %v4034, %v4034
          %v4572 = vmul.f32 %v4418, %v4418
          %v4573 = vmul.f32 %v4420, %v4420
          %v4574 = vmul.f32 %v4038, %v4038
          %v4575 = vmul.f32 %v4040, %v4040
          %v4576 = vmul.f32 %v4424, %v4424
          %v4577 = vmul.f32 %v4426, %v4426
          %v4578 = vmul.f32 %v4042, %v4042
          %v4579 = vmul.f32 %v4044, %v4044
          %v4580 = vmul.f32 %v4428, %v4428
          %v4581 = vmul.f32 %v4430, %v4430
          %v4582 = vmul.f32 %v4048, %v4048
          %v4583 = vmul.f32 %v4050, %v4050
          %v4584 = vmul.f32 %v4434, %v4434
          %v4585 = vmul.f32 %v4436, %v4436
          %v4586 = vmul.f32 %v4052, %v4052
          %v4587 = vmul.f32 %v4054, %v4054
          %v4588 = vmul.f32 %v4438, %v4438
          %v4589 = vmul.f32 %v4440, %v4440
          %v4590 = vmul.f32 %v4058, %v4058
          %v4591 = vmul.f32 %v4060, %v4060
          %v4592 = vmul.f32 %v4444, %v4444
          %v4593 = vmul.f32 %v4446, %v4446
          %v4594 = vmul.f32 %v4062, %v4062
          %v4595 = vmul.f32 %v4064, %v4064
          %v4596 = vmul.f32 %v4448, %v4448
          %v4597 = vmul.f32 %v4450, %v4450
          %v4598 = vmul.f32 %v4068, %v4068
          %v4599 = vmul.f32 %v4070, %v4070
          %v4600 = vmul.f32 %v4454, %v4454
          %v4601 = vmul.f32 %v4456, %v4456
          %v4602 = vmul.f32 %v4072, %v4072
          %v4603 = vmul.f32 %v4074, %v4074
          %v4604 = vmul.f32 %v4458, %v4458
          %v4605 = vmul.f32 %v4460, %v4460
          %v4606 = vmul.f32 %v4078, %v4078
          %v4607 = vmul.f32 %v4080, %v4080
          %v4608 = vmul.f32 %v4464, %v4464
          %v4609 = vmul.f32 %v4466, %v4466
          %v4610 = vmul.f32 %v4082, %v4082
          %v4611 = vmul.f32 %v4084, %v4084
          %v4612 = vmul.f32 %v4468, %v4468
          %v4613 = vmul.f32 %v4470, %v4470
          %v4614 = vmul.f32 %v4088, %v4088
          %v4615 = vmul.f32 %v4090, %v4090
          %v4616 = vmul.f32 %v4474, %v4474
          %v4617 = vmul.f32 %v4476, %v4476
          %v4618 = vmul.f32 %v4092, %v4092
          %v4619 = vmul.f32 %v4094, %v4094
          %v4620 = vmul.f32 %v4478, %v4478
          %v4621 = vmul.f32 %v4480, %v4480
          %v4622 = vmul.f32 %v4098, %v4098
          %v4623 = vmul.f32 %v4100, %v4100
          %v4624 = vmul.f32 %v4484, %v4484
          %v4625 = vmul.f32 %v4486, %v4486
          %v4626 = vmul.f32 %v4102, %v4102
          %v4627 = vmul.f32 %v4104, %v4104
          %v4628 = vmul.f32 %v4488, %v4488
          %v4629 = vmul.f32 %v4490, %v4490
          %v4630 = vmul.f32 %v4108, %v4108
          %v4631 = vmul.f32 %v4110, %v4110
          %v4632 = vmul.f32 %v4494, %v4494
          %v4633 = vmul.f32 %v4496, %v4496
          %v4634 = vmul.f32 %v4112, %v4112
          %v4635 = vmul.f32 %v4114, %v4114
          %v4636 = vmul.f32 %v4498, %v4498
          %v4637 = vmul.f32 %v4500, %v4500
          %v4638 = vmul.f32 %v4118, %v4118
          %v4639 = vmul.f32 %v4120, %v4120
          %v4640 = vmul.f32 %v4504, %v4504
          %v4641 = vmul.f32 %v4506, %v4506
          %v4642 = vmul.f32 %v4122, %v4122
          %v4643 = vmul.f32 %v4124, %v4124
          %v4644 = vmul.f32 %v4508, %v4508
          %v4645 = vmul.f32 %v4510, %v4510
          %v4646 = vmul.f32 %v4128, %v4128
          %v4647 = vmul.f32 %v4130, %v4130
          %v4648 = vmul.f32 %v4514, %v4514
          %v4649 = vmul.f32 %v4516, %v4516
          %v4650 = vmul.f32 %v4132, %v4132
          %v4651 = vmul.f32 %v4134, %v4134
          %v4652 = vmul.f32 %v4518, %v4518
          %v4653 = vmul.f32 %v4520, %v4520
          %v4654 = vmul.f32 %v4138, %v4138
          %v4655 = vmul.f32 %v4140, %v4140
          %v4656 = vmul.f32 %v4524, %v4524
          %v4657 = vmul.f32 %v4526, %v4526
          %v4658 = vmul.f32 %v4142, %v4142
          %v4659 = vmul.f32 %v4144, %v4144
          %v4660 = vmul.f32 %v4528, %v4528
          %v4661 = vmul.f32 %v4530, %v4530
          %v4662 = vmul.f32 %v4148, %v4148
          %v4663 = vmul.f32 %v4150, %v4150
          %v4664 = vmul.f32 %v4534, %v4534
          %v4665 = vmul.f32 %v4536, %v4536
          %v4666 = vmul.f32 %v4152, %v4152
          %v4667 = vmul.f32 %v4154, %v4154
          %v4668 = vmul.f32 %v4538, %v4538
          %v4669 = vmul.f32 %v4540, %v4540
          %v4670 = vadd.f32 %v4542, %v4543
          %v4671 = vadd.f32 %v4670, %v4544
          %v4672 = vadd.f32 %v4671, %v4545
          %4673 = vadd.xlane.f32.xlu0 %v4672
          %v4674 = vpop.xlane.xlu0 %4673
          %v4675 = vadd.f32 %v4546, %v4547
          %v4676 = vadd.f32 %v4675, %v4548
          %v4677 = vadd.f32 %v4676, %v4549
          %4678 = vadd.xlane.f32.xlu0 %v4677
          %v4679 = vpop.xlane.xlu0 %4678
          %v4680 = vadd.f32 %v4550, %v4551
          %v4681 = vadd.f32 %v4680, %v4552
          %v4682 = vadd.f32 %v4681, %v4553
          %4683 = vadd.xlane.f32.xlu0 %v4682
          %v4684 = vpop.xlane.xlu0 %4683
          %v4685 = vadd.f32 %v4554, %v4555
          %v4686 = vadd.f32 %v4685, %v4556
          %v4687 = vadd.f32 %v4686, %v4557
          %4688 = vadd.xlane.f32.xlu0 %v4687
          %v4689 = vpop.xlane.xlu0 %4688
          %v4690 = vadd.f32 %v4558, %v4559
          %v4691 = vadd.f32 %v4690, %v4560
          %v4692 = vadd.f32 %v4691, %v4561
          %4693 = vadd.xlane.f32.xlu0 %v4692
          %v4694 = vpop.xlane.xlu0 %4693
          %v4695 = vadd.f32 %v4562, %v4563
          %v4696 = vadd.f32 %v4695, %v4564
          %v4697 = vadd.f32 %v4696, %v4565
          %4698 = vadd.xlane.f32.xlu0 %v4697
          %v4699 = vpop.xlane.xlu0 %4698
          %v4700 = vadd.f32 %v4566, %v4567
          %v4701 = vadd.f32 %v4700, %v4568
          %v4702 = vadd.f32 %v4701, %v4569
          %4703 = vadd.xlane.f32.xlu0 %v4702
          %v4704 = vpop.xlane.xlu0 %4703
          %v4705 = vadd.f32 %v4570, %v4571
          %v4706 = vadd.f32 %v4705, %v4572
          %v4707 = vadd.f32 %v4706, %v4573
          %4708 = vadd.xlane.f32.xlu0 %v4707
          %v4709 = vpop.xlane.xlu0 %4708
          %v4710 = vadd.f32 %v4574, %v4575
          %v4711 = vadd.f32 %v4710, %v4576
          %v4712 = vadd.f32 %v4711, %v4577
          %4713 = vadd.xlane.f32.xlu0 %v4712
          %v4714 = vpop.xlane.xlu0 %4713
          %v4715 = vadd.f32 %v4578, %v4579
          %v4716 = vadd.f32 %v4715, %v4580
          %v4717 = vadd.f32 %v4716, %v4581
          %4718 = vadd.xlane.f32.xlu0 %v4717
          %v4719 = vpop.xlane.xlu0 %4718
          %v4720 = vadd.f32 %v4582, %v4583
          %v4721 = vadd.f32 %v4720, %v4584
          %v4722 = vadd.f32 %v4721, %v4585
          %4723 = vadd.xlane.f32.xlu0 %v4722
          %v4724 = vpop.xlane.xlu0 %4723
          %v4725 = vadd.f32 %v4586, %v4587
          %v4726 = vadd.f32 %v4725, %v4588
          %v4727 = vadd.f32 %v4726, %v4589
          %4728 = vadd.xlane.f32.xlu0 %v4727
          %v4729 = vpop.xlane.xlu0 %4728
          %v4730 = vadd.f32 %v4590, %v4591
          %v4731 = vadd.f32 %v4730, %v4592
          %v4732 = vadd.f32 %v4731, %v4593
          %4733 = vadd.xlane.f32.xlu0 %v4732
          %v4734 = vpop.xlane.xlu0 %4733
          %v4735 = vadd.f32 %v4594, %v4595
          %v4736 = vadd.f32 %v4735, %v4596
          %v4737 = vadd.f32 %v4736, %v4597
          %4738 = vadd.xlane.f32.xlu0 %v4737
          %v4739 = vpop.xlane.xlu0 %4738
          %v4740 = vadd.f32 %v4598, %v4599
          %v4741 = vadd.f32 %v4740, %v4600
          %v4742 = vadd.f32 %v4741, %v4601
          %4743 = vadd.xlane.f32.xlu0 %v4742
          %v4744 = vpop.xlane.xlu0 %4743
          %v4745 = vadd.f32 %v4602, %v4603
          %v4746 = vadd.f32 %v4745, %v4604
          %v4747 = vadd.f32 %v4746, %v4605
          %4748 = vadd.xlane.f32.xlu0 %v4747
          %v4749 = vpop.xlane.xlu0 %4748
          %v4750 = vadd.f32 %v4606, %v4607
          %v4751 = vadd.f32 %v4750, %v4608
          %v4752 = vadd.f32 %v4751, %v4609
          %4753 = vadd.xlane.f32.xlu0 %v4752
          %v4754 = vpop.xlane.xlu0 %4753
          %v4755 = vadd.f32 %v4610, %v4611
          %v4756 = vadd.f32 %v4755, %v4612
          %v4757 = vadd.f32 %v4756, %v4613
          %4758 = vadd.xlane.f32.xlu0 %v4757
          %v4759 = vpop.xlane.xlu0 %4758
          %v4760 = vadd.f32 %v4614, %v4615
          %v4761 = vadd.f32 %v4760, %v4616
          %v4762 = vadd.f32 %v4761, %v4617
          %4763 = vadd.xlane.f32.xlu0 %v4762
          %v4764 = vpop.xlane.xlu0 %4763
          %v4765 = vadd.f32 %v4618, %v4619
          %v4766 = vadd.f32 %v4765, %v4620
          %v4767 = vadd.f32 %v4766, %v4621
          %4768 = vadd.xlane.f32.xlu0 %v4767
          %v4769 = vpop.xlane.xlu0 %4768
          %v4770 = vadd.f32 %v4622, %v4623
          %v4771 = vadd.f32 %v4770, %v4624
          %v4772 = vadd.f32 %v4771, %v4625
          %4773 = vadd.xlane.f32.xlu0 %v4772
          %v4774 = vpop.xlane.xlu0 %4773
          %v4775 = vadd.f32 %v4626, %v4627
          %v4776 = vadd.f32 %v4775, %v4628
          %v4777 = vadd.f32 %v4776, %v4629
          %4778 = vadd.xlane.f32.xlu0 %v4777
          %v4779 = vpop.xlane.xlu0 %4778
          %v4780 = vadd.f32 %v4630, %v4631
          %v4781 = vadd.f32 %v4780, %v4632
          %v4782 = vadd.f32 %v4781, %v4633
          %4783 = vadd.xlane.f32.xlu0 %v4782
          %v4784 = vpop.xlane.xlu0 %4783
          %v4785 = vadd.f32 %v4634, %v4635
          %v4786 = vadd.f32 %v4785, %v4636
          %v4787 = vadd.f32 %v4786, %v4637
          %4788 = vadd.xlane.f32.xlu0 %v4787
          %v4789 = vpop.xlane.xlu0 %4788
          %v4790 = vadd.f32 %v4638, %v4639
          %v4791 = vadd.f32 %v4790, %v4640
          %v4792 = vadd.f32 %v4791, %v4641
          %4793 = vadd.xlane.f32.xlu0 %v4792
          %v4794 = vpop.xlane.xlu0 %4793
          %v4795 = vadd.f32 %v4642, %v4643
          %v4796 = vadd.f32 %v4795, %v4644
          %v4797 = vadd.f32 %v4796, %v4645
          %4798 = vadd.xlane.f32.xlu0 %v4797
          %v4799 = vpop.xlane.xlu0 %4798
          %v4800 = vadd.f32 %v4646, %v4647
          %v4801 = vadd.f32 %v4800, %v4648
          %v4802 = vadd.f32 %v4801, %v4649
          %4803 = vadd.xlane.f32.xlu0 %v4802
          %v4804 = vpop.xlane.xlu0 %4803
          %v4805 = vadd.f32 %v4650, %v4651
          %v4806 = vadd.f32 %v4805, %v4652
          %v4807 = vadd.f32 %v4806, %v4653
          %4808 = vadd.xlane.f32.xlu0 %v4807
          %v4809 = vpop.xlane.xlu0 %4808
          %v4810 = vadd.f32 %v4654, %v4655
          %v4811 = vadd.f32 %v4810, %v4656
          %v4812 = vadd.f32 %v4811, %v4657
          %4813 = vadd.xlane.f32.xlu0 %v4812
          %v4814 = vpop.xlane.xlu0 %4813
          %v4815 = vadd.f32 %v4658, %v4659
          %v4816 = vadd.f32 %v4815, %v4660
          %v4817 = vadd.f32 %v4816, %v4661
          %4818 = vadd.xlane.f32.xlu0 %v4817
          %v4819 = vpop.xlane.xlu0 %4818
          %v4820 = vadd.f32 %v4662, %v4663
          %v4821 = vadd.f32 %v4820, %v4664
          %v4822 = vadd.f32 %v4821, %v4665
          %4823 = vadd.xlane.f32.xlu0 %v4822
          %v4824 = vpop.xlane.xlu0 %4823
          %v4825 = vadd.f32 %v4666, %v4667
          %v4826 = vadd.f32 %v4825, %v4668
          %v4827 = vadd.f32 %v4826, %v4669
          %4828 = vadd.xlane.f32.xlu0 %v4827
          %v4829 = vpop.xlane.xlu0 %4828
          %v4830 = vadd.f32 %v4674, 1e-12
          %v4831 = vadd.f32 %v4679, 1e-12
          %v4832 = vadd.f32 %v4684, 1e-12
          %v4833 = vadd.f32 %v4689, 1e-12
          %v4834 = vadd.f32 %v4694, 1e-12
          %v4835 = vadd.f32 %v4699, 1e-12
          %v4836 = vadd.f32 %v4704, 1e-12
          %v4837 = vadd.f32 %v4709, 1e-12
          %v4838 = vadd.f32 %v4714, 1e-12
          %v4839 = vadd.f32 %v4719, 1e-12
          %v4840 = vadd.f32 %v4724, 1e-12
          %v4841 = vadd.f32 %v4729, 1e-12
          %v4842 = vadd.f32 %v4734, 1e-12
          %v4843 = vadd.f32 %v4739, 1e-12
          %v4844 = vadd.f32 %v4744, 1e-12
          %v4845 = vadd.f32 %v4749, 1e-12
          %v4846 = vadd.f32 %v4754, 1e-12
          %v4847 = vadd.f32 %v4759, 1e-12
          %v4848 = vadd.f32 %v4764, 1e-12
          %v4849 = vadd.f32 %v4769, 1e-12
          %v4850 = vadd.f32 %v4774, 1e-12
          %v4851 = vadd.f32 %v4779, 1e-12
          %v4852 = vadd.f32 %v4784, 1e-12
          %v4853 = vadd.f32 %v4789, 1e-12
          %v4854 = vadd.f32 %v4794, 1e-12
          %v4855 = vadd.f32 %v4799, 1e-12
          %v4856 = vadd.f32 %v4804, 1e-12
          %v4857 = vadd.f32 %v4809, 1e-12
          %v4858 = vadd.f32 %v4814, 1e-12
          %v4859 = vadd.f32 %v4819, 1e-12
          %v4860 = vadd.f32 %v4824, 1e-12
          %v4861 = vadd.f32 %v4829, 1e-12
          %v4862 = vrsqrt.pop %v4830
          %v4863 = vrsqrt.pop %v4831
          %v4864 = vrsqrt.pop %v4832
          %v4865 = vrsqrt.pop %v4833
          %v4866 = vrsqrt.pop %v4834
          %v4867 = vrsqrt.pop %v4835
          %v4868 = vrsqrt.pop %v4836
          %v4869 = vrsqrt.pop %v4837
          %v4870 = vrsqrt.pop %v4838
          %v4871 = vrsqrt.pop %v4839
          %v4872 = vrsqrt.pop %v4840
          %v4873 = vrsqrt.pop %v4841
          %v4874 = vrsqrt.pop %v4842
          %v4875 = vrsqrt.pop %v4843
          %v4876 = vrsqrt.pop %v4844
          %v4877 = vrsqrt.pop %v4845
          %v4878 = vrsqrt.pop %v4846
          %v4879 = vrsqrt.pop %v4847
          %v4880 = vrsqrt.pop %v4848
          %v4881 = vrsqrt.pop %v4849
          %v4882 = vrsqrt.pop %v4850
          %v4883 = vrsqrt.pop %v4851
          %v4884 = vrsqrt.pop %v4852
          %v4885 = vrsqrt.pop %v4853
          %v4886 = vrsqrt.pop %v4854
          %v4887 = vrsqrt.pop %v4855
          %v4888 = vrsqrt.pop %v4856
          %v4889 = vrsqrt.pop %v4857
          %v4890 = vrsqrt.pop %v4858
          %v4891 = vrsqrt.pop %v4859
          %v4892 = vrsqrt.pop %v4860
          %v4893 = vrsqrt.pop %v4861
          %v4894 = vmul.f32 %v3998, %v4862
          %v4895 = vmul.f32 %v4000, %v4862
          %v4896 = vmul.f32 %v4384, %v4862
          %v4897 = vmul.f32 %v4386, %v4862
          %v4898 = vmul.f32 %v4002, %v4863
          %v4899 = vmul.f32 %v4004, %v4863
          %v4900 = vmul.f32 %v4388, %v4863
          %v4901 = vmul.f32 %v4390, %v4863
          %v4902 = vmul.f32 %v4008, %v4864
          %v4903 = vmul.f32 %v4010, %v4864
          %v4904 = vmul.f32 %v4394, %v4864
          %v4905 = vmul.f32 %v4396, %v4864
          %v4906 = vmul.f32 %v4012, %v4865
          %v4907 = vmul.f32 %v4014, %v4865
          %v4908 = vmul.f32 %v4398, %v4865
          %v4909 = vmul.f32 %v4400, %v4865
          %v4910 = vmul.f32 %v4018, %v4866
          %v4911 = vmul.f32 %v4020, %v4866
          %v4912 = vmul.f32 %v4404, %v4866
          %v4913 = vmul.f32 %v4406, %v4866
          %v4914 = vmul.f32 %v4022, %v4867
          %v4915 = vmul.f32 %v4024, %v4867
          %v4916 = vmul.f32 %v4408, %v4867
          %v4917 = vmul.f32 %v4410, %v4867
          %v4918 = vmul.f32 %v4028, %v4868
          %v4919 = vmul.f32 %v4030, %v4868
          %v4920 = vmul.f32 %v4414, %v4868
          %v4921 = vmul.f32 %v4416, %v4868
          %v4922 = vmul.f32 %v4032, %v4869
          %v4923 = vmul.f32 %v4034, %v4869
          %v4924 = vmul.f32 %v4418, %v4869
          %v4925 = vmul.f32 %v4420, %v4869
          %v4926 = vmul.f32 %v4038, %v4870
          %v4927 = vmul.f32 %v4040, %v4870
          %v4928 = vmul.f32 %v4424, %v4870
          %v4929 = vmul.f32 %v4426, %v4870
          %v4930 = vmul.f32 %v4042, %v4871
          %v4931 = vmul.f32 %v4044, %v4871
          %v4932 = vmul.f32 %v4428, %v4871
          %v4933 = vmul.f32 %v4430, %v4871
          %v4934 = vmul.f32 %v4048, %v4872
          %v4935 = vmul.f32 %v4050, %v4872
          %v4936 = vmul.f32 %v4434, %v4872
          %v4937 = vmul.f32 %v4436, %v4872
          %v4938 = vmul.f32 %v4052, %v4873
          %v4939 = vmul.f32 %v4054, %v4873
          %v4940 = vmul.f32 %v4438, %v4873
          %v4941 = vmul.f32 %v4440, %v4873
          %v4942 = vmul.f32 %v4058, %v4874
          %v4943 = vmul.f32 %v4060, %v4874
          %v4944 = vmul.f32 %v4444, %v4874
          %v4945 = vmul.f32 %v4446, %v4874
          %v4946 = vmul.f32 %v4062, %v4875
          %v4947 = vmul.f32 %v4064, %v4875
          %v4948 = vmul.f32 %v4448, %v4875
          %v4949 = vmul.f32 %v4450, %v4875
          %v4950 = vmul.f32 %v4068, %v4876
          %v4951 = vmul.f32 %v4070, %v4876
          %v4952 = vmul.f32 %v4454, %v4876
          %v4953 = vmul.f32 %v4456, %v4876
          %v4954 = vmul.f32 %v4072, %v4877
          %v4955 = vmul.f32 %v4074, %v4877
          %v4956 = vmul.f32 %v4458, %v4877
          %v4957 = vmul.f32 %v4460, %v4877
          %v4958 = vmul.f32 %v4078, %v4878
          %v4959 = vmul.f32 %v4080, %v4878
          %v4960 = vmul.f32 %v4464, %v4878
          %v4961 = vmul.f32 %v4466, %v4878
          %v4962 = vmul.f32 %v4082, %v4879
          %v4963 = vmul.f32 %v4084, %v4879
          %v4964 = vmul.f32 %v4468, %v4879
          %v4965 = vmul.f32 %v4470, %v4879
          %v4966 = vmul.f32 %v4088, %v4880
          %v4967 = vmul.f32 %v4090, %v4880
          %v4968 = vmul.f32 %v4474, %v4880
          %v4969 = vmul.f32 %v4476, %v4880
          %v4970 = vmul.f32 %v4092, %v4881
          %v4971 = vmul.f32 %v4094, %v4881
          %v4972 = vmul.f32 %v4478, %v4881
          %v4973 = vmul.f32 %v4480, %v4881
          %v4974 = vmul.f32 %v4098, %v4882
          %v4975 = vmul.f32 %v4100, %v4882
          %v4976 = vmul.f32 %v4484, %v4882
          %v4977 = vmul.f32 %v4486, %v4882
          %v4978 = vmul.f32 %v4102, %v4883
          %v4979 = vmul.f32 %v4104, %v4883
          %v4980 = vmul.f32 %v4488, %v4883
          %v4981 = vmul.f32 %v4490, %v4883
          %v4982 = vmul.f32 %v4108, %v4884
          %v4983 = vmul.f32 %v4110, %v4884
          %v4984 = vmul.f32 %v4494, %v4884
          %v4985 = vmul.f32 %v4496, %v4884
          %v4986 = vmul.f32 %v4112, %v4885
          %v4987 = vmul.f32 %v4114, %v4885
          %v4988 = vmul.f32 %v4498, %v4885
          %v4989 = vmul.f32 %v4500, %v4885
          %v4990 = vmul.f32 %v4118, %v4886
          %v4991 = vmul.f32 %v4120, %v4886
          %v4992 = vmul.f32 %v4504, %v4886
          %v4993 = vmul.f32 %v4506, %v4886
          %v4994 = vmul.f32 %v4122, %v4887
          %v4995 = vmul.f32 %v4124, %v4887
          %v4996 = vmul.f32 %v4508, %v4887
          %v4997 = vmul.f32 %v4510, %v4887
          %v4998 = vmul.f32 %v4128, %v4888
          %v4999 = vmul.f32 %v4130, %v4888
          %v5000 = vmul.f32 %v4514, %v4888
          %v5001 = vmul.f32 %v4516, %v4888
          %v5002 = vmul.f32 %v4132, %v4889
          %v5003 = vmul.f32 %v4134, %v4889
          %v5004 = vmul.f32 %v4518, %v4889
          %v5005 = vmul.f32 %v4520, %v4889
          %v5006 = vmul.f32 %v4138, %v4890
          %v5007 = vmul.f32 %v4140, %v4890
          %v5008 = vmul.f32 %v4524, %v4890
          %v5009 = vmul.f32 %v4526, %v4890
          %v5010 = vmul.f32 %v4142, %v4891
          %v5011 = vmul.f32 %v4144, %v4891
          %v5012 = vmul.f32 %v4528, %v4891
          %v5013 = vmul.f32 %v4530, %v4891
          %v5014 = vmul.f32 %v4148, %v4892
          %v5015 = vmul.f32 %v4150, %v4892
          %v5016 = vmul.f32 %v4534, %v4892
          %v5017 = vmul.f32 %v4536, %v4892
          %v5018 = vmul.f32 %v4152, %v4893
          %v5019 = vmul.f32 %v4154, %v4893
          %v5020 = vmul.f32 %v4538, %v4893
          %v5021 = vmul.f32 %v4540, %v4893
          %v5022 = vld [vmem:[#allocation11] sm:$0xff]
          %v5024 = vcombine.high %v5022, %v5022
          %v5026 = vunpack.c.l.s4 1983009808
          %v5027 = vunpack.c.0.s8 %v5026
          %v5028 = vlaneseq
          %v5029 = vshrl.u32 %v5028, 7
          %v5030 = vsub.s32 %v5027, %v5029
          %v5031 = vrot.slane %v5022, %v5030
          %v5033 = vunpack.c.l.s4 1983009808
          %v5034 = vunpack.c.0.s8 %v5033
          %v5035 = vlaneseq
          %v5036 = vshrl.u32 %v5035, 7
          %v5037 = vsub.s32 %v5034, %v5036
          %v5038 = vrot.slane %v5024, %v5037
          %v5039 = vcombine.high %v5031, %v5031
          %v5040 = vcombine.high %v5038, %v5038
          %v5045 = vpack.c.bf16 %v5031, %v5031
          %v5046 = vpack.c.bf16 %v5039, %v5039
          %v5047 = vpack.c.bf16 %v5038, %v5038
          %v5048 = vpack.c.bf16 %v5040, %v5040
          %v5049 = vpack.c.bf16 %v4898, %v4894
          %v5050 = vpack.c.bf16 %v4899, %v4895
          %v5051 = vpack.c.bf16 %v4900, %v4896
          %v5052 = vpack.c.bf16 %v4901, %v4897
          %v5053 = vpack.c.bf16 %v4906, %v4902
          %v5054 = vpack.c.bf16 %v4907, %v4903
          %v5055 = vpack.c.bf16 %v4908, %v4904
          %v5056 = vpack.c.bf16 %v4909, %v4905
          %v5057 = vpack.c.bf16 %v4914, %v4910
          %v5058 = vpack.c.bf16 %v4915, %v4911
          %v5059 = vpack.c.bf16 %v4916, %v4912
          %v5060 = vpack.c.bf16 %v4917, %v4913
          %v5061 = vpack.c.bf16 %v4922, %v4918
          %v5062 = vpack.c.bf16 %v4923, %v4919
          %v5063 = vpack.c.bf16 %v4924, %v4920
          %v5064 = vpack.c.bf16 %v4925, %v4921
          %v5065 = vpack.c.bf16 %v4930, %v4926
          %v5066 = vpack.c.bf16 %v4931, %v4927
          %v5067 = vpack.c.bf16 %v4932, %v4928
          %v5068 = vpack.c.bf16 %v4933, %v4929
          %v5069 = vpack.c.bf16 %v4938, %v4934
          %v5070 = vpack.c.bf16 %v4939, %v4935
          %v5071 = vpack.c.bf16 %v4940, %v4936
          %v5072 = vpack.c.bf16 %v4941, %v4937
          %v5073 = vpack.c.bf16 %v4946, %v4942
          %v5074 = vpack.c.bf16 %v4947, %v4943
          %v5075 = vpack.c.bf16 %v4948, %v4944
          %v5076 = vpack.c.bf16 %v4949, %v4945
          %v5077 = vpack.c.bf16 %v4954, %v4950
          %v5078 = vpack.c.bf16 %v4955, %v4951
          %v5079 = vpack.c.bf16 %v4956, %v4952
          %v5080 = vpack.c.bf16 %v4957, %v4953
          %v5081 = vpack.c.bf16 %v4962, %v4958
          %v5082 = vpack.c.bf16 %v4963, %v4959
          %v5083 = vpack.c.bf16 %v4964, %v4960
          %v5084 = vpack.c.bf16 %v4965, %v4961
          %v5085 = vpack.c.bf16 %v4970, %v4966
          %v5086 = vpack.c.bf16 %v4971, %v4967
          %v5087 = vpack.c.bf16 %v4972, %v4968
          %v5088 = vpack.c.bf16 %v4973, %v4969
          %v5089 = vpack.c.bf16 %v4978, %v4974
          %v5090 = vpack.c.bf16 %v4979, %v4975
          %v5091 = vpack.c.bf16 %v4980, %v4976
          %v5092 = vpack.c.bf16 %v4981, %v4977
          %v5093 = vpack.c.bf16 %v4986, %v4982
          %v5094 = vpack.c.bf16 %v4987, %v4983
          %v5095 = vpack.c.bf16 %v4988, %v4984
          %v5096 = vpack.c.bf16 %v4989, %v4985
          %v5097 = vpack.c.bf16 %v4994, %v4990
          %v5098 = vpack.c.bf16 %v4995, %v4991
          %v5099 = vpack.c.bf16 %v4996, %v4992
          %v5100 = vpack.c.bf16 %v4997, %v4993
          %v5101 = vpack.c.bf16 %v5002, %v4998
          %v5102 = vpack.c.bf16 %v5003, %v4999
          %v5103 = vpack.c.bf16 %v5004, %v5000
          %v5104 = vpack.c.bf16 %v5005, %v5001
          %v5105 = vpack.c.bf16 %v5010, %v5006
          %v5106 = vpack.c.bf16 %v5011, %v5007
          %v5107 = vpack.c.bf16 %v5012, %v5008
          %v5108 = vpack.c.bf16 %v5013, %v5009
          %v5109 = vpack.c.bf16 %v5018, %v5014
          %v5110 = vpack.c.bf16 %v5019, %v5015
          %v5111 = vpack.c.bf16 %v5020, %v5016
          %v5112 = vpack.c.bf16 %v5021, %v5017
          %5113 = vmatprep.subr.bf16.mxu0 %v5078
          %5114 = vmatpush1.bf16.xpose.msra.mxu0 %v5077
          %5115 = vmatprep.subr.bf16.mxu0 %v5074
          %5116 = vmatpush1.bf16.xpose.msra.mxu0 %v5073
          %5117 = vmatprep.subr.bf16.mxu0 %v5070
          %5118 = vmatpush1.bf16.xpose.msra.mxu0 %v5069
          %5119 = vmatprep.subr.bf16.mxu0 %v5066
          %5120 = vmatpush1.bf16.xpose.msra.mxu0 %v5065
          %5121 = vmatprep.subr.bf16.mxu0 %v5062
          %5122 = vmatpush1.bf16.xpose.msra.mxu0 %v5061
          %5123 = vmatprep.subr.bf16.mxu0 %v5058
          %5124 = vmatpush1.bf16.xpose.msra.mxu0 %v5057
          %5125 = vmatprep.subr.bf16.mxu0 %v5054
          %5126 = vmatpush1.bf16.xpose.msra.mxu0 %v5053
          %5127 = vmatprep.subr.bf16.mxu0 %v5050
          %5128 = vmatpush1.bf16.xpose.msra.mxu0 %v5049
          %5129 = vmatprep.subr.bf16.mxu0 %v5110
          %5130 = vmatpush2.bf16.xpose.msra.mxu0 %v5109
          %5131 = vmatprep.subr.bf16.mxu0 %v5106
          %5132 = vmatpush2.bf16.xpose.msra.mxu0 %v5105
          %5133 = vmatprep.subr.bf16.mxu0 %v5102
          %5134 = vmatpush2.bf16.xpose.msra.mxu0 %v5101
          %5135 = vmatprep.subr.bf16.mxu0 %v5098
          %5136 = vmatpush2.bf16.xpose.msra.mxu0 %v5097
          %5137 = vmatprep.subr.bf16.mxu0 %v5094
          %5138 = vmatpush2.bf16.xpose.msra.mxu0 %v5093
          %5139 = vmatprep.subr.bf16.mxu0 %v5090
          %5140 = vmatpush2.bf16.xpose.msra.mxu0 %v5089
          %5141 = vmatprep.subr.bf16.mxu0 %v5086
          %5142 = vmatpush2.bf16.xpose.msra.mxu0 %v5085
          %5143 = vmatprep.subr.bf16.mxu0 %v5082
          %5144 = vmatpush2.bf16.xpose.msra.mxu0 %v5081
          %5145 = vmatprep.mubr.bf16.mxu0 %v5046
          %5146 = vmatmul.mubr.bf16.gmra.mxu0 %v5045
          %v5147 = vpop.f32.mrf.mxu0
          %v5148 = vadd.f32 0.0, %v5147
          %v5149 = vpop.f32.mrf.mxu0
          %v5150 = vadd.f32 0.0, %v5149
          %v5151 = vpop.f32.mrf.mxu0
          %v5152 = vpop.f32.mrf.mxu0
          %5153 = vdwg.mxu0
          %5154 = vmatprep.subr.bf16.mxu0 %v5080
          %5155 = vmatpush1.bf16.xpose.msra.mxu0 %v5079
          %5156 = vmatprep.subr.bf16.mxu0 %v5076
          %5157 = vmatpush1.bf16.xpose.msra.mxu0 %v5075
          %5158 = vmatprep.subr.bf16.mxu0 %v5072
          %5159 = vmatpush1.bf16.xpose.msra.mxu0 %v5071
          %5160 = vmatprep.subr.bf16.mxu0 %v5068
          %5161 = vmatpush1.bf16.xpose.msra.mxu0 %v5067
          %5162 = vmatprep.subr.bf16.mxu0 %v5064
          %5163 = vmatpush1.bf16.xpose.msra.mxu0 %v5063
          %5164 = vmatprep.subr.bf16.mxu0 %v5060
          %5165 = vmatpush1.bf16.xpose.msra.mxu0 %v5059
          %5166 = vmatprep.subr.bf16.mxu0 %v5056
          %5167 = vmatpush1.bf16.xpose.msra.mxu0 %v5055
          %5168 = vmatprep.subr.bf16.mxu0 %v5052
          %5169 = vmatpush1.bf16.xpose.msra.mxu0 %v5051
          %5170 = vmatprep.subr.bf16.mxu0 %v5112
          %5171 = vmatpush2.bf16.xpose.msra.mxu0 %v5111
          %5172 = vmatprep.subr.bf16.mxu0 %v5108
          %5173 = vmatpush2.bf16.xpose.msra.mxu0 %v5107
          %5174 = vmatprep.subr.bf16.mxu0 %v5104
          %5175 = vmatpush2.bf16.xpose.msra.mxu0 %v5103
          %5176 = vmatprep.subr.bf16.mxu0 %v5100
          %5177 = vmatpush2.bf16.xpose.msra.mxu0 %v5099
          %5178 = vmatprep.subr.bf16.mxu0 %v5096
          %5179 = vmatpush2.bf16.xpose.msra.mxu0 %v5095
          %5180 = vmatprep.subr.bf16.mxu0 %v5092
          %5181 = vmatpush2.bf16.xpose.msra.mxu0 %v5091
          %5182 = vmatprep.subr.bf16.mxu0 %v5088
          %5183 = vmatpush2.bf16.xpose.msra.mxu0 %v5087
          %5184 = vmatprep.subr.bf16.mxu0 %v5084
          %5185 = vmatpush2.bf16.xpose.msra.mxu0 %v5083
          %5186 = vmatprep.mubr.bf16.mxu0 %v5048
          %5187 = vmatmul.mubr.bf16.gmra.mxu0 %v5047
          %v5188 = vpop.f32.mrf.mxu0
          %v5189 = vadd.f32 %v5148, %v5188
          %v5190 = vpop.f32.mrf.mxu0
          %v5191 = vadd.f32 %v5150, %v5190
          %v5192 = vpop.f32.mrf.mxu0
          %v5193 = vpop.f32.mrf.mxu0
          %5194 = vdwg.mxu0
          %v5197 = vcombine.low %v5189, %v5191
          %v5199 = vunpack.c.l.s4 1983009808
          %v5200 = vunpack.c.0.s8 %v5199
          %v5201 = vlaneseq
          %v5202 = vshrl.u32 %v5201, 7
          %v5203 = vsub.s32 %v5200, %v5202
          %v5204 = vrot.slane %v5197, %v5203
          %5206 = vst [vmem:[%s339] sm:$0xf] %v5204
        $region68: #{tpu_custom_call.1} parent=39 // pred_fallthru
          _
        %s5207 = sand.u32 %s163, 1
        %s5208 = scalar_lea.sflag [#allocation5], %s5207
        %s5209 = sand.u32 %s163, 1
        %s5210 = smul.addr %s5209, 4
        %s5211 = scalar_lea.vmem [#allocation12], %s5210
        // Predicated region
        $region69: #{tpu_custom_call.1} parent=39 // pred_check
          %p5212 = pneg %p173
        $region70: #{tpu_custom_call.1} parent=39 // pred_check_branch
          %5214 = sbr.rel (%p5212) target = $region72
        $region71: #{tpu_custom_call.1} parent=39 // pred_region
          %s5215 = smul.u32 2, %s30
          %s5217 = ssub.s32 64, 64
          %5218 = vsyncadd %s5208, %s5217
          %s5219 = smul.addr %s5215, 32
          %s5220 = scalar_lea.hbm %s5, %s5219
          %s5222 = sshll.u32 %s5211, 4
          %s5223 = int_to_ptr.vmem [resolvable:$true] %s5222
          %5225 = dma.vmem_to_hbm [thread:$0]  %s5223, 64, %s5220, %s5208
        $region72: #{tpu_custom_call.1} parent=39 // pred_fallthru
          _
      $region40: #{tpu_custom_call.1} parent=5 // pred_fallthru
        _
      %p5226 = scmp.le.s32.totalorder 2, %s21
      // Predicated region
      $region73: #{tpu_custom_call.1} parent=5 // pred_check
        %p5227 = pneg %p5226
      $region74: #{tpu_custom_call.1} parent=5 // pred_check_branch
        %5229 = sbr.rel (%p5227) target = $region76
      $region75: #{tpu_custom_call.1} parent=5 // pred_region
        %s5230 = ssub.s32 %s21, 2
        // Predicated region
        $region77: #{tpu_custom_call.1} parent=75 // pred_check
          %p5231 = pneg %p179
        $region78: #{tpu_custom_call.1} parent=75 // pred_check_branch
          %5233 = sbr.rel (%p5231) target = $region80
        $region79: #{tpu_custom_call.1} parent=75 // pred_region
          %s5234 = sand.u32 %s164, 1
          %s5235 = scalar_lea.sflag [#allocation5], %s5234
          %s5236 = sand.u32 %s164, 1
          %s5237 = smul.addr %s5236, 4
          %s5238 = scalar_lea.vmem [#allocation12], %s5237
          %5239 = dma.done %s5235, 64
        $region80: #{tpu_custom_call.1} parent=75 // pred_fallthru
          _
      $region76: #{tpu_custom_call.1} parent=5 // pred_fallthru
        _
    $region6: #{tpu_custom_call.1} parent=1 // loop_footer
      %s25 = sadd.s32 1, %s21
    $region7: #{tpu_custom_call.1} parent=1 // loop_footer_branch
      %20 = sbr.rel target = $region3
    $region8: #{tpu_custom_call.1} parent=1 // loop_exit
      _
    %5240 = vsyncpa [#allocation4], 1
    %s5241 = scalar_lea.sflag [#allocation4], 1
    %5242 = vsyncpa %s5241, 1
    %5243 = vsyncpa [#allocation7], 1
    %s5244 = scalar_lea.sflag [#allocation7], 1
    %5245 = vsyncpa %s5244, 1
    %5246 = vsyncpa [#allocation10], 1
    %5247 = vsyncpa [#allocation5], 1
    %s5248 = scalar_lea.sflag [#allocation5], 1
    %5249 = vsyncpa %s5248, 1

</llo_original>
